<compile_context>
chip_gen: v7x
topology: tpu7x:2x2x1
jax: 0.10.0
libtpu: 0.0.40
codegen_flags: <defaults>
</compile_context>

<pallas_src>
import functools

import jax
import jax.numpy as jnp
from jax.experimental import pallas as pl
from jax.experimental.pallas import tpu as pltpu

EPS = 1e-5  # nn.BatchNorm2d default eps


def _round_up(x, m):
    return (x + m - 1) // m * m


def _vmem_capacity_bytes():
    try:
        return int(pltpu.get_tpu_info().vmem_capacity_bytes)
    except Exception:
        return 64 * 1024 * 1024  # conservative fallback (v7x per-TC VMEM)


def _conv_stats_kernel(x_ref, w_ref, y_ref, stats_ref, *, H, W, rate, CC, w_whole):
    # x_ref:     (1, Hp, Wp, CC)        bf16  padded NHWC slab (one image, one Cin chunk)
    # w_ref:     (9, CC|Cin_p, TCo)     bf16  conv weights (chunk, or whole Cin if w_whole)
    # y_ref:     (1, H*W, TCo)          f32   conv output, resident across the Cin-chunk axis
    # stats_ref: (1, 8,   TCo)          f32   row0 = per-channel sum, row1 = sum of squares
    c = pl.program_id(2)

    @pl.when(c == 0)
    def _():
        y_ref[...] = jnp.zeros_like(y_ref)

    HW = H * W
    # Fused im2col: stage each ky row-slab once, take the 3 kx windows from the staged
    # value, and accumulate each tap into the resident output block (bf16 x bf16 -> f32).
    for ky in range(3):
        row = x_ref[0, pl.ds(ky * rate, H), :, :]              # (H, Wp, CC) bf16
        for kx in range(3):
            t = ky * 3 + kx
            win = row[:, kx * rate:kx * rate + W, :]           # (H, W, CC) static slice
            if w_whole:
                wt = w_ref[t, pl.ds(pl.multiple_of(c * CC, CC), CC), :]
            else:
                wt = w_ref[t]
            y_ref[0] += jnp.dot(win.reshape(HW, CC), wt,
                                preferred_element_type=jnp.float32)

    @pl.when(c == pl.num_programs(2) - 1)
    def _():
        a = y_ref[0]                                           # (HW, TCo) f32
        s = jnp.sum(a, axis=0, keepdims=True)                  # (1, TCo)
        sq = jnp.sum(a * a, axis=0, keepdims=True)             # (1, TCo)
        pad = jnp.zeros((6, a.shape[1]), jnp.float32)
        stats_ref[0] = jnp.concatenate([s, sq, pad], axis=0)


def _bn_relu_kernel(y_ref, scale_ref, shift_ref, o_ref):
    # y_ref: (TM, Cout_p) f32 ; scale/shift: (1, Cout_p) f32 ; o_ref: (TM, Cout_p) f32
    y = y_ref[...] * scale_ref[...] + shift_ref[...]
    o_ref[...] = jnp.maximum(y, 0.0).astype(o_ref.dtype)


def aspp_conv_pallas(x_nchw, weight_oihw, gamma, beta, rate):
    """Forward of ASPPConv. x_nchw: (N, Cin, H, W). weight: (Cout, Cin, 3, 3)."""
    N, Cin, H, W = x_nchw.shape
    Cout = weight_oihw.shape[0]
    HW = H * W
    M = N * HW

    # Lane-dense channel padding (multiples of 128). Padded weights are zero, so padded
    # channels produce exactly-zero conv outputs and do not perturb the BN statistics.
    Cin_p = _round_up(Cin, 128)
    Cout_p = _round_up(Cout, 128)

    # Cout tiling: a second "parallel" grid axis so both v7x TensorCores get work even
    # when N is small; also halves the resident y block.  (No effect on the test shapes.)
    n_co = 2 if (Cout_p % 256 == 0) else 1
    TCo = Cout_p // n_co

    Hp, Wp = H + 2 * rate, W + 2 * rate

    # ---- generation-aware VMEM budget -> Cin chunk size (K grid axis) ----
    vmem_cap = _vmem_capacity_bytes()
    vmem_limit = max(32 * 1024 * 1024, min(int(0.75 * vmem_cap), 112 * 1024 * 1024))
    budget = vmem_limit - 4 * 1024 * 1024

    def ws_bytes(cc, w_bytes):
        return (2 * Hp * Wp * cc * 2          # x slab, double-buffered, bf16
                + w_bytes                     # weights (double-buffered estimate)
                + 2 * HW * TCo * 4            # resident y output (+ spare buffer)
                + 2 * 8 * TCo * 4)            # stats

    candidates = [d for d in range(128, Cin_p + 1, 128) if Cin_p % d == 0]
    CC = 128
    for cand in sorted(candidates, reverse=True):
        if ws_bytes(cand, 2 * 9 * cand * TCo * 2) <= budget:
            CC = cand
            break
    n_cc = Cin_p // CC

    # Avoid re-DMA-ing weights once per Cin chunk: if the whole (per-Cout-tile) weight
    # fits the budget, load it chunk-independently and slice the chunk in-kernel.
    w_whole = False
    if n_cc > 1 and ws_bytes(CC, 2 * 9 * Cin_p * TCo * 2) <= budget:
        w_whole = True

    # ---- glue: bf16 cast first (halves transpose/pad traffic), NCHW -> NHWC, pad ----
    x = x_nchw.astype(jnp.bfloat16)
    x = jnp.transpose(x, (0, 2, 3, 1))
    x = jnp.pad(x, ((0, 0), (rate, rate), (rate, rate), (0, Cin_p - Cin)))

    # (Cout, Cin, 3, 3) -> (ky, kx, cin, cout) -> (9, Cin_p, Cout_p) bf16
    w = jnp.transpose(weight_oihw, (2, 3, 1, 0)).reshape(9, Cin, Cout)
    w = jnp.pad(w, ((0, 0), (0, Cin_p - Cin), (0, Cout_p - Cout)))
    w = w.astype(jnp.bfloat16)

    kernel1 = functools.partial(_conv_stats_kernel, H=H, W=W, rate=rate,
                                CC=CC, w_whole=w_whole)
    flops = 2 * M * 9 * Cin_p * Cout_p
    bytes_accessed = (x.size * 2 * n_co + w.size * 2 * N
                      + M * Cout_p * 4 + N * 8 * Cout_p * 4)

    if w_whole:
        w_spec = pl.BlockSpec((9, Cin_p, TCo), lambda n, co, c: (0, 0, co))
    else:
        # NOTE: when n_cc > 1 this re-DMAs each weight chunk once per (image, Cout tile).
        w_spec = pl.BlockSpec((9, CC, TCo), lambda n, co, c: (0, c, co))

    # ---- Pass 1: conv (fused im2col) + per-image partial BN stats ----
    y, stats = pl.pallas_call(
        kernel1,
        out_shape=(jax.ShapeDtypeStruct((N, HW, Cout_p), jnp.float32),
                   jax.ShapeDtypeStruct((N, 8, Cout_p), jnp.float32)),
        grid=(N, n_co, n_cc),
        in_specs=[
            pl.BlockSpec((1, Hp, Wp, CC), lambda n, co, c: (n, 0, 0, c)),
            w_spec,
        ],
        out_specs=(pl.BlockSpec((1, HW, TCo), lambda n, co, c: (n, 0, co)),
                   pl.BlockSpec((1, 8, TCo), lambda n, co, c: (n, 0, co))),
        compiler_params=pltpu.CompilerParams(
            dimension_semantics=("parallel", "parallel", "arbitrary"),
            vmem_limit_bytes=vmem_limit),
        cost_estimate=pl.CostEstimate(flops=flops, transcendentals=0,
                                      bytes_accessed=bytes_accessed),
    )(x, w)

    # ---- Global BN statistics -> fused scale/shift (tiny O(Cout) work, f32) ----
    total = jnp.sum(stats[:, 0, :], axis=0)                 # (Cout_p,)
    total_sq = jnp.sum(stats[:, 1, :], axis=0)              # (Cout_p,)
    mean = total / M
    var = jnp.maximum(total_sq / M - mean * mean, 0.0)      # biased var (train-mode BN)
    gamma_p = jnp.pad(gamma.astype(jnp.float32), (0, Cout_p - Cout), constant_values=1.0)
    beta_p = jnp.pad(beta.astype(jnp.float32), (0, Cout_p - Cout))
    inv = jax.lax.rsqrt(var + EPS)
    scale = (gamma_p * inv).reshape(1, Cout_p).astype(jnp.float32)
    shift = (beta_p - mean * gamma_p * inv).reshape(1, Cout_p).astype(jnp.float32)

    # ---- Pass 2: M-tiled, lane-dense normalize + ReLU ----
    TM = min(1024, _round_up(M, 256))
    Mp = _round_up(M, TM)
    y2 = y.reshape(M, Cout_p)
    if Mp != M:
        y2 = jnp.pad(y2, ((0, Mp - M), (0, 0)))

    out_flat = pl.pallas_call(
        _bn_relu_kernel,
        out_shape=jax.ShapeDtypeStruct((Mp, Cout_p), jnp.float32),
        grid=(Mp // TM,),
        in_specs=[
            pl.BlockSpec((TM, Cout_p), lambda i: (i, 0)),
            pl.BlockSpec((1, Cout_p), lambda i: (0, 0)),
            pl.BlockSpec((1, Cout_p), lambda i: (0, 0)),
        ],
        out_specs=pl.BlockSpec((TM, Cout_p), lambda i: (i, 0)),
        compiler_params=pltpu.CompilerParams(
            dimension_semantics=("parallel",),
            vmem_limit_bytes=vmem_limit),
    )(y2, scale, shift)

    # strip padding: (Mp, Cout_p) -> (M, Cout) -> (N, H, W, Cout) -> NCHW
    out = out_flat[:M, :Cout].reshape(N, H, W, Cout)
    return jnp.transpose(out, (0, 3, 1, 2))


def aspp_conv_ref(x_nchw, weight_oihw, gamma, beta, rate):
    """Pure-JAX reference of the PyTorch forward (train-mode BN)."""
    y = jax.lax.conv_general_dilated(
        x_nchw, weight_oihw,
        window_strides=(1, 1),
        padding=[(rate, rate), (rate, rate)],
        rhs_dilation=(rate, rate),
        dimension_numbers=("NCHW", "OIHW", "NCHW"))
    mean = y.mean(axis=(0, 2, 3), keepdims=True)
    var = jnp.square(y - mean).mean(axis=(0, 2, 3), keepdims=True)
    yhat = (y - mean) * jax.lax.rsqrt(var + EPS)
    out = yhat * gamma.reshape(1, -1, 1, 1) + beta.reshape(1, -1, 1, 1)
    return jnp.maximum(out, 0.0)


if __name__ == "__main__":
    # Small shapes consistent with the module: N=2, Cin=4, H=W=16, Cout=8, rate=2.
    N, Cin, H, W = 2, 4, 16, 16
    Cout, rate = 8, 2

    key = jax.random.PRNGKey(0)
    k_x, k_w, k_g, k_b = jax.random.split(key, 4)

    x = jax.random.normal(k_x, (N, Cin, H, W), dtype=jnp.float32)
    # Conv2d(Cin, Cout, 3, padding=rate, dilation=rate, bias=False) weight
    weight = 0.1 * jax.random.normal(k_w, (Cout, Cin, 3, 3), dtype=jnp.float32)
    # BatchNorm2d affine params
    gamma = 1.0 + 0.1 * jax.random.normal(k_g, (Cout,), dtype=jnp.float32)
    beta = 0.1 * jax.random.normal(k_b, (Cout,), dtype=jnp.float32)

    out = aspp_conv_pallas(x, weight, gamma, beta, rate)
    out = jax.block_until_ready(out)

    ref = aspp_conv_ref(x, weight, gamma, beta, rate)
    assert out.shape == (N, Cout, H, W), out.shape
    max_err = float(jnp.max(jnp.abs(out - ref)))
    # bf16 MXU operands with f32 accumulation -> bf16-level tolerance
    assert jnp.allclose(out, ref, atol=2e-2, rtol=2e-2), max_err

    print("KERNEL_OK")
</pallas_src>

<mosaic_0001>
module attributes {stable_mosaic.version = 11 : i64} {
  func.func @_conv_stats_kernel(%arg0: i32, %arg1: i32, %arg2: i32, %arg3: memref<1x20x20x128xbf16, #tpu.memory_space<vmem>>, %arg4: memref<9x128x128xbf16, #tpu.memory_space<vmem>>, %arg5: memref<1x256x128xf32, #tpu.memory_space<vmem>>, %arg6: memref<1x8x128xf32, #tpu.memory_space<vmem>>) attributes {dimension_semantics = [#tpu.dimension_semantics<parallel>, #tpu.dimension_semantics<parallel>, #tpu.dimension_semantics<arbitrary>], iteration_bounds = array<i64: 2, 1, 1>, scalar_prefetch = 0 : i64, scratch_operands = 0 : i64, tpu.core_type = #tpu.core_type<tc>, window_params = [{transform_indices = @transform_0, window_bounds = array<i64: 1, 20, 20, 128>}, {transform_indices = @transform_1, window_bounds = array<i64: 9, 128, 128>}, {transform_indices = @transform_2, window_bounds = array<i64: 1, 256, 128>}, {transform_indices = @transform_3, window_bounds = array<i64: 1, 8, 128>}]} {
    %c0_i32 = arith.constant 0 : i32
    %0 = arith.cmpi eq, %arg2, %c0_i32 : i32
    %1 = arith.extui %0 : i1 to i32
    %c0_i32_0 = arith.constant 0 : i32
    %2 = arith.cmpi ne, %1, %c0_i32_0 : i32
    scf.if %2 {
      %cst_95 = arith.constant 0.000000e+00 : f32
      %111 = vector.broadcast %cst_95 : f32 to vector<1x256x128xf32>
      %c0_96 = arith.constant 0 : index
      %c0_97 = arith.constant 0 : index
      %c0_98 = arith.constant 0 : index
      %112 = vector.load %arg5[%c0_96, %c0_97, %c0_98] : memref<1x256x128xf32, #tpu.memory_space<vmem>>, vector<1x256x128xf32>
      tpu.vector_store %arg5[%c0_96, %c0_97, %c0_98], %111 {strides = array<i32>} : memref<1x256x128xf32, #tpu.memory_space<vmem>>, vector<1x256x128xf32>,
    } else {
    }
    %c0 = arith.constant 0 : index
    %c0_1 = arith.constant 0 : index
    %c0_2 = arith.constant 0 : index
    %c0_3 = arith.constant 0 : index
    %3 = vector.load %arg3[%c0, %c0_1, %c0_2, %c0_3] : memref<1x20x20x128xbf16, #tpu.memory_space<vmem>>, vector<1x16x20x128xbf16>
    %4 = vector.shape_cast %3 : vector<1x16x20x128xbf16> to vector<16x20x128xbf16>
    %5 = vector.extract_strided_slice %4 {offsets = [0, 0, 0], sizes = [16, 16, 128], strides = [1, 1, 1]} : vector<16x20x128xbf16> to vector<16x16x128xbf16>
    %c0_4 = arith.constant 0 : index
    %c0_5 = arith.constant 0 : index
    %c0_6 = arith.constant 0 : index
    %6 = vector.load %arg4[%c0_4, %c0_5, %c0_6] : memref<9x128x128xbf16, #tpu.memory_space<vmem>>, vector<1x128x128xbf16>
    %7 = vector.shape_cast %6 : vector<1x128x128xbf16> to vector<128x128xbf16>
    %c0_7 = arith.constant 0 : index
    %c0_8 = arith.constant 0 : index
    %c0_9 = arith.constant 0 : index
    %8 = vector.load %arg5[%c0_7, %c0_8, %c0_9] : memref<1x256x128xf32, #tpu.memory_space<vmem>>, vector<1x256x128xf32>
    %9 = vector.shape_cast %8 : vector<1x256x128xf32> to vector<256x128xf32>
    %10 = vector.shape_cast %5 : vector<16x16x128xbf16> to vector<256x128xbf16>
    %cst = arith.constant dense<0.000000e+00> : vector<256x128xf32>
    %11 = tpu.matmul %10, %7, %cst {dimension_numbers = #tpu.dot_dimension_numbers<[1], [0], [0], [1], [0, 0, 1, 1], [], []>} : vector<256x128xbf16>, vector<128x128xbf16>, vector<256x128xf32> -> vector<256x128xf32>
    %12 = arith.addf %9, %11 : vector<256x128xf32>
    %c0_10 = arith.constant 0 : index
    %c0_11 = arith.constant 0 : index
    %c0_12 = arith.constant 0 : index
    %13 = vector.load %arg5[%c0_10, %c0_11, %c0_12] : memref<1x256x128xf32, #tpu.memory_space<vmem>>, vector<1x256x128xf32>
    %14 = vector.shape_cast %13 : vector<1x256x128xf32> to vector<256x128xf32>
    %15 = vector.shape_cast %12 : vector<256x128xf32> to vector<1x256x128xf32>
    tpu.vector_store %arg5[%c0_10, %c0_11, %c0_12], %15 {strides = array<i32>} : memref<1x256x128xf32, #tpu.memory_space<vmem>>, vector<1x256x128xf32>,
    %16 = vector.extract_strided_slice %4 {offsets = [0, 2, 0], sizes = [16, 16, 128], strides = [1, 1, 1]} : vector<16x20x128xbf16> to vector<16x16x128xbf16>
    %c1 = arith.constant 1 : index
    %c0_13 = arith.constant 0 : index
    %c0_14 = arith.constant 0 : index
    %17 = vector.load %arg4[%c1, %c0_13, %c0_14] : memref<9x128x128xbf16, #tpu.memory_space<vmem>>, vector<1x128x128xbf16>
    %18 = vector.shape_cast %17 : vector<1x128x128xbf16> to vector<128x128xbf16>
    %c0_15 = arith.constant 0 : index
    %c0_16 = arith.constant 0 : index
    %c0_17 = arith.constant 0 : index
    %19 = vector.load %arg5[%c0_15, %c0_16, %c0_17] : memref<1x256x128xf32, #tpu.memory_space<vmem>>, vector<1x256x128xf32>
    %20 = vector.shape_cast %19 : vector<1x256x128xf32> to vector<256x128xf32>
    %21 = vector.shape_cast %16 : vector<16x16x128xbf16> to vector<256x128xbf16>
    %cst_18 = arith.constant dense<0.000000e+00> : vector<256x128xf32>
    %22 = tpu.matmul %21, %18, %cst_18 {dimension_numbers = #tpu.dot_dimension_numbers<[1], [0], [0], [1], [0, 0, 1, 1], [], []>} : vector<256x128xbf16>, vector<128x128xbf16>, vector<256x128xf32> -> vector<256x128xf32>
    %23 = arith.addf %20, %22 : vector<256x128xf32>
    %c0_19 = arith.constant 0 : index
    %c0_20 = arith.constant 0 : index
    %c0_21 = arith.constant 0 : index
    %24 = vector.load %arg5[%c0_19, %c0_20, %c0_21] : memref<1x256x128xf32, #tpu.memory_space<vmem>>, vector<1x256x128xf32>
    %25 = vector.shape_cast %24 : vector<1x256x128xf32> to vector<256x128xf32>
    %26 = vector.shape_cast %23 : vector<256x128xf32> to vector<1x256x128xf32>
    tpu.vector_store %arg5[%c0_19, %c0_20, %c0_21], %26 {strides = array<i32>} : memref<1x256x128xf32, #tpu.memory_space<vmem>>, vector<1x256x128xf32>,
    %27 = vector.extract_strided_slice %4 {offsets = [0, 4, 0], sizes = [16, 16, 128], strides = [1, 1, 1]} : vector<16x20x128xbf16> to vector<16x16x128xbf16>
    %c2 = arith.constant 2 : index
    %c0_22 = arith.constant 0 : index
    %c0_23 = arith.constant 0 : index
    %28 = vector.load %arg4[%c2, %c0_22, %c0_23] : memref<9x128x128xbf16, #tpu.memory_space<vmem>>, vector<1x128x128xbf16>
    %29 = vector.shape_cast %28 : vector<1x128x128xbf16> to vector<128x128xbf16>
    %c0_24 = arith.constant 0 : index
    %c0_25 = arith.constant 0 : index
    %c0_26 = arith.constant 0 : index
    %30 = vector.load %arg5[%c0_24, %c0_25, %c0_26] : memref<1x256x128xf32, #tpu.memory_space<vmem>>, vector<1x256x128xf32>
    %31 = vector.shape_cast %30 : vector<1x256x128xf32> to vector<256x128xf32>
    %32 = vector.shape_cast %27 : vector<16x16x128xbf16> to vector<256x128xbf16>
    %cst_27 = arith.constant dense<0.000000e+00> : vector<256x128xf32>
    %33 = tpu.matmul %32, %29, %cst_27 {dimension_numbers = #tpu.dot_dimension_numbers<[1], [0], [0], [1], [0, 0, 1, 1], [], []>} : vector<256x128xbf16>, vector<128x128xbf16>, vector<256x128xf32> -> vector<256x128xf32>
    %34 = arith.addf %31, %33 : vector<256x128xf32>
    %c0_28 = arith.constant 0 : index
    %c0_29 = arith.constant 0 : index
    %c0_30 = arith.constant 0 : index
    %35 = vector.load %arg5[%c0_28, %c0_29, %c0_30] : memref<1x256x128xf32, #tpu.memory_space<vmem>>, vector<1x256x128xf32>
    %36 = vector.shape_cast %35 : vector<1x256x128xf32> to vector<256x128xf32>
    %37 = vector.shape_cast %34 : vector<256x128xf32> to vector<1x256x128xf32>
    tpu.vector_store %arg5[%c0_28, %c0_29, %c0_30], %37 {strides = array<i32>} : memref<1x256x128xf32, #tpu.memory_space<vmem>>, vector<1x256x128xf32>,
    %c0_31 = arith.constant 0 : index
    %c2_32 = arith.constant 2 : index
    %c0_33 = arith.constant 0 : index
    %c0_34 = arith.constant 0 : index
    %38 = vector.load %arg3[%c0_31, %c2_32, %c0_33, %c0_34] : memref<1x20x20x128xbf16, #tpu.memory_space<vmem>>, vector<1x16x20x128xbf16>
    %39 = vector.shape_cast %38 : vector<1x16x20x128xbf16> to vector<16x20x128xbf16>
    %40 = vector.extract_strided_slice %39 {offsets = [0, 0, 0], sizes = [16, 16, 128], strides = [1, 1, 1]} : vector<16x20x128xbf16> to vector<16x16x128xbf16>
    %c3 = arith.constant 3 : index
    %c0_35 = arith.constant 0 : index
    %c0_36 = arith.constant 0 : index
    %41 = vector.load %arg4[%c3, %c0_35, %c0_36] : memref<9x128x128xbf16, #tpu.memory_space<vmem>>, vector<1x128x128xbf16>
    %42 = vector.shape_cast %41 : vector<1x128x128xbf16> to vector<128x128xbf16>
    %c0_37 = arith.constant 0 : index
    %c0_38 = arith.constant 0 : index
    %c0_39 = arith.constant 0 : index
    %43 = vector.load %arg5[%c0_37, %c0_38, %c0_39] : memref<1x256x128xf32, #tpu.memory_space<vmem>>, vector<1x256x128xf32>
    %44 = vector.shape_cast %43 : vector<1x256x128xf32> to vector<256x128xf32>
    %45 = vector.shape_cast %40 : vector<16x16x128xbf16> to vector<256x128xbf16>
    %cst_40 = arith.constant dense<0.000000e+00> : vector<256x128xf32>
    %46 = tpu.matmul %45, %42, %cst_40 {dimension_numbers = #tpu.dot_dimension_numbers<[1], [0], [0], [1], [0, 0, 1, 1], [], []>} : vector<256x128xbf16>, vector<128x128xbf16>, vector<256x128xf32> -> vector<256x128xf32>
    %47 = arith.addf %44, %46 : vector<256x128xf32>
    %c0_41 = arith.constant 0 : index
    %c0_42 = arith.constant 0 : index
    %c0_43 = arith.constant 0 : index
    %48 = vector.load %arg5[%c0_41, %c0_42, %c0_43] : memref<1x256x128xf32, #tpu.memory_space<vmem>>, vector<1x256x128xf32>
    %49 = vector.shape_cast %48 : vector<1x256x128xf32> to vector<256x128xf32>
    %50 = vector.shape_cast %47 : vector<256x128xf32> to vector<1x256x128xf32>
    tpu.vector_store %arg5[%c0_41, %c0_42, %c0_43], %50 {strides = array<i32>} : memref<1x256x128xf32, #tpu.memory_space<vmem>>, vector<1x256x128xf32>,
    %51 = vector.extract_strided_slice %39 {offsets = [0, 2, 0], sizes = [16, 16, 128], strides = [1, 1, 1]} : vector<16x20x128xbf16> to vector<16x16x128xbf16>
    %c4 = arith.constant 4 : index
    %c0_44 = arith.constant 0 : index
    %c0_45 = arith.constant 0 : index
    %52 = vector.load %arg4[%c4, %c0_44, %c0_45] : memref<9x128x128xbf16, #tpu.memory_space<vmem>>, vector<1x128x128xbf16>
    %53 = vector.shape_cast %52 : vector<1x128x128xbf16> to vector<128x128xbf16>
    %c0_46 = arith.constant 0 : index
    %c0_47 = arith.constant 0 : index
    %c0_48 = arith.constant 0 : index
    %54 = vector.load %arg5[%c0_46, %c0_47, %c0_48] : memref<1x256x128xf32, #tpu.memory_space<vmem>>, vector<1x256x128xf32>
    %55 = vector.shape_cast %54 : vector<1x256x128xf32> to vector<256x128xf32>
    %56 = vector.shape_cast %51 : vector<16x16x128xbf16> to vector<256x128xbf16>
    %cst_49 = arith.constant dense<0.000000e+00> : vector<256x128xf32>
    %57 = tpu.matmul %56, %53, %cst_49 {dimension_numbers = #tpu.dot_dimension_numbers<[1], [0], [0], [1], [0, 0, 1, 1], [], []>} : vector<256x128xbf16>, vector<128x128xbf16>, vector<256x128xf32> -> vector<256x128xf32>
    %58 = arith.addf %55, %57 : vector<256x128xf32>
    %c0_50 = arith.constant 0 : index
    %c0_51 = arith.constant 0 : index
    %c0_52 = arith.constant 0 : index
    %59 = vector.load %arg5[%c0_50, %c0_51, %c0_52] : memref<1x256x128xf32, #tpu.memory_space<vmem>>, vector<1x256x128xf32>
    %60 = vector.shape_cast %59 : vector<1x256x128xf32> to vector<256x128xf32>
    %61 = vector.shape_cast %58 : vector<256x128xf32> to vector<1x256x128xf32>
    tpu.vector_store %arg5[%c0_50, %c0_51, %c0_52], %61 {strides = array<i32>} : memref<1x256x128xf32, #tpu.memory_space<vmem>>, vector<1x256x128xf32>,
    %62 = vector.extract_strided_slice %39 {offsets = [0, 4, 0], sizes = [16, 16, 128], strides = [1, 1, 1]} : vector<16x20x128xbf16> to vector<16x16x128xbf16>
    %c5 = arith.constant 5 : index
    %c0_53 = arith.constant 0 : index
    %c0_54 = arith.constant 0 : index
    %63 = vector.load %arg4[%c5, %c0_53, %c0_54] : memref<9x128x128xbf16, #tpu.memory_space<vmem>>, vector<1x128x128xbf16>
    %64 = vector.shape_cast %63 : vector<1x128x128xbf16> to vector<128x128xbf16>
    %c0_55 = arith.constant 0 : index
    %c0_56 = arith.constant 0 : index
    %c0_57 = arith.constant 0 : index
    %65 = vector.load %arg5[%c0_55, %c0_56, %c0_57] : memref<1x256x128xf32, #tpu.memory_space<vmem>>, vector<1x256x128xf32>
    %66 = vector.shape_cast %65 : vector<1x256x128xf32> to vector<256x128xf32>
    %67 = vector.shape_cast %62 : vector<16x16x128xbf16> to vector<256x128xbf16>
    %cst_58 = arith.constant dense<0.000000e+00> : vector<256x128xf32>
    %68 = tpu.matmul %67, %64, %cst_58 {dimension_numbers = #tpu.dot_dimension_numbers<[1], [0], [0], [1], [0, 0, 1, 1], [], []>} : vector<256x128xbf16>, vector<128x128xbf16>, vector<256x128xf32> -> vector<256x128xf32>
    %69 = arith.addf %66, %68 : vector<256x128xf32>
    %c0_59 = arith.constant 0 : index
    %c0_60 = arith.constant 0 : index
    %c0_61 = arith.constant 0 : index
    %70 = vector.load %arg5[%c0_59, %c0_60, %c0_61] : memref<1x256x128xf32, #tpu.memory_space<vmem>>, vector<1x256x128xf32>
    %71 = vector.shape_cast %70 : vector<1x256x128xf32> to vector<256x128xf32>
    %72 = vector.shape_cast %69 : vector<256x128xf32> to vector<1x256x128xf32>
    tpu.vector_store %arg5[%c0_59, %c0_60, %c0_61], %72 {strides = array<i32>} : memref<1x256x128xf32, #tpu.memory_space<vmem>>, vector<1x256x128xf32>,
    %c0_62 = arith.constant 0 : index
    %c4_63 = arith.constant 4 : index
    %c0_64 = arith.constant 0 : index
    %c0_65 = arith.constant 0 : index
    %73 = vector.load %arg3[%c0_62, %c4_63, %c0_64, %c0_65] : memref<1x20x20x128xbf16, #tpu.memory_space<vmem>>, vector<1x16x20x128xbf16>
    %74 = vector.shape_cast %73 : vector<1x16x20x128xbf16> to vector<16x20x128xbf16>
    %75 = vector.extract_strided_slice %74 {offsets = [0, 0, 0], sizes = [16, 16, 128], strides = [1, 1, 1]} : vector<16x20x128xbf16> to vector<16x16x128xbf16>
    %c6 = arith.constant 6 : index
    %c0_66 = arith.constant 0 : index
    %c0_67 = arith.constant 0 : index
    %76 = vector.load %arg4[%c6, %c0_66, %c0_67] : memref<9x128x128xbf16, #tpu.memory_space<vmem>>, vector<1x128x128xbf16>
    %77 = vector.shape_cast %76 : vector<1x128x128xbf16> to vector<128x128xbf16>
    %c0_68 = arith.constant 0 : index
    %c0_69 = arith.constant 0 : index
    %c0_70 = arith.constant 0 : index
    %78 = vector.load %arg5[%c0_68, %c0_69, %c0_70] : memref<1x256x128xf32, #tpu.memory_space<vmem>>, vector<1x256x128xf32>
    %79 = vector.shape_cast %78 : vector<1x256x128xf32> to vector<256x128xf32>
    %80 = vector.shape_cast %75 : vector<16x16x128xbf16> to vector<256x128xbf16>
    %cst_71 = arith.constant dense<0.000000e+00> : vector<256x128xf32>
    %81 = tpu.matmul %80, %77, %cst_71 {dimension_numbers = #tpu.dot_dimension_numbers<[1], [0], [0], [1], [0, 0, 1, 1], [], []>} : vector<256x128xbf16>, vector<128x128xbf16>, vector<256x128xf32> -> vector<256x128xf32>
    %82 = arith.addf %79, %81 : vector<256x128xf32>
    %c0_72 = arith.constant 0 : index
    %c0_73 = arith.constant 0 : index
    %c0_74 = arith.constant 0 : index
    %83 = vector.load %arg5[%c0_72, %c0_73, %c0_74] : memref<1x256x128xf32, #tpu.memory_space<vmem>>, vector<1x256x128xf32>
    %84 = vector.shape_cast %83 : vector<1x256x128xf32> to vector<256x128xf32>
    %85 = vector.shape_cast %82 : vector<256x128xf32> to vector<1x256x128xf32>
    tpu.vector_store %arg5[%c0_72, %c0_73, %c0_74], %85 {strides = array<i32>} : memref<1x256x128xf32, #tpu.memory_space<vmem>>, vector<1x256x128xf32>,
    %86 = vector.extract_strided_slice %74 {offsets = [0, 2, 0], sizes = [16, 16, 128], strides = [1, 1, 1]} : vector<16x20x128xbf16> to vector<16x16x128xbf16>
    %c7 = arith.constant 7 : index
    %c0_75 = arith.constant 0 : index
    %c0_76 = arith.constant 0 : index
    %87 = vector.load %arg4[%c7, %c0_75, %c0_76] : memref<9x128x128xbf16, #tpu.memory_space<vmem>>, vector<1x128x128xbf16>
    %88 = vector.shape_cast %87 : vector<1x128x128xbf16> to vector<128x128xbf16>
    %c0_77 = arith.constant 0 : index
    %c0_78 = arith.constant 0 : index
    %c0_79 = arith.constant 0 : index
    %89 = vector.load %arg5[%c0_77, %c0_78, %c0_79] : memref<1x256x128xf32, #tpu.memory_space<vmem>>, vector<1x256x128xf32>
    %90 = vector.shape_cast %89 : vector<1x256x128xf32> to vector<256x128xf32>
    %91 = vector.shape_cast %86 : vector<16x16x128xbf16> to vector<256x128xbf16>
    %cst_80 = arith.constant dense<0.000000e+00> : vector<256x128xf32>
    %92 = tpu.matmul %91, %88, %cst_80 {dimension_numbers = #tpu.dot_dimension_numbers<[1], [0], [0], [1], [0, 0, 1, 1], [], []>} : vector<256x128xbf16>, vector<128x128xbf16>, vector<256x128xf32> -> vector<256x128xf32>
    %93 = arith.addf %90, %92 : vector<256x128xf32>
    %c0_81 = arith.constant 0 : index
    %c0_82 = arith.constant 0 : index
    %c0_83 = arith.constant 0 : index
    %94 = vector.load %arg5[%c0_81, %c0_82, %c0_83] : memref<1x256x128xf32, #tpu.memory_space<vmem>>, vector<1x256x128xf32>
    %95 = vector.shape_cast %94 : vector<1x256x128xf32> to vector<256x128xf32>
    %96 = vector.shape_cast %93 : vector<256x128xf32> to vector<1x256x128xf32>
    tpu.vector_store %arg5[%c0_81, %c0_82, %c0_83], %96 {strides = array<i32>} : memref<1x256x128xf32, #tpu.memory_space<vmem>>, vector<1x256x128xf32>,
    %97 = vector.extract_strided_slice %74 {offsets = [0, 4, 0], sizes = [16, 16, 128], strides = [1, 1, 1]} : vector<16x20x128xbf16> to vector<16x16x128xbf16>
    %c8 = arith.constant 8 : index
    %c0_84 = arith.constant 0 : index
    %c0_85 = arith.constant 0 : index
    %98 = vector.load %arg4[%c8, %c0_84, %c0_85] : memref<9x128x128xbf16, #tpu.memory_space<vmem>>, vector<1x128x128xbf16>
    %99 = vector.shape_cast %98 : vector<1x128x128xbf16> to vector<128x128xbf16>
    %c0_86 = arith.constant 0 : index
    %c0_87 = arith.constant 0 : index
    %c0_88 = arith.constant 0 : index
    %100 = vector.load %arg5[%c0_86, %c0_87, %c0_88] : memref<1x256x128xf32, #tpu.memory_space<vmem>>, vector<1x256x128xf32>
    %101 = vector.shape_cast %100 : vector<1x256x128xf32> to vector<256x128xf32>
    %102 = vector.shape_cast %97 : vector<16x16x128xbf16> to vector<256x128xbf16>
    %cst_89 = arith.constant dense<0.000000e+00> : vector<256x128xf32>
    %103 = tpu.matmul %102, %99, %cst_89 {dimension_numbers = #tpu.dot_dimension_numbers<[1], [0], [0], [1], [0, 0, 1, 1], [], []>} : vector<256x128xbf16>, vector<128x128xbf16>, vector<256x128xf32> -> vector<256x128xf32>
    %104 = arith.addf %101, %103 : vector<256x128xf32>
    %c0_90 = arith.constant 0 : index
    %c0_91 = arith.constant 0 : index
    %c0_92 = arith.constant 0 : index
    %105 = vector.load %arg5[%c0_90, %c0_91, %c0_92] : memref<1x256x128xf32, #tpu.memory_space<vmem>>, vector<1x256x128xf32>
    %106 = vector.shape_cast %105 : vector<1x256x128xf32> to vector<256x128xf32>
    %107 = vector.shape_cast %104 : vector<256x128xf32> to vector<1x256x128xf32>
    tpu.vector_store %arg5[%c0_90, %c0_91, %c0_92], %107 {strides = array<i32>} : memref<1x256x128xf32, #tpu.memory_space<vmem>>, vector<1x256x128xf32>,
    %c0_i32_93 = arith.constant 0 : i32
    %108 = arith.cmpi eq, %arg2, %c0_i32_93 : i32
    %109 = arith.extui %108 : i1 to i32
    %c0_i32_94 = arith.constant 0 : i32
    %110 = arith.cmpi ne, %109, %c0_i32_94 : i32
    scf.if %110 {
      %c0_95 = arith.constant 0 : index
      %c0_96 = arith.constant 0 : index
      %c0_97 = arith.constant 0 : index
      %111 = vector.load %arg5[%c0_95, %c0_96, %c0_97] : memref<1x256x128xf32, #tpu.memory_space<vmem>>, vector<1x256x128xf32>
      %112 = vector.shape_cast %111 : vector<1x256x128xf32> to vector<256x128xf32>
      %cst_98 = arith.constant dense<0.000000e+00> : vector<128xf32>
      %113 = vector.multi_reduction <add>, %112, %cst_98 [0] : vector<256x128xf32> to vector<128xf32>
      %114 = vector.shape_cast %113 : vector<128xf32> to vector<1x128xf32>
      %115 = arith.mulf %112, %112 : vector<256x128xf32>
      %cst_99 = arith.constant dense<0.000000e+00> : vector<128xf32>
      %116 = vector.multi_reduction <add>, %115, %cst_99 [0] : vector<256x128xf32> to vector<128xf32>
      %117 = vector.shape_cast %116 : vector<128xf32> to vector<1x128xf32>
      %cst_100 = arith.constant 0.000000e+00 : f32
      %118 = vector.broadcast %cst_100 : f32 to vector<6x128xf32>
      %119 = tpu.concatenate %114, %117, %118 in 0 : vector<1x128xf32>, vector<1x128xf32>, vector<6x128xf32> -> vector<8x128xf32>
      %c0_101 = arith.constant 0 : index
      %c0_102 = arith.constant 0 : index
      %c0_103 = arith.constant 0 : index
      %120 = vector.load %arg6[%c0_101, %c0_102, %c0_103] : memref<1x8x128xf32, #tpu.memory_space<vmem>>, vector<1x8x128xf32>
      %121 = vector.shape_cast %120 : vector<1x8x128xf32> to vector<8x128xf32>
      %122 = vector.shape_cast %119 : vector<8x128xf32> to vector<1x8x128xf32>
      tpu.vector_store %arg6[%c0_101, %c0_102, %c0_103], %122 {strides = array<i32>} : memref<1x8x128xf32, #tpu.memory_space<vmem>>, vector<1x8x128xf32>,
    } else {
    }
    return
  }
  func.func @transform_0(%arg0: i32, %arg1: i32, %arg2: i32) -> (i32, i32, i32, i32) {
    %c0_i32 = arith.constant 0 : i32
    %c0_i32_0 = arith.constant 0 : i32
    %c0_i32_1 = arith.constant 0 : i32
    return %arg0, %c0_i32, %c0_i32_0, %arg2 : i32, i32, i32, i32
  }
  func.func @transform_1(%arg0: i32, %arg1: i32, %arg2: i32) -> (i32, i32, i32) {
    %c0_i32 = arith.constant 0 : i32
    %c0_i32_0 = arith.constant 0 : i32
    return %c0_i32, %arg2, %arg1 : i32, i32, i32
  }
  func.func @transform_2(%arg0: i32, %arg1: i32, %arg2: i32) -> (i32, i32, i32) {
    %c0_i32 = arith.constant 0 : i32
    %c0_i32_0 = arith.constant 0 : i32
    return %arg0, %c0_i32, %arg1 : i32, i32, i32
  }
  func.func @transform_3(%arg0: i32, %arg1: i32, %arg2: i32) -> (i32, i32, i32) {
    %c0_i32 = arith.constant 0 : i32
    %c0_i32_0 = arith.constant 0 : i32
    return %arg0, %c0_i32, %arg1 : i32, i32, i32
  }
}

</mosaic_0001>

<llo_original>
// kernel: tpu_custom_call.1
$region0: #{tpu_custom_call.1}
  #allocation0 [shape = 'u32[]', space=smem, size = 0x4, offset = 0x4, fixed_abs, tag = 'smem constant byte address 0x4 - core index']
  #allocation1 [shape = 'u32[144,128]{1,0:T(1,128)}', space=vmem, size = 0x12000, scoped, tag = 'internal scratch']
  %s0 = inlined_call_operand.vmem [shape: bf16[2,20,20,128], index: 0, kind: input, shape index: {}]
  %s1 = inlined_call_operand.vmem [shape: bf16[9,128,128], index: 1, kind: input, shape index: {}]
  %s2 = inlined_call_operand.hbm [shape: f32[2,256,128], index: 2, kind: output, shape index: {0}]
  %s3 = inlined_call_operand.hbm [shape: f32[2,8,128], index: 3, kind: output, shape index: {1}]
  %4 = xla_tuple %s2, %s3
  %s5 = sld [smem:[#allocation0]]
  $region57: #{tpu_custom_call.1} parent=0
    _
  %s7 = ssub.s32 1, %s5
  %s8 = scalar_select 0, %s7, %s5
  $region1: #{tpu_custom_call.1} parent=0
    #allocation2 [shape = 'u8[262144]{0}', space=vmem, size = 0x40000, scoped, tag = 'output window, operand 0']
    #allocation3 [shape = 's32[2]{0}', space=sflag, size = 0x8, scoped, tag = 'scoped memory for tpu_custom_call.1']
    #allocation4 [shape = 'u8[8192]{0}', space=vmem, size = 0x2000, scoped, tag = 'output window, operand 1']
    #allocation5 [shape = 's32[2]{0}', space=sflag, size = 0x8, scoped, tag = 'scoped memory for tpu_custom_call.1']
    %9 = vsyncpa [#allocation3], 0
    %s10 = scalar_lea.sflag [#allocation3], 1
    %11 = vsyncpa %s10, 0
    %12 = vsyncpa [#allocation5], 0
    %s13 = scalar_lea.sflag [#allocation5], 1
    %14 = vsyncpa %s13, 0
    loop: start=0, step=1, limit=4
    $region2: #{tpu_custom_call.1} parent=1 // loop_pre_header
      _
    $region3: #{tpu_custom_call.1} parent=1 // loop_header
      %s16 = sphi 0, %s20
      %p17 = scmp.ge.s32.totalorder %s16, 4
      %s23 = sphi 0, %s42
      %s24 = sphi 0, %s38
      %s25 = sphi 0, %s34
      %s26 = sphi 0, %s23
      %s27 = sphi 0, %s24
      %s28 = sphi 0, %s25
      %s29 = sphi 0, %s26
      %s30 = sphi 0, %s27
      %s31 = sphi 0, %s28
      %s47 = sphi 0, %s49
      %s50 = sphi 0, %s47
      %s51 = sphi 0, %s50
      %s67 = sphi 0, %s51
      %s75 = sphi 0, %s77
      %s78 = sphi 0, %s75
      %s79 = sphi 0, %s78
      %s95 = sphi 0, %s79
      %s103 = sphi 0, %s105
      %s106 = sphi 0, %s103
      %s107 = sphi 0, %s106
      %s123 = sphi 0, %s107
      %s131 = sphi 0, %s133
      %s134 = sphi 0, %s131
      %s135 = sphi 0, %s134
      %s151 = sphi 0, %s135
    $region4: #{tpu_custom_call.1} parent=1 // loop_header_branch
      %19 = sbr.rel (%p17) target = $region8
    $region5: #{tpu_custom_call.1} parent=1 // loop_body
      %s21 = ssub.s32 %s16, 1
      %s22 = ssub.s32 %s16, 2
      %s32 = sadd.s32 1, %s25
      %p33 = scmp.ge.s32.totalorder %s32, 1
      %s34 = scalar_select %p33, 0, %s32
      %s35 = sadd.s32 1, %s24
      %s36 = scalar_select %p33, %s35, %s24
      %p37 = scmp.ge.s32.totalorder %s36, 1
      %s38 = scalar_select %p37, 0, %s36
      %s39 = sadd.s32 1, %s23
      %s40 = scalar_select %p37, %s39, %s23
      %p41 = scmp.ge.s32.totalorder %s40, 2
      %s42 = scalar_select %p41, 0, %s40
      %s43 = ssub.s32 %s23, %s42
      %s44 = ssub.s32 %s25, %s34
      %s45 = sor.u32 %s43, %s44
      %p46 = scmp.eq.s32.totalorder %s45, 0
      %s48 = sadd.s32 %s47, 1
      %s49 = scalar_select %p46, %s47, %s48
      %p52 = pneg %p46
      %p53 = scmp.eq.s32.totalorder %s16, 1
      %p54 = por %p52, %p53
      %p55 = scmp.ne.s32.totalorder %s47, %s50
      %p56 = scmp.eq.s32.totalorder %s16, 0
      %p57 = por %p55, %p56
      %p58 = scmp.ne.s32.totalorder %s47, %s50
      %p59 = scmp.eq.s32.totalorder %s21, 1
      %p60 = por %p58, %p59
      %p61 = scmp.ne.s32.totalorder %s50, %s51
      %p62 = scmp.eq.s32.totalorder %s21, 0
      %p63 = por %p61, %p62
      %p64 = scmp.ne.s32.totalorder %s50, %s51
      %p65 = scmp.eq.s32.totalorder %s22, 1
      %p66 = por %p64, %p65
      %p68 = scmp.ne.s32.totalorder %s51, %s67
      %p69 = scmp.eq.s32.totalorder %s22, 0
      %p70 = por %p68, %p69
      %s71 = ssub.s32 %s25, %s34
      %s72 = ssub.s32 %s24, %s38
      %s73 = sor.u32 %s71, %s72
      %p74 = scmp.eq.s32.totalorder %s73, 0
      %s76 = sadd.s32 %s75, 1
      %s77 = scalar_select %p74, %s75, %s76
      %p80 = pneg %p74
      %p81 = scmp.eq.s32.totalorder %s16, 1
      %p82 = por %p80, %p81
      %p83 = scmp.ne.s32.totalorder %s75, %s78
      %p84 = scmp.eq.s32.totalorder %s16, 0
      %p85 = por %p83, %p84
      %p86 = scmp.ne.s32.totalorder %s75, %s78
      %p87 = scmp.eq.s32.totalorder %s21, 1
      %p88 = por %p86, %p87
      %p89 = scmp.ne.s32.totalorder %s78, %s79
      %p90 = scmp.eq.s32.totalorder %s21, 0
      %p91 = por %p89, %p90
      %p92 = scmp.ne.s32.totalorder %s78, %s79
      %p93 = scmp.eq.s32.totalorder %s22, 1
      %p94 = por %p92, %p93
      %p96 = scmp.ne.s32.totalorder %s79, %s95
      %p97 = scmp.eq.s32.totalorder %s22, 0
      %p98 = por %p96, %p97
      %s99 = ssub.s32 %s23, %s42
      %s100 = ssub.s32 %s24, %s38
      %s101 = sor.u32 %s99, %s100
      %p102 = scmp.eq.s32.totalorder %s101, 0
      %s104 = sadd.s32 %s103, 1
      %s105 = scalar_select %p102, %s103, %s104
      %p108 = pneg %p102
      %p109 = scmp.eq.s32.totalorder %s16, 1
      %p110 = por %p108, %p109
      %p111 = scmp.ne.s32.totalorder %s103, %s106
      %p112 = scmp.eq.s32.totalorder %s16, 0
      %p113 = por %p111, %p112
      %p114 = scmp.ne.s32.totalorder %s103, %s106
      %p115 = scmp.eq.s32.totalorder %s21, 1
      %p116 = por %p114, %p115
      %p117 = scmp.ne.s32.totalorder %s106, %s107
      %p118 = scmp.eq.s32.totalorder %s21, 0
      %p119 = por %p117, %p118
      %p120 = scmp.ne.s32.totalorder %s106, %s107
      %p121 = scmp.eq.s32.totalorder %s22, 1
      %p122 = por %p120, %p121
      %p124 = scmp.ne.s32.totalorder %s107, %s123
      %p125 = scmp.eq.s32.totalorder %s22, 0
      %p126 = por %p124, %p125
      %s127 = ssub.s32 %s23, %s42
      %s128 = ssub.s32 %s24, %s38
      %s129 = sor.u32 %s127, %s128
      %p130 = scmp.eq.s32.totalorder %s129, 0
      %s132 = sadd.s32 %s131, 1
      %s133 = scalar_select %p130, %s131, %s132
      %p136 = pneg %p130
      %p137 = scmp.eq.s32.totalorder %s16, 1
      %p138 = por %p136, %p137
      %p139 = scmp.ne.s32.totalorder %s131, %s134
      %p140 = scmp.eq.s32.totalorder %s16, 0
      %p141 = por %p139, %p140
      %p142 = scmp.ne.s32.totalorder %s131, %s134
      %p143 = scmp.eq.s32.totalorder %s21, 1
      %p144 = por %p142, %p143
      %p145 = scmp.ne.s32.totalorder %s134, %s135
      %p146 = scmp.eq.s32.totalorder %s21, 0
      %p147 = por %p145, %p146
      %p148 = scmp.ne.s32.totalorder %s134, %s135
      %p149 = scmp.eq.s32.totalorder %s22, 1
      %p150 = por %p148, %p149
      %p152 = scmp.ne.s32.totalorder %s135, %s151
      %p153 = scmp.eq.s32.totalorder %s22, 0
      %p154 = por %p152, %p153
      %p155 = scmp.le.s32.totalorder 1, %s16
      %p156 = scmp.lt.s32.totalorder %s16, 3
      %p157 = pnand %p155, %p156
      %p158 = pneg %p157
      // Predicated region
      $region9: #{tpu_custom_call.1} parent=5 // pred_check
        _
      $region10: #{tpu_custom_call.1} parent=5 // pred_check_branch
        %160 = sbr.rel (%p157) target = $region12
      $region11: #{tpu_custom_call.1} parent=5 // pred_region
        %s161 = ssub.s32 %s16, 1
        // Predicated region
        $region13: #{tpu_custom_call.1} parent=11 // pred_check
          %p162 = pneg %p91
        $region14: #{tpu_custom_call.1} parent=11 // pred_check_branch
          %164 = sbr.rel (%p162) target = $region16
        $region15: #{tpu_custom_call.1} parent=11 // pred_region
          %s165 = smul.u32 16, %s28
          %p166 = scmp.lt.s32.totalorder %s165, 15
          %s167 = scalar_select %p166, %s165, 15
          %p168 = scmp.lt.s32.totalorder %s27, 0
          %s169 = scalar_select %p168, %s27, 0
          %s170 = sadd.s32 %s169, %s167
          %s171 = smul.addr %s170, 4
          %s172 = scalar_lea.vmem %s1, %s171
          %s173 = smul.u32 16, %s28
        $region16: #{tpu_custom_call.1} parent=11 // pred_fallthru
          _
      $region12: #{tpu_custom_call.1} parent=5 // pred_fallthru
        _
      %p174 = scmp.lt.s32.totalorder %s16, 2
      // Predicated region
      $region17: #{tpu_custom_call.1} parent=5 // pred_check
        %p175 = pneg %p174
      $region18: #{tpu_custom_call.1} parent=5 // pred_check_branch
        %177 = sbr.rel (%p175) target = $region20
      $region19: #{tpu_custom_call.1} parent=5 // pred_region
        // Predicated region
        $region21: #{tpu_custom_call.1} parent=19 // pred_check
          %p178 = pneg %p57
        $region22: #{tpu_custom_call.1} parent=19 // pred_check_branch
          %180 = sbr.rel (%p178) target = $region24
        $region23: #{tpu_custom_call.1} parent=19 // pred_region
          %p181 = scmp.lt.s32.totalorder %s23, 1
          %s182 = scalar_select %p181, %s23, 1
          %p183 = scmp.lt.s32.totalorder %s25, 0
          %s184 = scalar_select %p183, %s25, 0
          %s185 = smul.addr %s182, 60
          %s186 = sadd.s32 %s184, %s185
          %s187 = smul.addr %s186, 4
          %s188 = scalar_lea.vmem %s0, %s187
        $region24: #{tpu_custom_call.1} parent=19 // pred_fallthru
          _
      $region20: #{tpu_custom_call.1} parent=5 // pred_fallthru
        _
      %p189 = scmp.le.s32.totalorder 1, %s16
      %p190 = scmp.lt.s32.totalorder %s16, 3
      %p191 = pnand %p189, %p190
      %p192 = pneg %p191
      // Predicated region
      $region25: #{tpu_custom_call.1} parent=5 // pred_check
        _
      $region26: #{tpu_custom_call.1} parent=5 // pred_check_branch
        %194 = sbr.rel (%p191) target = $region28
      $region27: #{tpu_custom_call.1} parent=5 // pred_region
        %s195 = ssub.s32 %s16, 1
        %p196 = scmp.lt.s32.totalorder %s26, 1
        %s197 = scalar_select %p196, %s26, 1
        %p198 = scmp.lt.s32.totalorder %s28, 0
        %s199 = scalar_select %p198, %s28, 0
        %s200 = smul.addr %s197, 60
        %s201 = sadd.s32 %s199, %s200
        %s202 = smul.addr %s201, 4
        %s203 = scalar_lea.vmem %s0, %s202
        %p204 = pneg %p63
        %p205 = pneg %p60
        %s206 = smul.u32 16, %s28
        %p207 = scmp.lt.s32.totalorder %s206, 15
        %s208 = scalar_select %p207, %s206, 15
        %p209 = scmp.lt.s32.totalorder %s27, 0
        %s210 = scalar_select %p209, %s27, 0
        %s211 = sadd.s32 %s210, %s208
        %s212 = smul.addr %s211, 4
        %s213 = scalar_lea.vmem %s1, %s212
        %p214 = pneg %p91
        %p215 = pneg %p88
        %p216 = pneg %p119
        %p217 = pneg %p116
        %s218 = sand.u32 %s106, 1
        %s219 = scalar_lea.sflag [#allocation3], %s218
        %s220 = sand.u32 %s106, 1
        %s221 = smul.addr %s220, 256
        %s222 = scalar_lea.vmem [#allocation2], %s221
        %p223 = pneg %p147
        %p224 = pneg %p144
        %s225 = sand.u32 %s134, 1
        %s226 = scalar_lea.sflag [#allocation5], %s225
        %s227 = sand.u32 %s134, 1
        %s228 = smul.addr %s227, 8
        %s229 = scalar_lea.vmem [#allocation4], %s228
        %p230 = scmp.lt.s32.totalorder %s26, 1
        %s231 = scalar_select %p230, %s26, 1
        %p232 = scmp.lt.s32.totalorder %s28, 0
        %s233 = scalar_select %p232, %s28, 0
        %s234 = smul.addr %s231, 60
        %s235 = sadd.s32 %s233, %s234
        %s236 = smul.addr %s235, 4
        %s237 = scalar_lea.vmem %s0, %s236
        %s238 = smul.u32 16, %s28
        %p239 = scmp.lt.s32.totalorder %s238, 15
        %s240 = scalar_select %p239, %s238, 15
        %p241 = scmp.lt.s32.totalorder %s27, 0
        %s242 = scalar_select %p241, %s27, 0
        %s243 = sadd.s32 %s242, %s240
        %s244 = smul.addr %s243, 4
        %s245 = scalar_lea.vmem %s1, %s244
        %s246 = smul.u32 16, %s28
        %p248 = scmp.eq.s32.totalorder %s28, 0
        // Predicated region
        $region29: #{tpu_custom_call.1} parent=27 // pred_check
          %p249 = pneg %p248
        $region30: #{tpu_custom_call.1} parent=27 // pred_check_branch
          %251 = sbr.rel (%p249) target = $region32
        $region31: #{tpu_custom_call.1} parent=27 // pred_region
          %252 = vst [vmem:[%s222] sm:$0xff] 0.0
          %253 = vst [vmem:[%s222 + $0x8] sm:$0xff] 0.0
          %254 = vst [vmem:[%s222 + $0x10] sm:$0xff] 0.0
          %255 = vst [vmem:[%s222 + $0x18] sm:$0xff] 0.0
          %256 = vst [vmem:[%s222 + $0x20] sm:$0xff] 0.0
          %257 = vst [vmem:[%s222 + $0x28] sm:$0xff] 0.0
          %258 = vst [vmem:[%s222 + $0x30] sm:$0xff] 0.0
          %259 = vst [vmem:[%s222 + $0x38] sm:$0xff] 0.0
          %260 = vst [vmem:[%s222 + $0x40] sm:$0xff] 0.0
          %261 = vst [vmem:[%s222 + $0x48] sm:$0xff] 0.0
          %262 = vst [vmem:[%s222 + $0x50] sm:$0xff] 0.0
          %263 = vst [vmem:[%s222 + $0x58] sm:$0xff] 0.0
          %264 = vst [vmem:[%s222 + $0x60] sm:$0xff] 0.0
          %265 = vst [vmem:[%s222 + $0x68] sm:$0xff] 0.0
          %266 = vst [vmem:[%s222 + $0x70] sm:$0xff] 0.0
          %267 = vst [vmem:[%s222 + $0x78] sm:$0xff] 0.0
          %268 = vst [vmem:[%s222 + $0x80] sm:$0xff] 0.0
          %269 = vst [vmem:[%s222 + $0x88] sm:$0xff] 0.0
          %270 = vst [vmem:[%s222 + $0x90] sm:$0xff] 0.0
          %271 = vst [vmem:[%s222 + $0x98] sm:$0xff] 0.0
          %272 = vst [vmem:[%s222 + $0xa0] sm:$0xff] 0.0
          %273 = vst [vmem:[%s222 + $0xa8] sm:$0xff] 0.0
          %274 = vst [vmem:[%s222 + $0xb0] sm:$0xff] 0.0
          %275 = vst [vmem:[%s222 + $0xb8] sm:$0xff] 0.0
          %276 = vst [vmem:[%s222 + $0xc0] sm:$0xff] 0.0
          %277 = vst [vmem:[%s222 + $0xc8] sm:$0xff] 0.0
          %278 = vst [vmem:[%s222 + $0xd0] sm:$0xff] 0.0
          %279 = vst [vmem:[%s222 + $0xd8] sm:$0xff] 0.0
          %280 = vst [vmem:[%s222 + $0xe0] sm:$0xff] 0.0
          %281 = vst [vmem:[%s222 + $0xe8] sm:$0xff] 0.0
          %282 = vst [vmem:[%s222 + $0xf0] sm:$0xff] 0.0
          %283 = vst [vmem:[%s222 + $0xf8] sm:$0xff] 0.0
        $region32: #{tpu_custom_call.1} parent=27 // pred_fallthru
          _
        %v284 = vld [vmem:[%s237] sm:$0xf]
        %v285 = vld [vmem:[%s237 + $0x4] sm:$0xf]
        %v286 = vld [vmem:[%s237 + $0x8] sm:$0x3]
        %v287 = vld [vmem:[%s237 + $0xc] sm:$0xf]
        %v288 = vld [vmem:[%s237 + $0x10] sm:$0xf]
        %v289 = vld [vmem:[%s237 + $0x14] sm:$0x3]
        %v290 = vld [vmem:[%s237 + $0x18] sm:$0xf]
        %v291 = vld [vmem:[%s237 + $0x1c] sm:$0xf]
        %v292 = vld [vmem:[%s237 + $0x20] sm:$0x3]
        %v293 = vld [vmem:[%s237 + $0x24] sm:$0xf]
        %v294 = vld [vmem:[%s237 + $0x28] sm:$0xf]
        %v295 = vld [vmem:[%s237 + $0x2c] sm:$0x3]
        %v296 = vld [vmem:[%s237 + $0x30] sm:$0xf]
        %v297 = vld [vmem:[%s237 + $0x34] sm:$0xf]
        %v298 = vld [vmem:[%s237 + $0x38] sm:$0x3]
        %v299 = vld [vmem:[%s237 + $0x3c] sm:$0xf]
        %v300 = vld [vmem:[%s237 + $0x40] sm:$0xf]
        %v301 = vld [vmem:[%s237 + $0x44] sm:$0x3]
        %v302 = vld [vmem:[%s237 + $0x48] sm:$0xf]
        %v303 = vld [vmem:[%s237 + $0x4c] sm:$0xf]
        %v304 = vld [vmem:[%s237 + $0x50] sm:$0x3]
        %v305 = vld [vmem:[%s237 + $0x54] sm:$0xf]
        %v306 = vld [vmem:[%s237 + $0x58] sm:$0xf]
        %v307 = vld [vmem:[%s237 + $0x5c] sm:$0x3]
        %v308 = vld [vmem:[%s237 + $0x60] sm:$0xf]
        %v309 = vld [vmem:[%s237 + $0x64] sm:$0xf]
        %v310 = vld [vmem:[%s237 + $0x68] sm:$0x3]
        %v311 = vld [vmem:[%s237 + $0x6c] sm:$0xf]
        %v312 = vld [vmem:[%s237 + $0x70] sm:$0xf]
        %v313 = vld [vmem:[%s237 + $0x74] sm:$0x3]
        %v314 = vld [vmem:[%s237 + $0x78] sm:$0xf]
        %v315 = vld [vmem:[%s237 + $0x7c] sm:$0xf]
        %v316 = vld [vmem:[%s237 + $0x80] sm:$0x3]
        %v317 = vld [vmem:[%s237 + $0x84] sm:$0xf]
        %v318 = vld [vmem:[%s237 + $0x88] sm:$0xf]
        %v319 = vld [vmem:[%s237 + $0x8c] sm:$0x3]
        %v320 = vld [vmem:[%s237 + $0x90] sm:$0xf]
        %v321 = vld [vmem:[%s237 + $0x94] sm:$0xf]
        %v322 = vld [vmem:[%s237 + $0x98] sm:$0x3]
        %v323 = vld [vmem:[%s237 + $0x9c] sm:$0xf]
        %v324 = vld [vmem:[%s237 + $0xa0] sm:$0xf]
        %v325 = vld [vmem:[%s237 + $0xa4] sm:$0x3]
        %v326 = vld [vmem:[%s237 + $0xa8] sm:$0xf]
        %v327 = vld [vmem:[%s237 + $0xac] sm:$0xf]
        %v328 = vld [vmem:[%s237 + $0xb0] sm:$0x3]
        %v329 = vld [vmem:[%s237 + $0xb4] sm:$0xf]
        %v330 = vld [vmem:[%s237 + $0xb8] sm:$0xf]
        %v331 = vld [vmem:[%s237 + $0xbc] sm:$0x3]
        %v332 = vld [vmem:[%s245] sm:$0xf]
        %v333 = vld [vmem:[%s245 + $0x4] sm:$0xf]
        %v334 = vld [vmem:[%s245 + $0x8] sm:$0xf]
        %v335 = vld [vmem:[%s245 + $0xc] sm:$0xf]
        %v336 = vld [vmem:[%s245 + $0x10] sm:$0xf]
        %v337 = vld [vmem:[%s245 + $0x14] sm:$0xf]
        %v338 = vld [vmem:[%s245 + $0x18] sm:$0xf]
        %v339 = vld [vmem:[%s245 + $0x1c] sm:$0xf]
        %v340 = vld [vmem:[%s245 + $0x20] sm:$0xf]
        %v341 = vld [vmem:[%s245 + $0x24] sm:$0xf]
        %v342 = vld [vmem:[%s245 + $0x28] sm:$0xf]
        %v343 = vld [vmem:[%s245 + $0x2c] sm:$0xf]
        %v344 = vld [vmem:[%s245 + $0x30] sm:$0xf]
        %v345 = vld [vmem:[%s245 + $0x34] sm:$0xf]
        %v346 = vld [vmem:[%s245 + $0x38] sm:$0xf]
        %v347 = vld [vmem:[%s245 + $0x3c] sm:$0xf]
        %v348 = vld [vmem:[%s222] sm:$0xff]
        %v349 = vld [vmem:[%s222 + $0x8] sm:$0xff]
        %v350 = vld [vmem:[%s222 + $0x10] sm:$0xff]
        %v351 = vld [vmem:[%s222 + $0x18] sm:$0xff]
        %v352 = vld [vmem:[%s222 + $0x20] sm:$0xff]
        %v353 = vld [vmem:[%s222 + $0x28] sm:$0xff]
        %v354 = vld [vmem:[%s222 + $0x30] sm:$0xff]
        %v355 = vld [vmem:[%s222 + $0x38] sm:$0xff]
        %v356 = vld [vmem:[%s222 + $0x40] sm:$0xff]
        %v357 = vld [vmem:[%s222 + $0x48] sm:$0xff]
        %v358 = vld [vmem:[%s222 + $0x50] sm:$0xff]
        %v359 = vld [vmem:[%s222 + $0x58] sm:$0xff]
        %v360 = vld [vmem:[%s222 + $0x60] sm:$0xff]
        %v361 = vld [vmem:[%s222 + $0x68] sm:$0xff]
        %v362 = vld [vmem:[%s222 + $0x70] sm:$0xff]
        %v363 = vld [vmem:[%s222 + $0x78] sm:$0xff]
        %v364 = vld [vmem:[%s222 + $0x80] sm:$0xff]
        %v365 = vld [vmem:[%s222 + $0x88] sm:$0xff]
        %v366 = vld [vmem:[%s222 + $0x90] sm:$0xff]
        %v367 = vld [vmem:[%s222 + $0x98] sm:$0xff]
        %v368 = vld [vmem:[%s222 + $0xa0] sm:$0xff]
        %v369 = vld [vmem:[%s222 + $0xa8] sm:$0xff]
        %v370 = vld [vmem:[%s222 + $0xb0] sm:$0xff]
        %v371 = vld [vmem:[%s222 + $0xb8] sm:$0xff]
        %v372 = vld [vmem:[%s222 + $0xc0] sm:$0xff]
        %v373 = vld [vmem:[%s222 + $0xc8] sm:$0xff]
        %v374 = vld [vmem:[%s222 + $0xd0] sm:$0xff]
        %v375 = vld [vmem:[%s222 + $0xd8] sm:$0xff]
        %v376 = vld [vmem:[%s222 + $0xe0] sm:$0xff]
        %v377 = vld [vmem:[%s222 + $0xe8] sm:$0xff]
        %v378 = vld [vmem:[%s222 + $0xf0] sm:$0xff]
        %v379 = vld [vmem:[%s222 + $0xf8] sm:$0xff]
        %v412 = vunpack.c.l.b16 %v284
        %v413 = vunpack.c.l.b16 %v285
        %v414 = vunpack.c.l.b16 %v287
        %v415 = vunpack.c.l.b16 %v288
        %v416 = vunpack.c.l.b16 %v290
        %v417 = vunpack.c.l.b16 %v291
        %v418 = vunpack.c.l.b16 %v293
        %v419 = vunpack.c.l.b16 %v294
        %v420 = vunpack.c.l.b16 %v296
        %v421 = vunpack.c.l.b16 %v297
        %v422 = vunpack.c.l.b16 %v299
        %v423 = vunpack.c.l.b16 %v300
        %v424 = vunpack.c.l.b16 %v302
        %v425 = vunpack.c.l.b16 %v303
        %v426 = vunpack.c.l.b16 %v305
        %v427 = vunpack.c.l.b16 %v306
        %v428 = vunpack.c.l.b16 %v308
        %v429 = vunpack.c.l.b16 %v309
        %v430 = vunpack.c.l.b16 %v311
        %v431 = vunpack.c.l.b16 %v312
        %v432 = vunpack.c.l.b16 %v314
        %v433 = vunpack.c.l.b16 %v315
        %v434 = vunpack.c.l.b16 %v317
        %v435 = vunpack.c.l.b16 %v318
        %v436 = vunpack.c.l.b16 %v320
        %v437 = vunpack.c.l.b16 %v321
        %v438 = vunpack.c.l.b16 %v323
        %v439 = vunpack.c.l.b16 %v324
        %v440 = vunpack.c.l.b16 %v326
        %v441 = vunpack.c.l.b16 %v327
        %v442 = vunpack.c.l.b16 %v329
        %v443 = vunpack.c.l.b16 %v330
        %v444 = vpack.c.b16 %v413, %v412
        %v445 = vpack.c.b16 %v415, %v414
        %v446 = vpack.c.b16 %v417, %v416
        %v447 = vpack.c.b16 %v419, %v418
        %v448 = vpack.c.b16 %v421, %v420
        %v449 = vpack.c.b16 %v423, %v422
        %v450 = vpack.c.b16 %v425, %v424
        %v451 = vpack.c.b16 %v427, %v426
        %v452 = vpack.c.b16 %v429, %v428
        %v453 = vpack.c.b16 %v431, %v430
        %v454 = vpack.c.b16 %v433, %v432
        %v455 = vpack.c.b16 %v435, %v434
        %v456 = vpack.c.b16 %v437, %v436
        %v457 = vpack.c.b16 %v439, %v438
        %v458 = vpack.c.b16 %v441, %v440
        %v459 = vpack.c.b16 %v443, %v442
        %v492 = vunpack.c.l.b16 %v332
        %v493 = vunpack.c.l.b16 %v333
        %v494 = vunpack.c.l.b16 %v334
        %v495 = vunpack.c.l.b16 %v335
        %v496 = vunpack.c.l.b16 %v336
        %v497 = vunpack.c.l.b16 %v337
        %v498 = vunpack.c.l.b16 %v338
        %v499 = vunpack.c.l.b16 %v339
        %v500 = vunpack.c.l.b16 %v340
        %v501 = vunpack.c.l.b16 %v341
        %v502 = vunpack.c.l.b16 %v342
        %v503 = vunpack.c.l.b16 %v343
        %v504 = vunpack.c.l.b16 %v344
        %v505 = vunpack.c.l.b16 %v345
        %v506 = vunpack.c.l.b16 %v346
        %v507 = vunpack.c.l.b16 %v347
        %v508 = vpack.c.b16 %v493, %v492
        %v509 = vpack.c.b16 %v495, %v494
        %v510 = vpack.c.b16 %v497, %v496
        %v511 = vpack.c.b16 %v499, %v498
        %v512 = vpack.c.b16 %v501, %v500
        %v513 = vpack.c.b16 %v503, %v502
        %v514 = vpack.c.b16 %v505, %v504
        %v515 = vpack.c.b16 %v507, %v506
        %524 = vmatprep.subr.bf16.mxu0 0
        %525 = vmatpush1.bf16.msra.mxu0 %v508
        %526 = vmatprep.subr.bf16.mxu0 0
        %527 = vmatpush1.bf16.msra.mxu0 %v509
        %528 = vmatprep.subr.bf16.mxu0 0
        %529 = vmatpush1.bf16.msra.mxu0 %v510
        %530 = vmatprep.subr.bf16.mxu0 0
        %531 = vmatpush1.bf16.msra.mxu0 %v511
        %532 = vmatprep.subr.bf16.mxu0 0
        %533 = vmatpush1.bf16.msra.mxu0 %v512
        %534 = vmatprep.subr.bf16.mxu0 0
        %535 = vmatpush1.bf16.msra.mxu0 %v513
        %536 = vmatprep.subr.bf16.mxu0 0
        %537 = vmatpush1.bf16.msra.mxu0 %v514
        %538 = vmatprep.subr.bf16.mxu0 0
        %539 = vmatpush1.bf16.msra.mxu0 %v515
        %540 = vmatprep.subr.bf16.mxu0 0
        %541 = vmatpush1.bf16.msra.mxu0 0
        %542 = vmatprep.subr.bf16.mxu0 0
        %543 = vmatpush1.bf16.msra.mxu0 0
        %544 = vmatprep.subr.bf16.mxu0 0
        %545 = vmatpush1.bf16.msra.mxu0 0
        %546 = vmatprep.subr.bf16.mxu0 0
        %547 = vmatpush1.bf16.msra.mxu0 0
        %548 = vmatprep.subr.bf16.mxu0 0
        %549 = vmatpush1.bf16.msra.mxu0 0
        %550 = vmatprep.subr.bf16.mxu0 0
        %551 = vmatpush1.bf16.msra.mxu0 0
        %552 = vmatprep.subr.bf16.mxu0 0
        %553 = vmatpush1.bf16.msra.mxu0 0
        %554 = vmatprep.subr.bf16.mxu0 0
        %555 = vmatpush1.bf16.msra.mxu0 0
        %556 = vmatprep.mubr.bf16.mxu0 0
        %557 = vmatmul.mubr.bf16.gmra.mrb[0].mxu0 %v444
        %v558 = vpop.f32.mrb[0].mxu0
        %v559 = vadd.f32 0.0, %v558
        %v560 = vpop.f32.mrb[0].mxu0
        %v561 = vpop.f32.mrb[0].mxu0
        %v562 = vadd.f32 0.0, %v561
        %v563 = vpop.f32.mrb[0].mxu0
        %564 = vmatprep.mubr.bf16.mxu0 0
        %565 = vmatmul.mubr.bf16.gmra.mrb[0].mxu0 %v445
        %v566 = vpop.f32.mrb[0].mxu0
        %v567 = vadd.f32 0.0, %v566
        %v568 = vpop.f32.mrb[0].mxu0
        %v569 = vpop.f32.mrb[0].mxu0
        %v570 = vadd.f32 0.0, %v569
        %v571 = vpop.f32.mrb[0].mxu0
        %572 = vmatprep.mubr.bf16.mxu0 0
        %573 = vmatmul.mubr.bf16.gmra.mrb[0].mxu0 %v446
        %v574 = vpop.f32.mrb[0].mxu0
        %v575 = vadd.f32 0.0, %v574
        %v576 = vpop.f32.mrb[0].mxu0
        %v577 = vpop.f32.mrb[0].mxu0
        %v578 = vadd.f32 0.0, %v577
        %v579 = vpop.f32.mrb[0].mxu0
        %580 = vmatprep.mubr.bf16.mxu0 0
        %581 = vmatmul.mubr.bf16.gmra.mrb[0].mxu0 %v447
        %v582 = vpop.f32.mrb[0].mxu0
        %v583 = vadd.f32 0.0, %v582
        %v584 = vpop.f32.mrb[0].mxu0
        %v585 = vpop.f32.mrb[0].mxu0
        %v586 = vadd.f32 0.0, %v585
        %v587 = vpop.f32.mrb[0].mxu0
        %588 = vmatprep.mubr.bf16.mxu0 0
        %589 = vmatmul.mubr.bf16.gmra.mrb[0].mxu0 %v448
        %v590 = vpop.f32.mrb[0].mxu0
        %v591 = vadd.f32 0.0, %v590
        %v592 = vpop.f32.mrb[0].mxu0
        %v593 = vpop.f32.mrb[0].mxu0
        %v594 = vadd.f32 0.0, %v593
        %v595 = vpop.f32.mrb[0].mxu0
        %596 = vmatprep.mubr.bf16.mxu0 0
        %597 = vmatmul.mubr.bf16.gmra.mrb[0].mxu0 %v449
        %v598 = vpop.f32.mrb[0].mxu0
        %v599 = vadd.f32 0.0, %v598
        %v600 = vpop.f32.mrb[0].mxu0
        %v601 = vpop.f32.mrb[0].mxu0
        %v602 = vadd.f32 0.0, %v601
        %v603 = vpop.f32.mrb[0].mxu0
        %604 = vmatprep.mubr.bf16.mxu0 0
        %605 = vmatmul.mubr.bf16.gmra.mrb[0].mxu0 %v450
        %v606 = vpop.f32.mrb[0].mxu0
        %v607 = vadd.f32 0.0, %v606
        %v608 = vpop.f32.mrb[0].mxu0
        %v609 = vpop.f32.mrb[0].mxu0
        %v610 = vadd.f32 0.0, %v609
        %v611 = vpop.f32.mrb[0].mxu0
        %612 = vmatprep.mubr.bf16.mxu0 0
        %613 = vmatmul.mubr.bf16.gmra.mrb[0].mxu0 %v451
        %v614 = vpop.f32.mrb[0].mxu0
        %v615 = vadd.f32 0.0, %v614
        %v616 = vpop.f32.mrb[0].mxu0
        %v617 = vpop.f32.mrb[0].mxu0
        %v618 = vadd.f32 0.0, %v617
        %v619 = vpop.f32.mrb[0].mxu0
        %620 = vmatprep.mubr.bf16.mxu0 0
        %621 = vmatmul.mubr.bf16.gmra.mrb[0].mxu0 %v452
        %v622 = vpop.f32.mrb[0].mxu0
        %v623 = vadd.f32 0.0, %v622
        %v624 = vpop.f32.mrb[0].mxu0
        %v625 = vpop.f32.mrb[0].mxu0
        %v626 = vadd.f32 0.0, %v625
        %v627 = vpop.f32.mrb[0].mxu0
        %628 = vmatprep.mubr.bf16.mxu0 0
        %629 = vmatmul.mubr.bf16.gmra.mrb[0].mxu0 %v453
        %v630 = vpop.f32.mrb[0].mxu0
        %v631 = vadd.f32 0.0, %v630
        %v632 = vpop.f32.mrb[0].mxu0
        %v633 = vpop.f32.mrb[0].mxu0
        %v634 = vadd.f32 0.0, %v633
        %v635 = vpop.f32.mrb[0].mxu0
        %636 = vmatprep.mubr.bf16.mxu0 0
        %637 = vmatmul.mubr.bf16.gmra.mrb[0].mxu0 %v454
        %v638 = vpop.f32.mrb[0].mxu0
        %v639 = vadd.f32 0.0, %v638
        %v640 = vpop.f32.mrb[0].mxu0
        %v641 = vpop.f32.mrb[0].mxu0
        %v642 = vadd.f32 0.0, %v641
        %v643 = vpop.f32.mrb[0].mxu0
        %644 = vmatprep.mubr.bf16.mxu0 0
        %645 = vmatmul.mubr.bf16.gmra.mrb[0].mxu0 %v455
        %v646 = vpop.f32.mrb[0].mxu0
        %v647 = vadd.f32 0.0, %v646
        %v648 = vpop.f32.mrb[0].mxu0
        %v649 = vpop.f32.mrb[0].mxu0
        %v650 = vadd.f32 0.0, %v649
        %v651 = vpop.f32.mrb[0].mxu0
        %652 = vmatprep.mubr.bf16.mxu0 0
        %653 = vmatmul.mubr.bf16.gmra.mrb[0].mxu0 %v456
        %v654 = vpop.f32.mrb[0].mxu0
        %v655 = vadd.f32 0.0, %v654
        %v656 = vpop.f32.mrb[0].mxu0
        %v657 = vpop.f32.mrb[0].mxu0
        %v658 = vadd.f32 0.0, %v657
        %v659 = vpop.f32.mrb[0].mxu0
        %660 = vmatprep.mubr.bf16.mxu0 0
        %661 = vmatmul.mubr.bf16.gmra.mrb[0].mxu0 %v457
        %v662 = vpop.f32.mrb[0].mxu0
        %v663 = vadd.f32 0.0, %v662
        %v664 = vpop.f32.mrb[0].mxu0
        %v665 = vpop.f32.mrb[0].mxu0
        %v666 = vadd.f32 0.0, %v665
        %v667 = vpop.f32.mrb[0].mxu0
        %668 = vmatprep.mubr.bf16.mxu0 0
        %669 = vmatmul.mubr.bf16.gmra.mrb[0].mxu0 %v458
        %v670 = vpop.f32.mrb[0].mxu0
        %v671 = vadd.f32 0.0, %v670
        %v672 = vpop.f32.mrb[0].mxu0
        %v673 = vpop.f32.mrb[0].mxu0
        %v674 = vadd.f32 0.0, %v673
        %v675 = vpop.f32.mrb[0].mxu0
        %676 = vmatprep.mubr.bf16.mxu0 0
        %677 = vmatmul.mubr.bf16.gmra.mrb[0].mxu0 %v459
        %v678 = vpop.f32.mrb[0].mxu0
        %v679 = vadd.f32 0.0, %v678
        %v680 = vpop.f32.mrb[0].mxu0
        %v681 = vpop.f32.mrb[0].mxu0
        %v682 = vadd.f32 0.0, %v681
        %v683 = vpop.f32.mrb[0].mxu0
        %684 = vdwg.mxu0
        %v685 = vadd.f32 %v348, %v559
        %v686 = vadd.f32 %v349, %v562
        %v687 = vadd.f32 %v350, %v567
        %v688 = vadd.f32 %v351, %v570
        %v689 = vadd.f32 %v352, %v575
        %v690 = vadd.f32 %v353, %v578
        %v691 = vadd.f32 %v354, %v583
        %v692 = vadd.f32 %v355, %v586
        %v693 = vadd.f32 %v356, %v591
        %v694 = vadd.f32 %v357, %v594
        %v695 = vadd.f32 %v358, %v599
        %v696 = vadd.f32 %v359, %v602
        %v697 = vadd.f32 %v360, %v607
        %v698 = vadd.f32 %v361, %v610
        %v699 = vadd.f32 %v362, %v615
        %v700 = vadd.f32 %v363, %v618
        %v701 = vadd.f32 %v364, %v623
        %v702 = vadd.f32 %v365, %v626
        %v703 = vadd.f32 %v366, %v631
        %v704 = vadd.f32 %v367, %v634
        %v705 = vadd.f32 %v368, %v639
        %v706 = vadd.f32 %v369, %v642
        %v707 = vadd.f32 %v370, %v647
        %v708 = vadd.f32 %v371, %v650
        %v709 = vadd.f32 %v372, %v655
        %v710 = vadd.f32 %v373, %v658
        %v711 = vadd.f32 %v374, %v663
        %v712 = vadd.f32 %v375, %v666
        %v713 = vadd.f32 %v376, %v671
        %v714 = vadd.f32 %v377, %v674
        %v715 = vadd.f32 %v378, %v679
        %v716 = vadd.f32 %v379, %v682
        %717 = vst [vmem:[%s222] sm:$0xff] %v685
        %718 = vst [vmem:[%s222 + $0x8] sm:$0xff] %v686
        %719 = vst [vmem:[%s222 + $0x10] sm:$0xff] %v687
        %720 = vst [vmem:[%s222 + $0x18] sm:$0xff] %v688
        %721 = vst [vmem:[%s222 + $0x20] sm:$0xff] %v689
        %722 = vst [vmem:[%s222 + $0x28] sm:$0xff] %v690
        %723 = vst [vmem:[%s222 + $0x30] sm:$0xff] %v691
        %724 = vst [vmem:[%s222 + $0x38] sm:$0xff] %v692
        %725 = vst [vmem:[%s222 + $0x40] sm:$0xff] %v693
        %726 = vst [vmem:[%s222 + $0x48] sm:$0xff] %v694
        %727 = vst [vmem:[%s222 + $0x50] sm:$0xff] %v695
        %728 = vst [vmem:[%s222 + $0x58] sm:$0xff] %v696
        %729 = vst [vmem:[%s222 + $0x60] sm:$0xff] %v697
        %730 = vst [vmem:[%s222 + $0x68] sm:$0xff] %v698
        %731 = vst [vmem:[%s222 + $0x70] sm:$0xff] %v699
        %732 = vst [vmem:[%s222 + $0x78] sm:$0xff] %v700
        %733 = vst [vmem:[%s222 + $0x80] sm:$0xff] %v701
        %734 = vst [vmem:[%s222 + $0x88] sm:$0xff] %v702
        %735 = vst [vmem:[%s222 + $0x90] sm:$0xff] %v703
        %736 = vst [vmem:[%s222 + $0x98] sm:$0xff] %v704
        %737 = vst [vmem:[%s222 + $0xa0] sm:$0xff] %v705
        %738 = vst [vmem:[%s222 + $0xa8] sm:$0xff] %v706
        %739 = vst [vmem:[%s222 + $0xb0] sm:$0xff] %v707
        %740 = vst [vmem:[%s222 + $0xb8] sm:$0xff] %v708
        %741 = vst [vmem:[%s222 + $0xc0] sm:$0xff] %v709
        %742 = vst [vmem:[%s222 + $0xc8] sm:$0xff] %v710
        %743 = vst [vmem:[%s222 + $0xd0] sm:$0xff] %v711
        %744 = vst [vmem:[%s222 + $0xd8] sm:$0xff] %v712
        %745 = vst [vmem:[%s222 + $0xe0] sm:$0xff] %v713
        %746 = vst [vmem:[%s222 + $0xe8] sm:$0xff] %v714
        %747 = vst [vmem:[%s222 + $0xf0] sm:$0xff] %v715
        %748 = vst [vmem:[%s222 + $0xf8] sm:$0xff] %v716
        %s749 = scalar_lea.vmem %s245, 64
        %v750 = vld [vmem:[%s749] sm:$0xf]
        %v751 = vld [vmem:[%s749 + $0x4] sm:$0xf]
        %v752 = vld [vmem:[%s749 + $0x8] sm:$0xf]
        %v753 = vld [vmem:[%s749 + $0xc] sm:$0xf]
        %v754 = vld [vmem:[%s749 + $0x10] sm:$0xf]
        %v755 = vld [vmem:[%s749 + $0x14] sm:$0xf]
        %v756 = vld [vmem:[%s749 + $0x18] sm:$0xf]
        %v757 = vld [vmem:[%s749 + $0x1c] sm:$0xf]
        %v758 = vld [vmem:[%s749 + $0x20] sm:$0xf]
        %v759 = vld [vmem:[%s749 + $0x24] sm:$0xf]
        %v760 = vld [vmem:[%s749 + $0x28] sm:$0xf]
        %v761 = vld [vmem:[%s749 + $0x2c] sm:$0xf]
        %v762 = vld [vmem:[%s749 + $0x30] sm:$0xf]
        %v763 = vld [vmem:[%s749 + $0x34] sm:$0xf]
        %v764 = vld [vmem:[%s749 + $0x38] sm:$0xf]
        %v765 = vld [vmem:[%s749 + $0x3c] sm:$0xf]
        %v766 = vld [vmem:[%s222] sm:$0xff]
        %v767 = vld [vmem:[%s222 + $0x8] sm:$0xff]
        %v768 = vld [vmem:[%s222 + $0x10] sm:$0xff]
        %v769 = vld [vmem:[%s222 + $0x18] sm:$0xff]
        %v770 = vld [vmem:[%s222 + $0x20] sm:$0xff]
        %v771 = vld [vmem:[%s222 + $0x28] sm:$0xff]
        %v772 = vld [vmem:[%s222 + $0x30] sm:$0xff]
        %v773 = vld [vmem:[%s222 + $0x38] sm:$0xff]
        %v774 = vld [vmem:[%s222 + $0x40] sm:$0xff]
        %v775 = vld [vmem:[%s222 + $0x48] sm:$0xff]
        %v776 = vld [vmem:[%s222 + $0x50] sm:$0xff]
        %v777 = vld [vmem:[%s222 + $0x58] sm:$0xff]
        %v778 = vld [vmem:[%s222 + $0x60] sm:$0xff]
        %v779 = vld [vmem:[%s222 + $0x68] sm:$0xff]
        %v780 = vld [vmem:[%s222 + $0x70] sm:$0xff]
        %v781 = vld [vmem:[%s222 + $0x78] sm:$0xff]
        %v782 = vld [vmem:[%s222 + $0x80] sm:$0xff]
        %v783 = vld [vmem:[%s222 + $0x88] sm:$0xff]
        %v784 = vld [vmem:[%s222 + $0x90] sm:$0xff]
        %v785 = vld [vmem:[%s222 + $0x98] sm:$0xff]
        %v786 = vld [vmem:[%s222 + $0xa0] sm:$0xff]
        %v787 = vld [vmem:[%s222 + $0xa8] sm:$0xff]
        %v788 = vld [vmem:[%s222 + $0xb0] sm:$0xff]
        %v789 = vld [vmem:[%s222 + $0xb8] sm:$0xff]
        %v790 = vld [vmem:[%s222 + $0xc0] sm:$0xff]
        %v791 = vld [vmem:[%s222 + $0xc8] sm:$0xff]
        %v792 = vld [vmem:[%s222 + $0xd0] sm:$0xff]
        %v793 = vld [vmem:[%s222 + $0xd8] sm:$0xff]
        %v794 = vld [vmem:[%s222 + $0xe0] sm:$0xff]
        %v795 = vld [vmem:[%s222 + $0xe8] sm:$0xff]
        %v796 = vld [vmem:[%s222 + $0xf0] sm:$0xff]
        %v797 = vld [vmem:[%s222 + $0xf8] sm:$0xff]
        %vm814 = vcmask 1042432
        %vm815 = vcmask 1046532
        %vm816 = vmor %vm814, %vm815
        %v817 = vrot.slane %v284, 5
        %v818 = vrot.slane %v817, 4
        %v819 = vrot.slane %v285, 5
        %v820 = vsel %vm816, %v818, %v819
        %v821 = vrot.slane %v819, 4
        %v822 = vrot.slane %v286, 5
        %v823 = vsel %vm816, %v821, %v822
        %v824 = vrot.slane %v287, 5
        %v825 = vrot.slane %v824, 4
        %v826 = vrot.slane %v288, 5
        %v827 = vsel %vm816, %v825, %v826
        %v828 = vrot.slane %v826, 4
        %v829 = vrot.slane %v289, 5
        %v830 = vsel %vm816, %v828, %v829
        %v831 = vrot.slane %v290, 5
        %v832 = vrot.slane %v831, 4
        %v833 = vrot.slane %v291, 5
        %v834 = vsel %vm816, %v832, %v833
        %v835 = vrot.slane %v833, 4
        %v836 = vrot.slane %v292, 5
        %v837 = vsel %vm816, %v835, %v836
        %v838 = vrot.slane %v293, 5
        %v839 = vrot.slane %v838, 4
        %v840 = vrot.slane %v294, 5
        %v841 = vsel %vm816, %v839, %v840
        %v842 = vrot.slane %v840, 4
        %v843 = vrot.slane %v295, 5
        %v844 = vsel %vm816, %v842, %v843
        %v845 = vrot.slane %v296, 5
        %v846 = vrot.slane %v845, 4
        %v847 = vrot.slane %v297, 5
        %v848 = vsel %vm816, %v846, %v847
        %v849 = vrot.slane %v847, 4
        %v850 = vrot.slane %v298, 5
        %v851 = vsel %vm816, %v849, %v850
        %v852 = vrot.slane %v299, 5
        %v853 = vrot.slane %v852, 4
        %v854 = vrot.slane %v300, 5
        %v855 = vsel %vm816, %v853, %v854
        %v856 = vrot.slane %v854, 4
        %v857 = vrot.slane %v301, 5
        %v858 = vsel %vm816, %v856, %v857
        %v859 = vrot.slane %v302, 5
        %v860 = vrot.slane %v859, 4
        %v861 = vrot.slane %v303, 5
        %v862 = vsel %vm816, %v860, %v861
        %v863 = vrot.slane %v861, 4
        %v864 = vrot.slane %v304, 5
        %v865 = vsel %vm816, %v863, %v864
        %v866 = vrot.slane %v305, 5
        %v867 = vrot.slane %v866, 4
        %v868 = vrot.slane %v306, 5
        %v869 = vsel %vm816, %v867, %v868
        %v870 = vrot.slane %v868, 4
        %v871 = vrot.slane %v307, 5
        %v872 = vsel %vm816, %v870, %v871
        %v873 = vrot.slane %v308, 5
        %v874 = vrot.slane %v873, 4
        %v875 = vrot.slane %v309, 5
        %v876 = vsel %vm816, %v874, %v875
        %v877 = vrot.slane %v875, 4
        %v878 = vrot.slane %v310, 5
        %v879 = vsel %vm816, %v877, %v878
        %v880 = vrot.slane %v311, 5
        %v881 = vrot.slane %v880, 4
        %v882 = vrot.slane %v312, 5
        %v883 = vsel %vm816, %v881, %v882
        %v884 = vrot.slane %v882, 4
        %v885 = vrot.slane %v313, 5
        %v886 = vsel %vm816, %v884, %v885
        %v887 = vrot.slane %v314, 5
        %v888 = vrot.slane %v887, 4
        %v889 = vrot.slane %v315, 5
        %v890 = vsel %vm816, %v888, %v889
        %v891 = vrot.slane %v889, 4
        %v892 = vrot.slane %v316, 5
        %v893 = vsel %vm816, %v891, %v892
        %v894 = vrot.slane %v317, 5
        %v895 = vrot.slane %v894, 4
        %v896 = vrot.slane %v318, 5
        %v897 = vsel %vm816, %v895, %v896
        %v898 = vrot.slane %v896, 4
        %v899 = vrot.slane %v319, 5
        %v900 = vsel %vm816, %v898, %v899
        %v901 = vrot.slane %v320, 5
        %v902 = vrot.slane %v901, 4
        %v903 = vrot.slane %v321, 5
        %v904 = vsel %vm816, %v902, %v903
        %v905 = vrot.slane %v903, 4
        %v906 = vrot.slane %v322, 5
        %v907 = vsel %vm816, %v905, %v906
        %v908 = vrot.slane %v323, 5
        %v909 = vrot.slane %v908, 4
        %v910 = vrot.slane %v324, 5
        %v911 = vsel %vm816, %v909, %v910
        %v912 = vrot.slane %v910, 4
        %v913 = vrot.slane %v325, 5
        %v914 = vsel %vm816, %v912, %v913
        %v915 = vrot.slane %v326, 5
        %v916 = vrot.slane %v915, 4
        %v917 = vrot.slane %v327, 5
        %v918 = vsel %vm816, %v916, %v917
        %v919 = vrot.slane %v917, 4
        %v920 = vrot.slane %v328, 5
        %v921 = vsel %vm816, %v919, %v920
        %v922 = vrot.slane %v329, 5
        %v923 = vrot.slane %v922, 4
        %v924 = vrot.slane %v330, 5
        %v925 = vsel %vm816, %v923, %v924
        %v926 = vrot.slane %v924, 4
        %v927 = vrot.slane %v331, 5
        %v928 = vsel %vm816, %v926, %v927
        %v929 = vunpack.c.l.b16 %v820
        %v930 = vunpack.c.l.b16 %v823
        %v931 = vunpack.c.l.b16 %v827
        %v932 = vunpack.c.l.b16 %v830
        %v933 = vunpack.c.l.b16 %v834
        %v934 = vunpack.c.l.b16 %v837
        %v935 = vunpack.c.l.b16 %v841
        %v936 = vunpack.c.l.b16 %v844
        %v937 = vunpack.c.l.b16 %v848
        %v938 = vunpack.c.l.b16 %v851
        %v939 = vunpack.c.l.b16 %v855
        %v940 = vunpack.c.l.b16 %v858
        %v941 = vunpack.c.l.b16 %v862
        %v942 = vunpack.c.l.b16 %v865
        %v943 = vunpack.c.l.b16 %v869
        %v944 = vunpack.c.l.b16 %v872
        %v945 = vunpack.c.l.b16 %v876
        %v946 = vunpack.c.l.b16 %v879
        %v947 = vunpack.c.l.b16 %v883
        %v948 = vunpack.c.l.b16 %v886
        %v949 = vunpack.c.l.b16 %v890
        %v950 = vunpack.c.l.b16 %v893
        %v951 = vunpack.c.l.b16 %v897
        %v952 = vunpack.c.l.b16 %v900
        %v953 = vunpack.c.l.b16 %v904
        %v954 = vunpack.c.l.b16 %v907
        %v955 = vunpack.c.l.b16 %v911
        %v956 = vunpack.c.l.b16 %v914
        %v957 = vunpack.c.l.b16 %v918
        %v958 = vunpack.c.l.b16 %v921
        %v959 = vunpack.c.l.b16 %v925
        %v960 = vunpack.c.l.b16 %v928
        %v961 = vpack.c.b16 %v930, %v929
        %v962 = vpack.c.b16 %v932, %v931
        %v963 = vpack.c.b16 %v934, %v933
        %v964 = vpack.c.b16 %v936, %v935
        %v965 = vpack.c.b16 %v938, %v937
        %v966 = vpack.c.b16 %v940, %v939
        %v967 = vpack.c.b16 %v942, %v941
        %v968 = vpack.c.b16 %v944, %v943
        %v969 = vpack.c.b16 %v946, %v945
        %v970 = vpack.c.b16 %v948, %v947
        %v971 = vpack.c.b16 %v950, %v949
        %v972 = vpack.c.b16 %v952, %v951
        %v973 = vpack.c.b16 %v954, %v953
        %v974 = vpack.c.b16 %v956, %v955
        %v975 = vpack.c.b16 %v958, %v957
        %v976 = vpack.c.b16 %v960, %v959
        %v1009 = vunpack.c.l.b16 %v750
        %v1010 = vunpack.c.l.b16 %v751
        %v1011 = vunpack.c.l.b16 %v752
        %v1012 = vunpack.c.l.b16 %v753
        %v1013 = vunpack.c.l.b16 %v754
        %v1014 = vunpack.c.l.b16 %v755
        %v1015 = vunpack.c.l.b16 %v756
        %v1016 = vunpack.c.l.b16 %v757
        %v1017 = vunpack.c.l.b16 %v758
        %v1018 = vunpack.c.l.b16 %v759
        %v1019 = vunpack.c.l.b16 %v760
        %v1020 = vunpack.c.l.b16 %v761
        %v1021 = vunpack.c.l.b16 %v762
        %v1022 = vunpack.c.l.b16 %v763
        %v1023 = vunpack.c.l.b16 %v764
        %v1024 = vunpack.c.l.b16 %v765
        %v1025 = vpack.c.b16 %v1010, %v1009
        %v1026 = vpack.c.b16 %v1012, %v1011
        %v1027 = vpack.c.b16 %v1014, %v1013
        %v1028 = vpack.c.b16 %v1016, %v1015
        %v1029 = vpack.c.b16 %v1018, %v1017
        %v1030 = vpack.c.b16 %v1020, %v1019
        %v1031 = vpack.c.b16 %v1022, %v1021
        %v1032 = vpack.c.b16 %v1024, %v1023
        %1041 = vmatprep.subr.bf16.mxu0 0
        %1042 = vmatpush1.bf16.msra.mxu0 %v1025
        %1043 = vmatprep.subr.bf16.mxu0 0
        %1044 = vmatpush1.bf16.msra.mxu0 %v1026
        %1045 = vmatprep.subr.bf16.mxu0 0
        %1046 = vmatpush1.bf16.msra.mxu0 %v1027
        %1047 = vmatprep.subr.bf16.mxu0 0
        %1048 = vmatpush1.bf16.msra.mxu0 %v1028
        %1049 = vmatprep.subr.bf16.mxu0 0
        %1050 = vmatpush1.bf16.msra.mxu0 %v1029
        %1051 = vmatprep.subr.bf16.mxu0 0
        %1052 = vmatpush1.bf16.msra.mxu0 %v1030
        %1053 = vmatprep.subr.bf16.mxu0 0
        %1054 = vmatpush1.bf16.msra.mxu0 %v1031
        %1055 = vmatprep.subr.bf16.mxu0 0
        %1056 = vmatpush1.bf16.msra.mxu0 %v1032
        %1057 = vmatprep.subr.bf16.mxu0 0
        %1058 = vmatpush1.bf16.msra.mxu0 0
        %1059 = vmatprep.subr.bf16.mxu0 0
        %1060 = vmatpush1.bf16.msra.mxu0 0
        %1061 = vmatprep.subr.bf16.mxu0 0
        %1062 = vmatpush1.bf16.msra.mxu0 0
        %1063 = vmatprep.subr.bf16.mxu0 0
        %1064 = vmatpush1.bf16.msra.mxu0 0
        %1065 = vmatprep.subr.bf16.mxu0 0
        %1066 = vmatpush1.bf16.msra.mxu0 0
        %1067 = vmatprep.subr.bf16.mxu0 0
        %1068 = vmatpush1.bf16.msra.mxu0 0
        %1069 = vmatprep.subr.bf16.mxu0 0
        %1070 = vmatpush1.bf16.msra.mxu0 0
        %1071 = vmatprep.subr.bf16.mxu0 0
        %1072 = vmatpush1.bf16.msra.mxu0 0
        %1073 = vmatprep.mubr.bf16.mxu0 0
        %1074 = vmatmul.mubr.bf16.gmra.mrb[0].mxu0 %v961
        %v1075 = vpop.f32.mrb[0].mxu0
        %v1076 = vadd.f32 0.0, %v1075
        %v1077 = vpop.f32.mrb[0].mxu0
        %v1078 = vpop.f32.mrb[0].mxu0
        %v1079 = vadd.f32 0.0, %v1078
        %v1080 = vpop.f32.mrb[0].mxu0
        %1081 = vmatprep.mubr.bf16.mxu0 0
        %1082 = vmatmul.mubr.bf16.gmra.mrb[0].mxu0 %v962
        %v1083 = vpop.f32.mrb[0].mxu0
        %v1084 = vadd.f32 0.0, %v1083
        %v1085 = vpop.f32.mrb[0].mxu0
        %v1086 = vpop.f32.mrb[0].mxu0
        %v1087 = vadd.f32 0.0, %v1086
        %v1088 = vpop.f32.mrb[0].mxu0
        %1089 = vmatprep.mubr.bf16.mxu0 0
        %1090 = vmatmul.mubr.bf16.gmra.mrb[0].mxu0 %v963
        %v1091 = vpop.f32.mrb[0].mxu0
        %v1092 = vadd.f32 0.0, %v1091
        %v1093 = vpop.f32.mrb[0].mxu0
        %v1094 = vpop.f32.mrb[0].mxu0
        %v1095 = vadd.f32 0.0, %v1094
        %v1096 = vpop.f32.mrb[0].mxu0
        %1097 = vmatprep.mubr.bf16.mxu0 0
        %1098 = vmatmul.mubr.bf16.gmra.mrb[0].mxu0 %v964
        %v1099 = vpop.f32.mrb[0].mxu0
        %v1100 = vadd.f32 0.0, %v1099
        %v1101 = vpop.f32.mrb[0].mxu0
        %v1102 = vpop.f32.mrb[0].mxu0
        %v1103 = vadd.f32 0.0, %v1102
        %v1104 = vpop.f32.mrb[0].mxu0
        %1105 = vmatprep.mubr.bf16.mxu0 0
        %1106 = vmatmul.mubr.bf16.gmra.mrb[0].mxu0 %v965
        %v1107 = vpop.f32.mrb[0].mxu0
        %v1108 = vadd.f32 0.0, %v1107
        %v1109 = vpop.f32.mrb[0].mxu0
        %v1110 = vpop.f32.mrb[0].mxu0
        %v1111 = vadd.f32 0.0, %v1110
        %v1112 = vpop.f32.mrb[0].mxu0
        %1113 = vmatprep.mubr.bf16.mxu0 0
        %1114 = vmatmul.mubr.bf16.gmra.mrb[0].mxu0 %v966
        %v1115 = vpop.f32.mrb[0].mxu0
        %v1116 = vadd.f32 0.0, %v1115
        %v1117 = vpop.f32.mrb[0].mxu0
        %v1118 = vpop.f32.mrb[0].mxu0
        %v1119 = vadd.f32 0.0, %v1118
        %v1120 = vpop.f32.mrb[0].mxu0
        %1121 = vmatprep.mubr.bf16.mxu0 0
        %1122 = vmatmul.mubr.bf16.gmra.mrb[0].mxu0 %v967
        %v1123 = vpop.f32.mrb[0].mxu0
        %v1124 = vadd.f32 0.0, %v1123
        %v1125 = vpop.f32.mrb[0].mxu0
        %v1126 = vpop.f32.mrb[0].mxu0
        %v1127 = vadd.f32 0.0, %v1126
        %v1128 = vpop.f32.mrb[0].mxu0
        %1129 = vmatprep.mubr.bf16.mxu0 0
        %1130 = vmatmul.mubr.bf16.gmra.mrb[0].mxu0 %v968
        %v1131 = vpop.f32.mrb[0].mxu0
        %v1132 = vadd.f32 0.0, %v1131
        %v1133 = vpop.f32.mrb[0].mxu0
        %v1134 = vpop.f32.mrb[0].mxu0
        %v1135 = vadd.f32 0.0, %v1134
        %v1136 = vpop.f32.mrb[0].mxu0
        %1137 = vmatprep.mubr.bf16.mxu0 0
        %1138 = vmatmul.mubr.bf16.gmra.mrb[0].mxu0 %v969
        %v1139 = vpop.f32.mrb[0].mxu0
        %v1140 = vadd.f32 0.0, %v1139
        %v1141 = vpop.f32.mrb[0].mxu0
        %v1142 = vpop.f32.mrb[0].mxu0
        %v1143 = vadd.f32 0.0, %v1142
        %v1144 = vpop.f32.mrb[0].mxu0
        %1145 = vmatprep.mubr.bf16.mxu0 0
        %1146 = vmatmul.mubr.bf16.gmra.mrb[0].mxu0 %v970
        %v1147 = vpop.f32.mrb[0].mxu0
        %v1148 = vadd.f32 0.0, %v1147
        %v1149 = vpop.f32.mrb[0].mxu0
        %v1150 = vpop.f32.mrb[0].mxu0
        %v1151 = vadd.f32 0.0, %v1150
        %v1152 = vpop.f32.mrb[0].mxu0
        %1153 = vmatprep.mubr.bf16.mxu0 0
        %1154 = vmatmul.mubr.bf16.gmra.mrb[0].mxu0 %v971
        %v1155 = vpop.f32.mrb[0].mxu0
        %v1156 = vadd.f32 0.0, %v1155
        %v1157 = vpop.f32.mrb[0].mxu0
        %v1158 = vpop.f32.mrb[0].mxu0
        %v1159 = vadd.f32 0.0, %v1158
        %v1160 = vpop.f32.mrb[0].mxu0
        %1161 = vmatprep.mubr.bf16.mxu0 0
        %1162 = vmatmul.mubr.bf16.gmra.mrb[0].mxu0 %v972
        %v1163 = vpop.f32.mrb[0].mxu0
        %v1164 = vadd.f32 0.0, %v1163
        %v1165 = vpop.f32.mrb[0].mxu0
        %v1166 = vpop.f32.mrb[0].mxu0
        %v1167 = vadd.f32 0.0, %v1166
        %v1168 = vpop.f32.mrb[0].mxu0
        %1169 = vmatprep.mubr.bf16.mxu0 0
        %1170 = vmatmul.mubr.bf16.gmra.mrb[0].mxu0 %v973
        %v1171 = vpop.f32.mrb[0].mxu0
        %v1172 = vadd.f32 0.0, %v1171
        %v1173 = vpop.f32.mrb[0].mxu0
        %v1174 = vpop.f32.mrb[0].mxu0
        %v1175 = vadd.f32 0.0, %v1174
        %v1176 = vpop.f32.mrb[0].mxu0
        %1177 = vmatprep.mubr.bf16.mxu0 0
        %1178 = vmatmul.mubr.bf16.gmra.mrb[0].mxu0 %v974
        %v1179 = vpop.f32.mrb[0].mxu0
        %v1180 = vadd.f32 0.0, %v1179
        %v1181 = vpop.f32.mrb[0].mxu0
        %v1182 = vpop.f32.mrb[0].mxu0
        %v1183 = vadd.f32 0.0, %v1182
        %v1184 = vpop.f32.mrb[0].mxu0
        %1185 = vmatprep.mubr.bf16.mxu0 0
        %1186 = vmatmul.mubr.bf16.gmra.mrb[0].mxu0 %v975
        %v1187 = vpop.f32.mrb[0].mxu0
        %v1188 = vadd.f32 0.0, %v1187
        %v1189 = vpop.f32.mrb[0].mxu0
        %v1190 = vpop.f32.mrb[0].mxu0
        %v1191 = vadd.f32 0.0, %v1190
        %v1192 = vpop.f32.mrb[0].mxu0
        %1193 = vmatprep.mubr.bf16.mxu0 0
        %1194 = vmatmul.mubr.bf16.gmra.mrb[0].mxu0 %v976
        %v1195 = vpop.f32.mrb[0].mxu0
        %v1196 = vadd.f32 0.0, %v1195
        %v1197 = vpop.f32.mrb[0].mxu0
        %v1198 = vpop.f32.mrb[0].mxu0
        %v1199 = vadd.f32 0.0, %v1198
        %v1200 = vpop.f32.mrb[0].mxu0
        %1201 = vdwg.mxu0
        %v1202 = vadd.f32 %v766, %v1076
        %v1203 = vadd.f32 %v767, %v1079
        %v1204 = vadd.f32 %v768, %v1084
        %v1205 = vadd.f32 %v769, %v1087
        %v1206 = vadd.f32 %v770, %v1092
        %v1207 = vadd.f32 %v771, %v1095
        %v1208 = vadd.f32 %v772, %v1100
        %v1209 = vadd.f32 %v773, %v1103
        %v1210 = vadd.f32 %v774, %v1108
        %v1211 = vadd.f32 %v775, %v1111
        %v1212 = vadd.f32 %v776, %v1116
        %v1213 = vadd.f32 %v777, %v1119
        %v1214 = vadd.f32 %v778, %v1124
        %v1215 = vadd.f32 %v779, %v1127
        %v1216 = vadd.f32 %v780, %v1132
        %v1217 = vadd.f32 %v781, %v1135
        %v1218 = vadd.f32 %v782, %v1140
        %v1219 = vadd.f32 %v783, %v1143
        %v1220 = vadd.f32 %v784, %v1148
        %v1221 = vadd.f32 %v785, %v1151
        %v1222 = vadd.f32 %v786, %v1156
        %v1223 = vadd.f32 %v787, %v1159
        %v1224 = vadd.f32 %v788, %v1164
        %v1225 = vadd.f32 %v789, %v1167
        %v1226 = vadd.f32 %v790, %v1172
        %v1227 = vadd.f32 %v791, %v1175
        %v1228 = vadd.f32 %v792, %v1180
        %v1229 = vadd.f32 %v793, %v1183
        %v1230 = vadd.f32 %v794, %v1188
        %v1231 = vadd.f32 %v795, %v1191
        %v1232 = vadd.f32 %v796, %v1196
        %v1233 = vadd.f32 %v797, %v1199
        %1234 = vst [vmem:[%s222] sm:$0xff] %v1202
        %1235 = vst [vmem:[%s222 + $0x8] sm:$0xff] %v1203
        %1236 = vst [vmem:[%s222 + $0x10] sm:$0xff] %v1204
        %1237 = vst [vmem:[%s222 + $0x18] sm:$0xff] %v1205
        %1238 = vst [vmem:[%s222 + $0x20] sm:$0xff] %v1206
        %1239 = vst [vmem:[%s222 + $0x28] sm:$0xff] %v1207
        %1240 = vst [vmem:[%s222 + $0x30] sm:$0xff] %v1208
        %1241 = vst [vmem:[%s222 + $0x38] sm:$0xff] %v1209
        %1242 = vst [vmem:[%s222 + $0x40] sm:$0xff] %v1210
        %1243 = vst [vmem:[%s222 + $0x48] sm:$0xff] %v1211
        %1244 = vst [vmem:[%s222 + $0x50] sm:$0xff] %v1212
        %1245 = vst [vmem:[%s222 + $0x58] sm:$0xff] %v1213
        %1246 = vst [vmem:[%s222 + $0x60] sm:$0xff] %v1214
        %1247 = vst [vmem:[%s222 + $0x68] sm:$0xff] %v1215
        %1248 = vst [vmem:[%s222 + $0x70] sm:$0xff] %v1216
        %1249 = vst [vmem:[%s222 + $0x78] sm:$0xff] %v1217
        %1250 = vst [vmem:[%s222 + $0x80] sm:$0xff] %v1218
        %1251 = vst [vmem:[%s222 + $0x88] sm:$0xff] %v1219
        %1252 = vst [vmem:[%s222 + $0x90] sm:$0xff] %v1220
        %1253 = vst [vmem:[%s222 + $0x98] sm:$0xff] %v1221
        %1254 = vst [vmem:[%s222 + $0xa0] sm:$0xff] %v1222
        %1255 = vst [vmem:[%s222 + $0xa8] sm:$0xff] %v1223
        %1256 = vst [vmem:[%s222 + $0xb0] sm:$0xff] %v1224
        %1257 = vst [vmem:[%s222 + $0xb8] sm:$0xff] %v1225
        %1258 = vst [vmem:[%s222 + $0xc0] sm:$0xff] %v1226
        %1259 = vst [vmem:[%s222 + $0xc8] sm:$0xff] %v1227
        %1260 = vst [vmem:[%s222 + $0xd0] sm:$0xff] %v1228
        %1261 = vst [vmem:[%s222 + $0xd8] sm:$0xff] %v1229
        %1262 = vst [vmem:[%s222 + $0xe0] sm:$0xff] %v1230
        %1263 = vst [vmem:[%s222 + $0xe8] sm:$0xff] %v1231
        %1264 = vst [vmem:[%s222 + $0xf0] sm:$0xff] %v1232
        %1265 = vst [vmem:[%s222 + $0xf8] sm:$0xff] %v1233
        %s1266 = scalar_lea.vmem %s245, 128
        %v1267 = vld [vmem:[%s1266] sm:$0xf]
        %v1268 = vld [vmem:[%s1266 + $0x4] sm:$0xf]
        %v1269 = vld [vmem:[%s1266 + $0x8] sm:$0xf]
        %v1270 = vld [vmem:[%s1266 + $0xc] sm:$0xf]
        %v1271 = vld [vmem:[%s1266 + $0x10] sm:$0xf]
        %v1272 = vld [vmem:[%s1266 + $0x14] sm:$0xf]
        %v1273 = vld [vmem:[%s1266 + $0x18] sm:$0xf]
        %v1274 = vld [vmem:[%s1266 + $0x1c] sm:$0xf]
        %v1275 = vld [vmem:[%s1266 + $0x20] sm:$0xf]
        %v1276 = vld [vmem:[%s1266 + $0x24] sm:$0xf]
        %v1277 = vld [vmem:[%s1266 + $0x28] sm:$0xf]
        %v1278 = vld [vmem:[%s1266 + $0x2c] sm:$0xf]
        %v1279 = vld [vmem:[%s1266 + $0x30] sm:$0xf]
        %v1280 = vld [vmem:[%s1266 + $0x34] sm:$0xf]
        %v1281 = vld [vmem:[%s1266 + $0x38] sm:$0xf]
        %v1282 = vld [vmem:[%s1266 + $0x3c] sm:$0xf]
        %v1283 = vld [vmem:[%s222] sm:$0xff]
        %v1284 = vld [vmem:[%s222 + $0x8] sm:$0xff]
        %v1285 = vld [vmem:[%s222 + $0x10] sm:$0xff]
        %v1286 = vld [vmem:[%s222 + $0x18] sm:$0xff]
        %v1287 = vld [vmem:[%s222 + $0x20] sm:$0xff]
        %v1288 = vld [vmem:[%s222 + $0x28] sm:$0xff]
        %v1289 = vld [vmem:[%s222 + $0x30] sm:$0xff]
        %v1290 = vld [vmem:[%s222 + $0x38] sm:$0xff]
        %v1291 = vld [vmem:[%s222 + $0x40] sm:$0xff]
        %v1292 = vld [vmem:[%s222 + $0x48] sm:$0xff]
        %v1293 = vld [vmem:[%s222 + $0x50] sm:$0xff]
        %v1294 = vld [vmem:[%s222 + $0x58] sm:$0xff]
        %v1295 = vld [vmem:[%s222 + $0x60] sm:$0xff]
        %v1296 = vld [vmem:[%s222 + $0x68] sm:$0xff]
        %v1297 = vld [vmem:[%s222 + $0x70] sm:$0xff]
        %v1298 = vld [vmem:[%s222 + $0x78] sm:$0xff]
        %v1299 = vld [vmem:[%s222 + $0x80] sm:$0xff]
        %v1300 = vld [vmem:[%s222 + $0x88] sm:$0xff]
        %v1301 = vld [vmem:[%s222 + $0x90] sm:$0xff]
        %v1302 = vld [vmem:[%s222 + $0x98] sm:$0xff]
        %v1303 = vld [vmem:[%s222 + $0xa0] sm:$0xff]
        %v1304 = vld [vmem:[%s222 + $0xa8] sm:$0xff]
        %v1305 = vld [vmem:[%s222 + $0xb0] sm:$0xff]
        %v1306 = vld [vmem:[%s222 + $0xb8] sm:$0xff]
        %v1307 = vld [vmem:[%s222 + $0xc0] sm:$0xff]
        %v1308 = vld [vmem:[%s222 + $0xc8] sm:$0xff]
        %v1309 = vld [vmem:[%s222 + $0xd0] sm:$0xff]
        %v1310 = vld [vmem:[%s222 + $0xd8] sm:$0xff]
        %v1311 = vld [vmem:[%s222 + $0xe0] sm:$0xff]
        %v1312 = vld [vmem:[%s222 + $0xe8] sm:$0xff]
        %v1313 = vld [vmem:[%s222 + $0xf0] sm:$0xff]
        %v1314 = vld [vmem:[%s222 + $0xf8] sm:$0xff]
        %vm1315 = vcmask 1041408
        %vm1316 = vcmask 1045508
        %vm1317 = vmor %vm1315, %vm1316
        %v1318 = vrot.slane %v284, 6
        %v1319 = vrot.slane %v1318, 4
        %v1320 = vrot.slane %v285, 6
        %v1321 = vsel %vm1317, %v1319, %v1320
        %v1322 = vrot.slane %v1320, 4
        %v1323 = vrot.slane %v286, 6
        %v1324 = vsel %vm1317, %v1322, %v1323
        %v1325 = vrot.slane %v287, 6
        %v1326 = vrot.slane %v1325, 4
        %v1327 = vrot.slane %v288, 6
        %v1328 = vsel %vm1317, %v1326, %v1327
        %v1329 = vrot.slane %v1327, 4
        %v1330 = vrot.slane %v289, 6
        %v1331 = vsel %vm1317, %v1329, %v1330
        %v1332 = vrot.slane %v290, 6
        %v1333 = vrot.slane %v1332, 4
        %v1334 = vrot.slane %v291, 6
        %v1335 = vsel %vm1317, %v1333, %v1334
        %v1336 = vrot.slane %v1334, 4
        %v1337 = vrot.slane %v292, 6
        %v1338 = vsel %vm1317, %v1336, %v1337
        %v1339 = vrot.slane %v293, 6
        %v1340 = vrot.slane %v1339, 4
        %v1341 = vrot.slane %v294, 6
        %v1342 = vsel %vm1317, %v1340, %v1341
        %v1343 = vrot.slane %v1341, 4
        %v1344 = vrot.slane %v295, 6
        %v1345 = vsel %vm1317, %v1343, %v1344
        %v1346 = vrot.slane %v296, 6
        %v1347 = vrot.slane %v1346, 4
        %v1348 = vrot.slane %v297, 6
        %v1349 = vsel %vm1317, %v1347, %v1348
        %v1350 = vrot.slane %v1348, 4
        %v1351 = vrot.slane %v298, 6
        %v1352 = vsel %vm1317, %v1350, %v1351
        %v1353 = vrot.slane %v299, 6
        %v1354 = vrot.slane %v1353, 4
        %v1355 = vrot.slane %v300, 6
        %v1356 = vsel %vm1317, %v1354, %v1355
        %v1357 = vrot.slane %v1355, 4
        %v1358 = vrot.slane %v301, 6
        %v1359 = vsel %vm1317, %v1357, %v1358
        %v1360 = vrot.slane %v302, 6
        %v1361 = vrot.slane %v1360, 4
        %v1362 = vrot.slane %v303, 6
        %v1363 = vsel %vm1317, %v1361, %v1362
        %v1364 = vrot.slane %v1362, 4
        %v1365 = vrot.slane %v304, 6
        %v1366 = vsel %vm1317, %v1364, %v1365
        %v1367 = vrot.slane %v305, 6
        %v1368 = vrot.slane %v1367, 4
        %v1369 = vrot.slane %v306, 6
        %v1370 = vsel %vm1317, %v1368, %v1369
        %v1371 = vrot.slane %v1369, 4
        %v1372 = vrot.slane %v307, 6
        %v1373 = vsel %vm1317, %v1371, %v1372
        %v1374 = vrot.slane %v308, 6
        %v1375 = vrot.slane %v1374, 4
        %v1376 = vrot.slane %v309, 6
        %v1377 = vsel %vm1317, %v1375, %v1376
        %v1378 = vrot.slane %v1376, 4
        %v1379 = vrot.slane %v310, 6
        %v1380 = vsel %vm1317, %v1378, %v1379
        %v1381 = vrot.slane %v311, 6
        %v1382 = vrot.slane %v1381, 4
        %v1383 = vrot.slane %v312, 6
        %v1384 = vsel %vm1317, %v1382, %v1383
        %v1385 = vrot.slane %v1383, 4
        %v1386 = vrot.slane %v313, 6
        %v1387 = vsel %vm1317, %v1385, %v1386
        %v1388 = vrot.slane %v314, 6
        %v1389 = vrot.slane %v1388, 4
        %v1390 = vrot.slane %v315, 6
        %v1391 = vsel %vm1317, %v1389, %v1390
        %v1392 = vrot.slane %v1390, 4
        %v1393 = vrot.slane %v316, 6
        %v1394 = vsel %vm1317, %v1392, %v1393
        %v1395 = vrot.slane %v317, 6
        %v1396 = vrot.slane %v1395, 4
        %v1397 = vrot.slane %v318, 6
        %v1398 = vsel %vm1317, %v1396, %v1397
        %v1399 = vrot.slane %v1397, 4
        %v1400 = vrot.slane %v319, 6
        %v1401 = vsel %vm1317, %v1399, %v1400
        %v1402 = vrot.slane %v320, 6
        %v1403 = vrot.slane %v1402, 4
        %v1404 = vrot.slane %v321, 6
        %v1405 = vsel %vm1317, %v1403, %v1404
        %v1406 = vrot.slane %v1404, 4
        %v1407 = vrot.slane %v322, 6
        %v1408 = vsel %vm1317, %v1406, %v1407
        %v1409 = vrot.slane %v323, 6
        %v1410 = vrot.slane %v1409, 4
        %v1411 = vrot.slane %v324, 6
        %v1412 = vsel %vm1317, %v1410, %v1411
        %v1413 = vrot.slane %v1411, 4
        %v1414 = vrot.slane %v325, 6
        %v1415 = vsel %vm1317, %v1413, %v1414
        %v1416 = vrot.slane %v326, 6
        %v1417 = vrot.slane %v1416, 4
        %v1418 = vrot.slane %v327, 6
        %v1419 = vsel %vm1317, %v1417, %v1418
        %v1420 = vrot.slane %v1418, 4
        %v1421 = vrot.slane %v328, 6
        %v1422 = vsel %vm1317, %v1420, %v1421
        %v1423 = vrot.slane %v329, 6
        %v1424 = vrot.slane %v1423, 4
        %v1425 = vrot.slane %v330, 6
        %v1426 = vsel %vm1317, %v1424, %v1425
        %v1427 = vrot.slane %v1425, 4
        %v1428 = vrot.slane %v331, 6
        %v1429 = vsel %vm1317, %v1427, %v1428
        %v1430 = vunpack.c.l.b16 %v1321
        %v1431 = vunpack.c.l.b16 %v1324
        %v1432 = vunpack.c.l.b16 %v1328
        %v1433 = vunpack.c.l.b16 %v1331
        %v1434 = vunpack.c.l.b16 %v1335
        %v1435 = vunpack.c.l.b16 %v1338
        %v1436 = vunpack.c.l.b16 %v1342
        %v1437 = vunpack.c.l.b16 %v1345
        %v1438 = vunpack.c.l.b16 %v1349
        %v1439 = vunpack.c.l.b16 %v1352
        %v1440 = vunpack.c.l.b16 %v1356
        %v1441 = vunpack.c.l.b16 %v1359
        %v1442 = vunpack.c.l.b16 %v1363
        %v1443 = vunpack.c.l.b16 %v1366
        %v1444 = vunpack.c.l.b16 %v1370
        %v1445 = vunpack.c.l.b16 %v1373
        %v1446 = vunpack.c.l.b16 %v1377
        %v1447 = vunpack.c.l.b16 %v1380
        %v1448 = vunpack.c.l.b16 %v1384
        %v1449 = vunpack.c.l.b16 %v1387
        %v1450 = vunpack.c.l.b16 %v1391
        %v1451 = vunpack.c.l.b16 %v1394
        %v1452 = vunpack.c.l.b16 %v1398
        %v1453 = vunpack.c.l.b16 %v1401
        %v1454 = vunpack.c.l.b16 %v1405
        %v1455 = vunpack.c.l.b16 %v1408
        %v1456 = vunpack.c.l.b16 %v1412
        %v1457 = vunpack.c.l.b16 %v1415
        %v1458 = vunpack.c.l.b16 %v1419
        %v1459 = vunpack.c.l.b16 %v1422
        %v1460 = vunpack.c.l.b16 %v1426
        %v1461 = vunpack.c.l.b16 %v1429
        %v1462 = vpack.c.b16 %v1431, %v1430
        %v1463 = vpack.c.b16 %v1433, %v1432
        %v1464 = vpack.c.b16 %v1435, %v1434
        %v1465 = vpack.c.b16 %v1437, %v1436
        %v1466 = vpack.c.b16 %v1439, %v1438
        %v1467 = vpack.c.b16 %v1441, %v1440
        %v1468 = vpack.c.b16 %v1443, %v1442
        %v1469 = vpack.c.b16 %v1445, %v1444
        %v1470 = vpack.c.b16 %v1447, %v1446
        %v1471 = vpack.c.b16 %v1449, %v1448
        %v1472 = vpack.c.b16 %v1451, %v1450
        %v1473 = vpack.c.b16 %v1453, %v1452
        %v1474 = vpack.c.b16 %v1455, %v1454
        %v1475 = vpack.c.b16 %v1457, %v1456
        %v1476 = vpack.c.b16 %v1459, %v1458
        %v1477 = vpack.c.b16 %v1461, %v1460
        %v1510 = vunpack.c.l.b16 %v1267
        %v1511 = vunpack.c.l.b16 %v1268
        %v1512 = vunpack.c.l.b16 %v1269
        %v1513 = vunpack.c.l.b16 %v1270
        %v1514 = vunpack.c.l.b16 %v1271
        %v1515 = vunpack.c.l.b16 %v1272
        %v1516 = vunpack.c.l.b16 %v1273
        %v1517 = vunpack.c.l.b16 %v1274
        %v1518 = vunpack.c.l.b16 %v1275
        %v1519 = vunpack.c.l.b16 %v1276
        %v1520 = vunpack.c.l.b16 %v1277
        %v1521 = vunpack.c.l.b16 %v1278
        %v1522 = vunpack.c.l.b16 %v1279
        %v1523 = vunpack.c.l.b16 %v1280
        %v1524 = vunpack.c.l.b16 %v1281
        %v1525 = vunpack.c.l.b16 %v1282
        %v1526 = vpack.c.b16 %v1511, %v1510
        %v1527 = vpack.c.b16 %v1513, %v1512
        %v1528 = vpack.c.b16 %v1515, %v1514
        %v1529 = vpack.c.b16 %v1517, %v1516
        %v1530 = vpack.c.b16 %v1519, %v1518
        %v1531 = vpack.c.b16 %v1521, %v1520
        %v1532 = vpack.c.b16 %v1523, %v1522
        %v1533 = vpack.c.b16 %v1525, %v1524
        %1542 = vmatprep.subr.bf16.mxu0 0
        %1543 = vmatpush1.bf16.msra.mxu0 %v1526
        %1544 = vmatprep.subr.bf16.mxu0 0
        %1545 = vmatpush1.bf16.msra.mxu0 %v1527
        %1546 = vmatprep.subr.bf16.mxu0 0
        %1547 = vmatpush1.bf16.msra.mxu0 %v1528
        %1548 = vmatprep.subr.bf16.mxu0 0
        %1549 = vmatpush1.bf16.msra.mxu0 %v1529
        %1550 = vmatprep.subr.bf16.mxu0 0
        %1551 = vmatpush1.bf16.msra.mxu0 %v1530
        %1552 = vmatprep.subr.bf16.mxu0 0
        %1553 = vmatpush1.bf16.msra.mxu0 %v1531
        %1554 = vmatprep.subr.bf16.mxu0 0
        %1555 = vmatpush1.bf16.msra.mxu0 %v1532
        %1556 = vmatprep.subr.bf16.mxu0 0
        %1557 = vmatpush1.bf16.msra.mxu0 %v1533
        %1558 = vmatprep.subr.bf16.mxu0 0
        %1559 = vmatpush1.bf16.msra.mxu0 0
        %1560 = vmatprep.subr.bf16.mxu0 0
        %1561 = vmatpush1.bf16.msra.mxu0 0
        %1562 = vmatprep.subr.bf16.mxu0 0
        %1563 = vmatpush1.bf16.msra.mxu0 0
        %1564 = vmatprep.subr.bf16.mxu0 0
        %1565 = vmatpush1.bf16.msra.mxu0 0
        %1566 = vmatprep.subr.bf16.mxu0 0
        %1567 = vmatpush1.bf16.msra.mxu0 0
        %1568 = vmatprep.subr.bf16.mxu0 0
        %1569 = vmatpush1.bf16.msra.mxu0 0
        %1570 = vmatprep.subr.bf16.mxu0 0
        %1571 = vmatpush1.bf16.msra.mxu0 0
        %1572 = vmatprep.subr.bf16.mxu0 0
        %1573 = vmatpush1.bf16.msra.mxu0 0
        %1574 = vmatprep.mubr.bf16.mxu0 0
        %1575 = vmatmul.mubr.bf16.gmra.mrb[0].mxu0 %v1462
        %v1576 = vpop.f32.mrb[0].mxu0
        %v1577 = vadd.f32 0.0, %v1576
        %v1578 = vpop.f32.mrb[0].mxu0
        %v1579 = vpop.f32.mrb[0].mxu0
        %v1580 = vadd.f32 0.0, %v1579
        %v1581 = vpop.f32.mrb[0].mxu0
        %1582 = vmatprep.mubr.bf16.mxu0 0
        %1583 = vmatmul.mubr.bf16.gmra.mrb[0].mxu0 %v1463
        %v1584 = vpop.f32.mrb[0].mxu0
        %v1585 = vadd.f32 0.0, %v1584
        %v1586 = vpop.f32.mrb[0].mxu0
        %v1587 = vpop.f32.mrb[0].mxu0
        %v1588 = vadd.f32 0.0, %v1587
        %v1589 = vpop.f32.mrb[0].mxu0
        %1590 = vmatprep.mubr.bf16.mxu0 0
        %1591 = vmatmul.mubr.bf16.gmra.mrb[0].mxu0 %v1464
        %v1592 = vpop.f32.mrb[0].mxu0
        %v1593 = vadd.f32 0.0, %v1592
        %v1594 = vpop.f32.mrb[0].mxu0
        %v1595 = vpop.f32.mrb[0].mxu0
        %v1596 = vadd.f32 0.0, %v1595
        %v1597 = vpop.f32.mrb[0].mxu0
        %1598 = vmatprep.mubr.bf16.mxu0 0
        %1599 = vmatmul.mubr.bf16.gmra.mrb[0].mxu0 %v1465
        %v1600 = vpop.f32.mrb[0].mxu0
        %v1601 = vadd.f32 0.0, %v1600
        %v1602 = vpop.f32.mrb[0].mxu0
        %v1603 = vpop.f32.mrb[0].mxu0
        %v1604 = vadd.f32 0.0, %v1603
        %v1605 = vpop.f32.mrb[0].mxu0
        %1606 = vmatprep.mubr.bf16.mxu0 0
        %1607 = vmatmul.mubr.bf16.gmra.mrb[0].mxu0 %v1466
        %v1608 = vpop.f32.mrb[0].mxu0
        %v1609 = vadd.f32 0.0, %v1608
        %v1610 = vpop.f32.mrb[0].mxu0
        %v1611 = vpop.f32.mrb[0].mxu0
        %v1612 = vadd.f32 0.0, %v1611
        %v1613 = vpop.f32.mrb[0].mxu0
        %1614 = vmatprep.mubr.bf16.mxu0 0
        %1615 = vmatmul.mubr.bf16.gmra.mrb[0].mxu0 %v1467
        %v1616 = vpop.f32.mrb[0].mxu0
        %v1617 = vadd.f32 0.0, %v1616
        %v1618 = vpop.f32.mrb[0].mxu0
        %v1619 = vpop.f32.mrb[0].mxu0
        %v1620 = vadd.f32 0.0, %v1619
        %v1621 = vpop.f32.mrb[0].mxu0
        %1622 = vmatprep.mubr.bf16.mxu0 0
        %1623 = vmatmul.mubr.bf16.gmra.mrb[0].mxu0 %v1468
        %v1624 = vpop.f32.mrb[0].mxu0
        %v1625 = vadd.f32 0.0, %v1624
        %v1626 = vpop.f32.mrb[0].mxu0
        %v1627 = vpop.f32.mrb[0].mxu0
        %v1628 = vadd.f32 0.0, %v1627
        %v1629 = vpop.f32.mrb[0].mxu0
        %1630 = vmatprep.mubr.bf16.mxu0 0
        %1631 = vmatmul.mubr.bf16.gmra.mrb[0].mxu0 %v1469
        %v1632 = vpop.f32.mrb[0].mxu0
        %v1633 = vadd.f32 0.0, %v1632
        %v1634 = vpop.f32.mrb[0].mxu0
        %v1635 = vpop.f32.mrb[0].mxu0
        %v1636 = vadd.f32 0.0, %v1635
        %v1637 = vpop.f32.mrb[0].mxu0
        %1638 = vmatprep.mubr.bf16.mxu0 0
        %1639 = vmatmul.mubr.bf16.gmra.mrb[0].mxu0 %v1470
        %v1640 = vpop.f32.mrb[0].mxu0
        %v1641 = vadd.f32 0.0, %v1640
        %v1642 = vpop.f32.mrb[0].mxu0
        %v1643 = vpop.f32.mrb[0].mxu0
        %v1644 = vadd.f32 0.0, %v1643
        %v1645 = vpop.f32.mrb[0].mxu0
        %1646 = vmatprep.mubr.bf16.mxu0 0
        %1647 = vmatmul.mubr.bf16.gmra.mrb[0].mxu0 %v1471
        %v1648 = vpop.f32.mrb[0].mxu0
        %v1649 = vadd.f32 0.0, %v1648
        %v1650 = vpop.f32.mrb[0].mxu0
        %v1651 = vpop.f32.mrb[0].mxu0
        %v1652 = vadd.f32 0.0, %v1651
        %v1653 = vpop.f32.mrb[0].mxu0
        %1654 = vmatprep.mubr.bf16.mxu0 0
        %1655 = vmatmul.mubr.bf16.gmra.mrb[0].mxu0 %v1472
        %v1656 = vpop.f32.mrb[0].mxu0
        %v1657 = vadd.f32 0.0, %v1656
        %v1658 = vpop.f32.mrb[0].mxu0
        %v1659 = vpop.f32.mrb[0].mxu0
        %v1660 = vadd.f32 0.0, %v1659
        %v1661 = vpop.f32.mrb[0].mxu0
        %1662 = vmatprep.mubr.bf16.mxu0 0
        %1663 = vmatmul.mubr.bf16.gmra.mrb[0].mxu0 %v1473
        %v1664 = vpop.f32.mrb[0].mxu0
        %v1665 = vadd.f32 0.0, %v1664
        %v1666 = vpop.f32.mrb[0].mxu0
        %v1667 = vpop.f32.mrb[0].mxu0
        %v1668 = vadd.f32 0.0, %v1667
        %v1669 = vpop.f32.mrb[0].mxu0
        %1670 = vmatprep.mubr.bf16.mxu0 0
        %1671 = vmatmul.mubr.bf16.gmra.mrb[0].mxu0 %v1474
        %v1672 = vpop.f32.mrb[0].mxu0
        %v1673 = vadd.f32 0.0, %v1672
        %v1674 = vpop.f32.mrb[0].mxu0
        %v1675 = vpop.f32.mrb[0].mxu0
        %v1676 = vadd.f32 0.0, %v1675
        %v1677 = vpop.f32.mrb[0].mxu0
        %1678 = vmatprep.mubr.bf16.mxu0 0
        %1679 = vmatmul.mubr.bf16.gmra.mrb[0].mxu0 %v1475
        %v1680 = vpop.f32.mrb[0].mxu0
        %v1681 = vadd.f32 0.0, %v1680
        %v1682 = vpop.f32.mrb[0].mxu0
        %v1683 = vpop.f32.mrb[0].mxu0
        %v1684 = vadd.f32 0.0, %v1683
        %v1685 = vpop.f32.mrb[0].mxu0
        %1686 = vmatprep.mubr.bf16.mxu0 0
        %1687 = vmatmul.mubr.bf16.gmra.mrb[0].mxu0 %v1476
        %v1688 = vpop.f32.mrb[0].mxu0
        %v1689 = vadd.f32 0.0, %v1688
        %v1690 = vpop.f32.mrb[0].mxu0
        %v1691 = vpop.f32.mrb[0].mxu0
        %v1692 = vadd.f32 0.0, %v1691
        %v1693 = vpop.f32.mrb[0].mxu0
        %1694 = vmatprep.mubr.bf16.mxu0 0
        %1695 = vmatmul.mubr.bf16.gmra.mrb[0].mxu0 %v1477
        %v1696 = vpop.f32.mrb[0].mxu0
        %v1697 = vadd.f32 0.0, %v1696
        %v1698 = vpop.f32.mrb[0].mxu0
        %v1699 = vpop.f32.mrb[0].mxu0
        %v1700 = vadd.f32 0.0, %v1699
        %v1701 = vpop.f32.mrb[0].mxu0
        %1702 = vdwg.mxu0
        %v1703 = vadd.f32 %v1283, %v1577
        %v1704 = vadd.f32 %v1284, %v1580
        %v1705 = vadd.f32 %v1285, %v1585
        %v1706 = vadd.f32 %v1286, %v1588
        %v1707 = vadd.f32 %v1287, %v1593
        %v1708 = vadd.f32 %v1288, %v1596
        %v1709 = vadd.f32 %v1289, %v1601
        %v1710 = vadd.f32 %v1290, %v1604
        %v1711 = vadd.f32 %v1291, %v1609
        %v1712 = vadd.f32 %v1292, %v1612
        %v1713 = vadd.f32 %v1293, %v1617
        %v1714 = vadd.f32 %v1294, %v1620
        %v1715 = vadd.f32 %v1295, %v1625
        %v1716 = vadd.f32 %v1296, %v1628
        %v1717 = vadd.f32 %v1297, %v1633
        %v1718 = vadd.f32 %v1298, %v1636
        %v1719 = vadd.f32 %v1299, %v1641
        %v1720 = vadd.f32 %v1300, %v1644
        %v1721 = vadd.f32 %v1301, %v1649
        %v1722 = vadd.f32 %v1302, %v1652
        %v1723 = vadd.f32 %v1303, %v1657
        %v1724 = vadd.f32 %v1304, %v1660
        %v1725 = vadd.f32 %v1305, %v1665
        %v1726 = vadd.f32 %v1306, %v1668
        %v1727 = vadd.f32 %v1307, %v1673
        %v1728 = vadd.f32 %v1308, %v1676
        %v1729 = vadd.f32 %v1309, %v1681
        %v1730 = vadd.f32 %v1310, %v1684
        %v1731 = vadd.f32 %v1311, %v1689
        %v1732 = vadd.f32 %v1312, %v1692
        %v1733 = vadd.f32 %v1313, %v1697
        %v1734 = vadd.f32 %v1314, %v1700
        %1735 = vst [vmem:[%s222] sm:$0xff] %v1703
        %1736 = vst [vmem:[%s222 + $0x8] sm:$0xff] %v1704
        %1737 = vst [vmem:[%s222 + $0x10] sm:$0xff] %v1705
        %1738 = vst [vmem:[%s222 + $0x18] sm:$0xff] %v1706
        %1739 = vst [vmem:[%s222 + $0x20] sm:$0xff] %v1707
        %1740 = vst [vmem:[%s222 + $0x28] sm:$0xff] %v1708
        %1741 = vst [vmem:[%s222 + $0x30] sm:$0xff] %v1709
        %1742 = vst [vmem:[%s222 + $0x38] sm:$0xff] %v1710
        %1743 = vst [vmem:[%s222 + $0x40] sm:$0xff] %v1711
        %1744 = vst [vmem:[%s222 + $0x48] sm:$0xff] %v1712
        %1745 = vst [vmem:[%s222 + $0x50] sm:$0xff] %v1713
        %1746 = vst [vmem:[%s222 + $0x58] sm:$0xff] %v1714
        %1747 = vst [vmem:[%s222 + $0x60] sm:$0xff] %v1715
        %1748 = vst [vmem:[%s222 + $0x68] sm:$0xff] %v1716
        %1749 = vst [vmem:[%s222 + $0x70] sm:$0xff] %v1717
        %1750 = vst [vmem:[%s222 + $0x78] sm:$0xff] %v1718
        %1751 = vst [vmem:[%s222 + $0x80] sm:$0xff] %v1719
        %1752 = vst [vmem:[%s222 + $0x88] sm:$0xff] %v1720
        %1753 = vst [vmem:[%s222 + $0x90] sm:$0xff] %v1721
        %1754 = vst [vmem:[%s222 + $0x98] sm:$0xff] %v1722
        %1755 = vst [vmem:[%s222 + $0xa0] sm:$0xff] %v1723
        %1756 = vst [vmem:[%s222 + $0xa8] sm:$0xff] %v1724
        %1757 = vst [vmem:[%s222 + $0xb0] sm:$0xff] %v1725
        %1758 = vst [vmem:[%s222 + $0xb8] sm:$0xff] %v1726
        %1759 = vst [vmem:[%s222 + $0xc0] sm:$0xff] %v1727
        %1760 = vst [vmem:[%s222 + $0xc8] sm:$0xff] %v1728
        %1761 = vst [vmem:[%s222 + $0xd0] sm:$0xff] %v1729
        %1762 = vst [vmem:[%s222 + $0xd8] sm:$0xff] %v1730
        %1763 = vst [vmem:[%s222 + $0xe0] sm:$0xff] %v1731
        %1764 = vst [vmem:[%s222 + $0xe8] sm:$0xff] %v1732
        %1765 = vst [vmem:[%s222 + $0xf0] sm:$0xff] %v1733
        %1766 = vst [vmem:[%s222 + $0xf8] sm:$0xff] %v1734
        %s1767 = scalar_lea.vmem %s237, 24
        %v1768 = vld [vmem:[%s1767] sm:$0xf]
        %v1769 = vld [vmem:[%s1767 + $0x4] sm:$0xf]
        %v1770 = vld [vmem:[%s1767 + $0x8] sm:$0x3]
        %v1771 = vld [vmem:[%s1767 + $0xc] sm:$0xf]
        %v1772 = vld [vmem:[%s1767 + $0x10] sm:$0xf]
        %v1773 = vld [vmem:[%s1767 + $0x14] sm:$0x3]
        %v1774 = vld [vmem:[%s1767 + $0x18] sm:$0xf]
        %v1775 = vld [vmem:[%s1767 + $0x1c] sm:$0xf]
        %v1776 = vld [vmem:[%s1767 + $0x20] sm:$0x3]
        %v1777 = vld [vmem:[%s1767 + $0x24] sm:$0xf]
        %v1778 = vld [vmem:[%s1767 + $0x28] sm:$0xf]
        %v1779 = vld [vmem:[%s1767 + $0x2c] sm:$0x3]
        %v1780 = vld [vmem:[%s1767 + $0x30] sm:$0xf]
        %v1781 = vld [vmem:[%s1767 + $0x34] sm:$0xf]
        %v1782 = vld [vmem:[%s1767 + $0x38] sm:$0x3]
        %v1783 = vld [vmem:[%s1767 + $0x3c] sm:$0xf]
        %v1784 = vld [vmem:[%s1767 + $0x40] sm:$0xf]
        %v1785 = vld [vmem:[%s1767 + $0x44] sm:$0x3]
        %v1786 = vld [vmem:[%s1767 + $0x48] sm:$0xf]
        %v1787 = vld [vmem:[%s1767 + $0x4c] sm:$0xf]
        %v1788 = vld [vmem:[%s1767 + $0x50] sm:$0x3]
        %v1789 = vld [vmem:[%s1767 + $0x54] sm:$0xf]
        %v1790 = vld [vmem:[%s1767 + $0x58] sm:$0xf]
        %v1791 = vld [vmem:[%s1767 + $0x5c] sm:$0x3]
        %v1792 = vld [vmem:[%s1767 + $0x60] sm:$0xf]
        %v1793 = vld [vmem:[%s1767 + $0x64] sm:$0xf]
        %v1794 = vld [vmem:[%s1767 + $0x68] sm:$0x3]
        %v1795 = vld [vmem:[%s1767 + $0x6c] sm:$0xf]
        %v1796 = vld [vmem:[%s1767 + $0x70] sm:$0xf]
        %v1797 = vld [vmem:[%s1767 + $0x74] sm:$0x3]
        %v1798 = vld [vmem:[%s1767 + $0x78] sm:$0xf]
        %v1799 = vld [vmem:[%s1767 + $0x7c] sm:$0xf]
        %v1800 = vld [vmem:[%s1767 + $0x80] sm:$0x3]
        %v1801 = vld [vmem:[%s1767 + $0x84] sm:$0xf]
        %v1802 = vld [vmem:[%s1767 + $0x88] sm:$0xf]
        %v1803 = vld [vmem:[%s1767 + $0x8c] sm:$0x3]
        %v1804 = vld [vmem:[%s1767 + $0x90] sm:$0xf]
        %v1805 = vld [vmem:[%s1767 + $0x94] sm:$0xf]
        %v1806 = vld [vmem:[%s1767 + $0x98] sm:$0x3]
        %v1807 = vld [vmem:[%s1767 + $0x9c] sm:$0xf]
        %v1808 = vld [vmem:[%s1767 + $0xa0] sm:$0xf]
        %v1809 = vld [vmem:[%s1767 + $0xa4] sm:$0x3]
        %v1810 = vld [vmem:[%s1767 + $0xa8] sm:$0xf]
        %v1811 = vld [vmem:[%s1767 + $0xac] sm:$0xf]
        %v1812 = vld [vmem:[%s1767 + $0xb0] sm:$0x3]
        %v1813 = vld [vmem:[%s1767 + $0xb4] sm:$0xf]
        %v1814 = vld [vmem:[%s1767 + $0xb8] sm:$0xf]
        %v1815 = vld [vmem:[%s1767 + $0xbc] sm:$0x3]
        %s1816 = scalar_lea.vmem %s245, 192
        %v1817 = vld [vmem:[%s1816] sm:$0xf]
        %v1818 = vld [vmem:[%s1816 + $0x4] sm:$0xf]
        %v1819 = vld [vmem:[%s1816 + $0x8] sm:$0xf]
        %v1820 = vld [vmem:[%s1816 + $0xc] sm:$0xf]
        %v1821 = vld [vmem:[%s1816 + $0x10] sm:$0xf]
        %v1822 = vld [vmem:[%s1816 + $0x14] sm:$0xf]
        %v1823 = vld [vmem:[%s1816 + $0x18] sm:$0xf]
        %v1824 = vld [vmem:[%s1816 + $0x1c] sm:$0xf]
        %v1825 = vld [vmem:[%s1816 + $0x20] sm:$0xf]
        %v1826 = vld [vmem:[%s1816 + $0x24] sm:$0xf]
        %v1827 = vld [vmem:[%s1816 + $0x28] sm:$0xf]
        %v1828 = vld [vmem:[%s1816 + $0x2c] sm:$0xf]
        %v1829 = vld [vmem:[%s1816 + $0x30] sm:$0xf]
        %v1830 = vld [vmem:[%s1816 + $0x34] sm:$0xf]
        %v1831 = vld [vmem:[%s1816 + $0x38] sm:$0xf]
        %v1832 = vld [vmem:[%s1816 + $0x3c] sm:$0xf]
        %v1833 = vld [vmem:[%s222] sm:$0xff]
        %v1834 = vld [vmem:[%s222 + $0x8] sm:$0xff]
        %v1835 = vld [vmem:[%s222 + $0x10] sm:$0xff]
        %v1836 = vld [vmem:[%s222 + $0x18] sm:$0xff]
        %v1837 = vld [vmem:[%s222 + $0x20] sm:$0xff]
        %v1838 = vld [vmem:[%s222 + $0x28] sm:$0xff]
        %v1839 = vld [vmem:[%s222 + $0x30] sm:$0xff]
        %v1840 = vld [vmem:[%s222 + $0x38] sm:$0xff]
        %v1841 = vld [vmem:[%s222 + $0x40] sm:$0xff]
        %v1842 = vld [vmem:[%s222 + $0x48] sm:$0xff]
        %v1843 = vld [vmem:[%s222 + $0x50] sm:$0xff]
        %v1844 = vld [vmem:[%s222 + $0x58] sm:$0xff]
        %v1845 = vld [vmem:[%s222 + $0x60] sm:$0xff]
        %v1846 = vld [vmem:[%s222 + $0x68] sm:$0xff]
        %v1847 = vld [vmem:[%s222 + $0x70] sm:$0xff]
        %v1848 = vld [vmem:[%s222 + $0x78] sm:$0xff]
        %v1849 = vld [vmem:[%s222 + $0x80] sm:$0xff]
        %v1850 = vld [vmem:[%s222 + $0x88] sm:$0xff]
        %v1851 = vld [vmem:[%s222 + $0x90] sm:$0xff]
        %v1852 = vld [vmem:[%s222 + $0x98] sm:$0xff]
        %v1853 = vld [vmem:[%s222 + $0xa0] sm:$0xff]
        %v1854 = vld [vmem:[%s222 + $0xa8] sm:$0xff]
        %v1855 = vld [vmem:[%s222 + $0xb0] sm:$0xff]
        %v1856 = vld [vmem:[%s222 + $0xb8] sm:$0xff]
        %v1857 = vld [vmem:[%s222 + $0xc0] sm:$0xff]
        %v1858 = vld [vmem:[%s222 + $0xc8] sm:$0xff]
        %v1859 = vld [vmem:[%s222 + $0xd0] sm:$0xff]
        %v1860 = vld [vmem:[%s222 + $0xd8] sm:$0xff]
        %v1861 = vld [vmem:[%s222 + $0xe0] sm:$0xff]
        %v1862 = vld [vmem:[%s222 + $0xe8] sm:$0xff]
        %v1863 = vld [vmem:[%s222 + $0xf0] sm:$0xff]
        %v1864 = vld [vmem:[%s222 + $0xf8] sm:$0xff]
        %v1897 = vunpack.c.l.b16 %v1768
        %v1898 = vunpack.c.l.b16 %v1769
        %v1899 = vunpack.c.l.b16 %v1771
        %v1900 = vunpack.c.l.b16 %v1772
        %v1901 = vunpack.c.l.b16 %v1774
        %v1902 = vunpack.c.l.b16 %v1775
        %v1903 = vunpack.c.l.b16 %v1777
        %v1904 = vunpack.c.l.b16 %v1778
        %v1905 = vunpack.c.l.b16 %v1780
        %v1906 = vunpack.c.l.b16 %v1781
        %v1907 = vunpack.c.l.b16 %v1783
        %v1908 = vunpack.c.l.b16 %v1784
        %v1909 = vunpack.c.l.b16 %v1786
        %v1910 = vunpack.c.l.b16 %v1787
        %v1911 = vunpack.c.l.b16 %v1789
        %v1912 = vunpack.c.l.b16 %v1790
        %v1913 = vunpack.c.l.b16 %v1792
        %v1914 = vunpack.c.l.b16 %v1793
        %v1915 = vunpack.c.l.b16 %v1795
        %v1916 = vunpack.c.l.b16 %v1796
        %v1917 = vunpack.c.l.b16 %v1798
        %v1918 = vunpack.c.l.b16 %v1799
        %v1919 = vunpack.c.l.b16 %v1801
        %v1920 = vunpack.c.l.b16 %v1802
        %v1921 = vunpack.c.l.b16 %v1804
        %v1922 = vunpack.c.l.b16 %v1805
        %v1923 = vunpack.c.l.b16 %v1807
        %v1924 = vunpack.c.l.b16 %v1808
        %v1925 = vunpack.c.l.b16 %v1810
        %v1926 = vunpack.c.l.b16 %v1811
        %v1927 = vunpack.c.l.b16 %v1813
        %v1928 = vunpack.c.l.b16 %v1814
        %v1929 = vpack.c.b16 %v1898, %v1897
        %v1930 = vpack.c.b16 %v1900, %v1899
        %v1931 = vpack.c.b16 %v1902, %v1901
        %v1932 = vpack.c.b16 %v1904, %v1903
        %v1933 = vpack.c.b16 %v1906, %v1905
        %v1934 = vpack.c.b16 %v1908, %v1907
        %v1935 = vpack.c.b16 %v1910, %v1909
        %v1936 = vpack.c.b16 %v1912, %v1911
        %v1937 = vpack.c.b16 %v1914, %v1913
        %v1938 = vpack.c.b16 %v1916, %v1915
        %v1939 = vpack.c.b16 %v1918, %v1917
        %v1940 = vpack.c.b16 %v1920, %v1919
        %v1941 = vpack.c.b16 %v1922, %v1921
        %v1942 = vpack.c.b16 %v1924, %v1923
        %v1943 = vpack.c.b16 %v1926, %v1925
        %v1944 = vpack.c.b16 %v1928, %v1927
        %v1977 = vunpack.c.l.b16 %v1817
        %v1978 = vunpack.c.l.b16 %v1818
        %v1979 = vunpack.c.l.b16 %v1819
        %v1980 = vunpack.c.l.b16 %v1820
        %v1981 = vunpack.c.l.b16 %v1821
        %v1982 = vunpack.c.l.b16 %v1822
        %v1983 = vunpack.c.l.b16 %v1823
        %v1984 = vunpack.c.l.b16 %v1824
        %v1985 = vunpack.c.l.b16 %v1825
        %v1986 = vunpack.c.l.b16 %v1826
        %v1987 = vunpack.c.l.b16 %v1827
        %v1988 = vunpack.c.l.b16 %v1828
        %v1989 = vunpack.c.l.b16 %v1829
        %v1990 = vunpack.c.l.b16 %v1830
        %v1991 = vunpack.c.l.b16 %v1831
        %v1992 = vunpack.c.l.b16 %v1832
        %v1993 = vpack.c.b16 %v1978, %v1977
        %v1994 = vpack.c.b16 %v1980, %v1979
        %v1995 = vpack.c.b16 %v1982, %v1981
        %v1996 = vpack.c.b16 %v1984, %v1983
        %v1997 = vpack.c.b16 %v1986, %v1985
        %v1998 = vpack.c.b16 %v1988, %v1987
        %v1999 = vpack.c.b16 %v1990, %v1989
        %v2000 = vpack.c.b16 %v1992, %v1991
        %2009 = vmatprep.subr.bf16.mxu0 0
        %2010 = vmatpush1.bf16.msra.mxu0 %v1993
        %2011 = vmatprep.subr.bf16.mxu0 0
        %2012 = vmatpush1.bf16.msra.mxu0 %v1994
        %2013 = vmatprep.subr.bf16.mxu0 0
        %2014 = vmatpush1.bf16.msra.mxu0 %v1995
        %2015 = vmatprep.subr.bf16.mxu0 0
        %2016 = vmatpush1.bf16.msra.mxu0 %v1996
        %2017 = vmatprep.subr.bf16.mxu0 0
        %2018 = vmatpush1.bf16.msra.mxu0 %v1997
        %2019 = vmatprep.subr.bf16.mxu0 0
        %2020 = vmatpush1.bf16.msra.mxu0 %v1998
        %2021 = vmatprep.subr.bf16.mxu0 0
        %2022 = vmatpush1.bf16.msra.mxu0 %v1999
        %2023 = vmatprep.subr.bf16.mxu0 0
        %2024 = vmatpush1.bf16.msra.mxu0 %v2000
        %2025 = vmatprep.subr.bf16.mxu0 0
        %2026 = vmatpush1.bf16.msra.mxu0 0
        %2027 = vmatprep.subr.bf16.mxu0 0
        %2028 = vmatpush1.bf16.msra.mxu0 0
        %2029 = vmatprep.subr.bf16.mxu0 0
        %2030 = vmatpush1.bf16.msra.mxu0 0
        %2031 = vmatprep.subr.bf16.mxu0 0
        %2032 = vmatpush1.bf16.msra.mxu0 0
        %2033 = vmatprep.subr.bf16.mxu0 0
        %2034 = vmatpush1.bf16.msra.mxu0 0
        %2035 = vmatprep.subr.bf16.mxu0 0
        %2036 = vmatpush1.bf16.msra.mxu0 0
        %2037 = vmatprep.subr.bf16.mxu0 0
        %2038 = vmatpush1.bf16.msra.mxu0 0
        %2039 = vmatprep.subr.bf16.mxu0 0
        %2040 = vmatpush1.bf16.msra.mxu0 0
        %2041 = vmatprep.mubr.bf16.mxu0 0
        %2042 = vmatmul.mubr.bf16.gmra.mrb[0].mxu0 %v1929
        %v2043 = vpop.f32.mrb[0].mxu0
        %v2044 = vadd.f32 0.0, %v2043
        %v2045 = vpop.f32.mrb[0].mxu0
        %v2046 = vpop.f32.mrb[0].mxu0
        %v2047 = vadd.f32 0.0, %v2046
        %v2048 = vpop.f32.mrb[0].mxu0
        %2049 = vmatprep.mubr.bf16.mxu0 0
        %2050 = vmatmul.mubr.bf16.gmra.mrb[0].mxu0 %v1930
        %v2051 = vpop.f32.mrb[0].mxu0
        %v2052 = vadd.f32 0.0, %v2051
        %v2053 = vpop.f32.mrb[0].mxu0
        %v2054 = vpop.f32.mrb[0].mxu0
        %v2055 = vadd.f32 0.0, %v2054
        %v2056 = vpop.f32.mrb[0].mxu0
        %2057 = vmatprep.mubr.bf16.mxu0 0
        %2058 = vmatmul.mubr.bf16.gmra.mrb[0].mxu0 %v1931
        %v2059 = vpop.f32.mrb[0].mxu0
        %v2060 = vadd.f32 0.0, %v2059
        %v2061 = vpop.f32.mrb[0].mxu0
        %v2062 = vpop.f32.mrb[0].mxu0
        %v2063 = vadd.f32 0.0, %v2062
        %v2064 = vpop.f32.mrb[0].mxu0
        %2065 = vmatprep.mubr.bf16.mxu0 0
        %2066 = vmatmul.mubr.bf16.gmra.mrb[0].mxu0 %v1932
        %v2067 = vpop.f32.mrb[0].mxu0
        %v2068 = vadd.f32 0.0, %v2067
        %v2069 = vpop.f32.mrb[0].mxu0
        %v2070 = vpop.f32.mrb[0].mxu0
        %v2071 = vadd.f32 0.0, %v2070
        %v2072 = vpop.f32.mrb[0].mxu0
        %2073 = vmatprep.mubr.bf16.mxu0 0
        %2074 = vmatmul.mubr.bf16.gmra.mrb[0].mxu0 %v1933
        %v2075 = vpop.f32.mrb[0].mxu0
        %v2076 = vadd.f32 0.0, %v2075
        %v2077 = vpop.f32.mrb[0].mxu0
        %v2078 = vpop.f32.mrb[0].mxu0
        %v2079 = vadd.f32 0.0, %v2078
        %v2080 = vpop.f32.mrb[0].mxu0
        %2081 = vmatprep.mubr.bf16.mxu0 0
        %2082 = vmatmul.mubr.bf16.gmra.mrb[0].mxu0 %v1934
        %v2083 = vpop.f32.mrb[0].mxu0
        %v2084 = vadd.f32 0.0, %v2083
        %v2085 = vpop.f32.mrb[0].mxu0
        %v2086 = vpop.f32.mrb[0].mxu0
        %v2087 = vadd.f32 0.0, %v2086
        %v2088 = vpop.f32.mrb[0].mxu0
        %2089 = vmatprep.mubr.bf16.mxu0 0
        %2090 = vmatmul.mubr.bf16.gmra.mrb[0].mxu0 %v1935
        %v2091 = vpop.f32.mrb[0].mxu0
        %v2092 = vadd.f32 0.0, %v2091
        %v2093 = vpop.f32.mrb[0].mxu0
        %v2094 = vpop.f32.mrb[0].mxu0
        %v2095 = vadd.f32 0.0, %v2094
        %v2096 = vpop.f32.mrb[0].mxu0
        %2097 = vmatprep.mubr.bf16.mxu0 0
        %2098 = vmatmul.mubr.bf16.gmra.mrb[0].mxu0 %v1936
        %v2099 = vpop.f32.mrb[0].mxu0
        %v2100 = vadd.f32 0.0, %v2099
        %v2101 = vpop.f32.mrb[0].mxu0
        %v2102 = vpop.f32.mrb[0].mxu0
        %v2103 = vadd.f32 0.0, %v2102
        %v2104 = vpop.f32.mrb[0].mxu0
        %2105 = vmatprep.mubr.bf16.mxu0 0
        %2106 = vmatmul.mubr.bf16.gmra.mrb[0].mxu0 %v1937
        %v2107 = vpop.f32.mrb[0].mxu0
        %v2108 = vadd.f32 0.0, %v2107
        %v2109 = vpop.f32.mrb[0].mxu0
        %v2110 = vpop.f32.mrb[0].mxu0
        %v2111 = vadd.f32 0.0, %v2110
        %v2112 = vpop.f32.mrb[0].mxu0
        %2113 = vmatprep.mubr.bf16.mxu0 0
        %2114 = vmatmul.mubr.bf16.gmra.mrb[0].mxu0 %v1938
        %v2115 = vpop.f32.mrb[0].mxu0
        %v2116 = vadd.f32 0.0, %v2115
        %v2117 = vpop.f32.mrb[0].mxu0
        %v2118 = vpop.f32.mrb[0].mxu0
        %v2119 = vadd.f32 0.0, %v2118
        %v2120 = vpop.f32.mrb[0].mxu0
        %2121 = vmatprep.mubr.bf16.mxu0 0
        %2122 = vmatmul.mubr.bf16.gmra.mrb[0].mxu0 %v1939
        %v2123 = vpop.f32.mrb[0].mxu0
        %v2124 = vadd.f32 0.0, %v2123
        %v2125 = vpop.f32.mrb[0].mxu0
        %v2126 = vpop.f32.mrb[0].mxu0
        %v2127 = vadd.f32 0.0, %v2126
        %v2128 = vpop.f32.mrb[0].mxu0
        %2129 = vmatprep.mubr.bf16.mxu0 0
        %2130 = vmatmul.mubr.bf16.gmra.mrb[0].mxu0 %v1940
        %v2131 = vpop.f32.mrb[0].mxu0
        %v2132 = vadd.f32 0.0, %v2131
        %v2133 = vpop.f32.mrb[0].mxu0
        %v2134 = vpop.f32.mrb[0].mxu0
        %v2135 = vadd.f32 0.0, %v2134
        %v2136 = vpop.f32.mrb[0].mxu0
        %2137 = vmatprep.mubr.bf16.mxu0 0
        %2138 = vmatmul.mubr.bf16.gmra.mrb[0].mxu0 %v1941
        %v2139 = vpop.f32.mrb[0].mxu0
        %v2140 = vadd.f32 0.0, %v2139
        %v2141 = vpop.f32.mrb[0].mxu0
        %v2142 = vpop.f32.mrb[0].mxu0
        %v2143 = vadd.f32 0.0, %v2142
        %v2144 = vpop.f32.mrb[0].mxu0
        %2145 = vmatprep.mubr.bf16.mxu0 0
        %2146 = vmatmul.mubr.bf16.gmra.mrb[0].mxu0 %v1942
        %v2147 = vpop.f32.mrb[0].mxu0
        %v2148 = vadd.f32 0.0, %v2147
        %v2149 = vpop.f32.mrb[0].mxu0
        %v2150 = vpop.f32.mrb[0].mxu0
        %v2151 = vadd.f32 0.0, %v2150
        %v2152 = vpop.f32.mrb[0].mxu0
        %2153 = vmatprep.mubr.bf16.mxu0 0
        %2154 = vmatmul.mubr.bf16.gmra.mrb[0].mxu0 %v1943
        %v2155 = vpop.f32.mrb[0].mxu0
        %v2156 = vadd.f32 0.0, %v2155
        %v2157 = vpop.f32.mrb[0].mxu0
        %v2158 = vpop.f32.mrb[0].mxu0
        %v2159 = vadd.f32 0.0, %v2158
        %v2160 = vpop.f32.mrb[0].mxu0
        %2161 = vmatprep.mubr.bf16.mxu0 0
        %2162 = vmatmul.mubr.bf16.gmra.mrb[0].mxu0 %v1944
        %v2163 = vpop.f32.mrb[0].mxu0
        %v2164 = vadd.f32 0.0, %v2163
        %v2165 = vpop.f32.mrb[0].mxu0
        %v2166 = vpop.f32.mrb[0].mxu0
        %v2167 = vadd.f32 0.0, %v2166
        %v2168 = vpop.f32.mrb[0].mxu0
        %2169 = vdwg.mxu0
        %v2170 = vadd.f32 %v1833, %v2044
        %v2171 = vadd.f32 %v1834, %v2047
        %v2172 = vadd.f32 %v1835, %v2052
        %v2173 = vadd.f32 %v1836, %v2055
        %v2174 = vadd.f32 %v1837, %v2060
        %v2175 = vadd.f32 %v1838, %v2063
        %v2176 = vadd.f32 %v1839, %v2068
        %v2177 = vadd.f32 %v1840, %v2071
        %v2178 = vadd.f32 %v1841, %v2076
        %v2179 = vadd.f32 %v1842, %v2079
        %v2180 = vadd.f32 %v1843, %v2084
        %v2181 = vadd.f32 %v1844, %v2087
        %v2182 = vadd.f32 %v1845, %v2092
        %v2183 = vadd.f32 %v1846, %v2095
        %v2184 = vadd.f32 %v1847, %v2100
        %v2185 = vadd.f32 %v1848, %v2103
        %v2186 = vadd.f32 %v1849, %v2108
        %v2187 = vadd.f32 %v1850, %v2111
        %v2188 = vadd.f32 %v1851, %v2116
        %v2189 = vadd.f32 %v1852, %v2119
        %v2190 = vadd.f32 %v1853, %v2124
        %v2191 = vadd.f32 %v1854, %v2127
        %v2192 = vadd.f32 %v1855, %v2132
        %v2193 = vadd.f32 %v1856, %v2135
        %v2194 = vadd.f32 %v1857, %v2140
        %v2195 = vadd.f32 %v1858, %v2143
        %v2196 = vadd.f32 %v1859, %v2148
        %v2197 = vadd.f32 %v1860, %v2151
        %v2198 = vadd.f32 %v1861, %v2156
        %v2199 = vadd.f32 %v1862, %v2159
        %v2200 = vadd.f32 %v1863, %v2164
        %v2201 = vadd.f32 %v1864, %v2167
        %2202 = vst [vmem:[%s222] sm:$0xff] %v2170
        %2203 = vst [vmem:[%s222 + $0x8] sm:$0xff] %v2171
        %2204 = vst [vmem:[%s222 + $0x10] sm:$0xff] %v2172
        %2205 = vst [vmem:[%s222 + $0x18] sm:$0xff] %v2173
        %2206 = vst [vmem:[%s222 + $0x20] sm:$0xff] %v2174
        %2207 = vst [vmem:[%s222 + $0x28] sm:$0xff] %v2175
        %2208 = vst [vmem:[%s222 + $0x30] sm:$0xff] %v2176
        %2209 = vst [vmem:[%s222 + $0x38] sm:$0xff] %v2177
        %2210 = vst [vmem:[%s222 + $0x40] sm:$0xff] %v2178
        %2211 = vst [vmem:[%s222 + $0x48] sm:$0xff] %v2179
        %2212 = vst [vmem:[%s222 + $0x50] sm:$0xff] %v2180
        %2213 = vst [vmem:[%s222 + $0x58] sm:$0xff] %v2181
        %2214 = vst [vmem:[%s222 + $0x60] sm:$0xff] %v2182
        %2215 = vst [vmem:[%s222 + $0x68] sm:$0xff] %v2183
        %2216 = vst [vmem:[%s222 + $0x70] sm:$0xff] %v2184
        %2217 = vst [vmem:[%s222 + $0x78] sm:$0xff] %v2185
        %2218 = vst [vmem:[%s222 + $0x80] sm:$0xff] %v2186
        %2219 = vst [vmem:[%s222 + $0x88] sm:$0xff] %v2187
        %2220 = vst [vmem:[%s222 + $0x90] sm:$0xff] %v2188
        %2221 = vst [vmem:[%s222 + $0x98] sm:$0xff] %v2189
        %2222 = vst [vmem:[%s222 + $0xa0] sm:$0xff] %v2190
        %2223 = vst [vmem:[%s222 + $0xa8] sm:$0xff] %v2191
        %2224 = vst [vmem:[%s222 + $0xb0] sm:$0xff] %v2192
        %2225 = vst [vmem:[%s222 + $0xb8] sm:$0xff] %v2193
        %2226 = vst [vmem:[%s222 + $0xc0] sm:$0xff] %v2194
        %2227 = vst [vmem:[%s222 + $0xc8] sm:$0xff] %v2195
        %2228 = vst [vmem:[%s222 + $0xd0] sm:$0xff] %v2196
        %2229 = vst [vmem:[%s222 + $0xd8] sm:$0xff] %v2197
        %2230 = vst [vmem:[%s222 + $0xe0] sm:$0xff] %v2198
        %2231 = vst [vmem:[%s222 + $0xe8] sm:$0xff] %v2199
        %2232 = vst [vmem:[%s222 + $0xf0] sm:$0xff] %v2200
        %2233 = vst [vmem:[%s222 + $0xf8] sm:$0xff] %v2201
        %s2234 = scalar_lea.vmem %s245, 256
        %v2235 = vld [vmem:[%s2234] sm:$0xf]
        %v2236 = vld [vmem:[%s2234 + $0x4] sm:$0xf]
        %v2237 = vld [vmem:[%s2234 + $0x8] sm:$0xf]
        %v2238 = vld [vmem:[%s2234 + $0xc] sm:$0xf]
        %v2239 = vld [vmem:[%s2234 + $0x10] sm:$0xf]
        %v2240 = vld [vmem:[%s2234 + $0x14] sm:$0xf]
        %v2241 = vld [vmem:[%s2234 + $0x18] sm:$0xf]
        %v2242 = vld [vmem:[%s2234 + $0x1c] sm:$0xf]
        %v2243 = vld [vmem:[%s2234 + $0x20] sm:$0xf]
        %v2244 = vld [vmem:[%s2234 + $0x24] sm:$0xf]
        %v2245 = vld [vmem:[%s2234 + $0x28] sm:$0xf]
        %v2246 = vld [vmem:[%s2234 + $0x2c] sm:$0xf]
        %v2247 = vld [vmem:[%s2234 + $0x30] sm:$0xf]
        %v2248 = vld [vmem:[%s2234 + $0x34] sm:$0xf]
        %v2249 = vld [vmem:[%s2234 + $0x38] sm:$0xf]
        %v2250 = vld [vmem:[%s2234 + $0x3c] sm:$0xf]
        %v2251 = vld [vmem:[%s222] sm:$0xff]
        %v2252 = vld [vmem:[%s222 + $0x8] sm:$0xff]
        %v2253 = vld [vmem:[%s222 + $0x10] sm:$0xff]
        %v2254 = vld [vmem:[%s222 + $0x18] sm:$0xff]
        %v2255 = vld [vmem:[%s222 + $0x20] sm:$0xff]
        %v2256 = vld [vmem:[%s222 + $0x28] sm:$0xff]
        %v2257 = vld [vmem:[%s222 + $0x30] sm:$0xff]
        %v2258 = vld [vmem:[%s222 + $0x38] sm:$0xff]
        %v2259 = vld [vmem:[%s222 + $0x40] sm:$0xff]
        %v2260 = vld [vmem:[%s222 + $0x48] sm:$0xff]
        %v2261 = vld [vmem:[%s222 + $0x50] sm:$0xff]
        %v2262 = vld [vmem:[%s222 + $0x58] sm:$0xff]
        %v2263 = vld [vmem:[%s222 + $0x60] sm:$0xff]
        %v2264 = vld [vmem:[%s222 + $0x68] sm:$0xff]
        %v2265 = vld [vmem:[%s222 + $0x70] sm:$0xff]
        %v2266 = vld [vmem:[%s222 + $0x78] sm:$0xff]
        %v2267 = vld [vmem:[%s222 + $0x80] sm:$0xff]
        %v2268 = vld [vmem:[%s222 + $0x88] sm:$0xff]
        %v2269 = vld [vmem:[%s222 + $0x90] sm:$0xff]
        %v2270 = vld [vmem:[%s222 + $0x98] sm:$0xff]
        %v2271 = vld [vmem:[%s222 + $0xa0] sm:$0xff]
        %v2272 = vld [vmem:[%s222 + $0xa8] sm:$0xff]
        %v2273 = vld [vmem:[%s222 + $0xb0] sm:$0xff]
        %v2274 = vld [vmem:[%s222 + $0xb8] sm:$0xff]
        %v2275 = vld [vmem:[%s222 + $0xc0] sm:$0xff]
        %v2276 = vld [vmem:[%s222 + $0xc8] sm:$0xff]
        %v2277 = vld [vmem:[%s222 + $0xd0] sm:$0xff]
        %v2278 = vld [vmem:[%s222 + $0xd8] sm:$0xff]
        %v2279 = vld [vmem:[%s222 + $0xe0] sm:$0xff]
        %v2280 = vld [vmem:[%s222 + $0xe8] sm:$0xff]
        %v2281 = vld [vmem:[%s222 + $0xf0] sm:$0xff]
        %v2282 = vld [vmem:[%s222 + $0xf8] sm:$0xff]
        %v2299 = vrot.slane %v1768, 5
        %v2300 = vrot.slane %v2299, 4
        %v2301 = vrot.slane %v1769, 5
        %v2302 = vsel %vm816, %v2300, %v2301
        %v2303 = vrot.slane %v2301, 4
        %v2304 = vrot.slane %v1770, 5
        %v2305 = vsel %vm816, %v2303, %v2304
        %v2306 = vrot.slane %v1771, 5
        %v2307 = vrot.slane %v2306, 4
        %v2308 = vrot.slane %v1772, 5
        %v2309 = vsel %vm816, %v2307, %v2308
        %v2310 = vrot.slane %v2308, 4
        %v2311 = vrot.slane %v1773, 5
        %v2312 = vsel %vm816, %v2310, %v2311
        %v2313 = vrot.slane %v1774, 5
        %v2314 = vrot.slane %v2313, 4
        %v2315 = vrot.slane %v1775, 5
        %v2316 = vsel %vm816, %v2314, %v2315
        %v2317 = vrot.slane %v2315, 4
        %v2318 = vrot.slane %v1776, 5
        %v2319 = vsel %vm816, %v2317, %v2318
        %v2320 = vrot.slane %v1777, 5
        %v2321 = vrot.slane %v2320, 4
        %v2322 = vrot.slane %v1778, 5
        %v2323 = vsel %vm816, %v2321, %v2322
        %v2324 = vrot.slane %v2322, 4
        %v2325 = vrot.slane %v1779, 5
        %v2326 = vsel %vm816, %v2324, %v2325
        %v2327 = vrot.slane %v1780, 5
        %v2328 = vrot.slane %v2327, 4
        %v2329 = vrot.slane %v1781, 5
        %v2330 = vsel %vm816, %v2328, %v2329
        %v2331 = vrot.slane %v2329, 4
        %v2332 = vrot.slane %v1782, 5
        %v2333 = vsel %vm816, %v2331, %v2332
        %v2334 = vrot.slane %v1783, 5
        %v2335 = vrot.slane %v2334, 4
        %v2336 = vrot.slane %v1784, 5
        %v2337 = vsel %vm816, %v2335, %v2336
        %v2338 = vrot.slane %v2336, 4
        %v2339 = vrot.slane %v1785, 5
        %v2340 = vsel %vm816, %v2338, %v2339
        %v2341 = vrot.slane %v1786, 5
        %v2342 = vrot.slane %v2341, 4
        %v2343 = vrot.slane %v1787, 5
        %v2344 = vsel %vm816, %v2342, %v2343
        %v2345 = vrot.slane %v2343, 4
        %v2346 = vrot.slane %v1788, 5
        %v2347 = vsel %vm816, %v2345, %v2346
        %v2348 = vrot.slane %v1789, 5
        %v2349 = vrot.slane %v2348, 4
        %v2350 = vrot.slane %v1790, 5
        %v2351 = vsel %vm816, %v2349, %v2350
        %v2352 = vrot.slane %v2350, 4
        %v2353 = vrot.slane %v1791, 5
        %v2354 = vsel %vm816, %v2352, %v2353
        %v2355 = vrot.slane %v1792, 5
        %v2356 = vrot.slane %v2355, 4
        %v2357 = vrot.slane %v1793, 5
        %v2358 = vsel %vm816, %v2356, %v2357
        %v2359 = vrot.slane %v2357, 4
        %v2360 = vrot.slane %v1794, 5
        %v2361 = vsel %vm816, %v2359, %v2360
        %v2362 = vrot.slane %v1795, 5
        %v2363 = vrot.slane %v2362, 4
        %v2364 = vrot.slane %v1796, 5
        %v2365 = vsel %vm816, %v2363, %v2364
        %v2366 = vrot.slane %v2364, 4
        %v2367 = vrot.slane %v1797, 5
        %v2368 = vsel %vm816, %v2366, %v2367
        %v2369 = vrot.slane %v1798, 5
        %v2370 = vrot.slane %v2369, 4
        %v2371 = vrot.slane %v1799, 5
        %v2372 = vsel %vm816, %v2370, %v2371
        %v2373 = vrot.slane %v2371, 4
        %v2374 = vrot.slane %v1800, 5
        %v2375 = vsel %vm816, %v2373, %v2374
        %v2376 = vrot.slane %v1801, 5
        %v2377 = vrot.slane %v2376, 4
        %v2378 = vrot.slane %v1802, 5
        %v2379 = vsel %vm816, %v2377, %v2378
        %v2380 = vrot.slane %v2378, 4
        %v2381 = vrot.slane %v1803, 5
        %v2382 = vsel %vm816, %v2380, %v2381
        %v2383 = vrot.slane %v1804, 5
        %v2384 = vrot.slane %v2383, 4
        %v2385 = vrot.slane %v1805, 5
        %v2386 = vsel %vm816, %v2384, %v2385
        %v2387 = vrot.slane %v2385, 4
        %v2388 = vrot.slane %v1806, 5
        %v2389 = vsel %vm816, %v2387, %v2388
        %v2390 = vrot.slane %v1807, 5
        %v2391 = vrot.slane %v2390, 4
        %v2392 = vrot.slane %v1808, 5
        %v2393 = vsel %vm816, %v2391, %v2392
        %v2394 = vrot.slane %v2392, 4
        %v2395 = vrot.slane %v1809, 5
        %v2396 = vsel %vm816, %v2394, %v2395
        %v2397 = vrot.slane %v1810, 5
        %v2398 = vrot.slane %v2397, 4
        %v2399 = vrot.slane %v1811, 5
        %v2400 = vsel %vm816, %v2398, %v2399
        %v2401 = vrot.slane %v2399, 4
        %v2402 = vrot.slane %v1812, 5
        %v2403 = vsel %vm816, %v2401, %v2402
        %v2404 = vrot.slane %v1813, 5
        %v2405 = vrot.slane %v2404, 4
        %v2406 = vrot.slane %v1814, 5
        %v2407 = vsel %vm816, %v2405, %v2406
        %v2408 = vrot.slane %v2406, 4
        %v2409 = vrot.slane %v1815, 5
        %v2410 = vsel %vm816, %v2408, %v2409
        %v2411 = vunpack.c.l.b16 %v2302
        %v2412 = vunpack.c.l.b16 %v2305
        %v2413 = vunpack.c.l.b16 %v2309
        %v2414 = vunpack.c.l.b16 %v2312
        %v2415 = vunpack.c.l.b16 %v2316
        %v2416 = vunpack.c.l.b16 %v2319
        %v2417 = vunpack.c.l.b16 %v2323
        %v2418 = vunpack.c.l.b16 %v2326
        %v2419 = vunpack.c.l.b16 %v2330
        %v2420 = vunpack.c.l.b16 %v2333
        %v2421 = vunpack.c.l.b16 %v2337
        %v2422 = vunpack.c.l.b16 %v2340
        %v2423 = vunpack.c.l.b16 %v2344
        %v2424 = vunpack.c.l.b16 %v2347
        %v2425 = vunpack.c.l.b16 %v2351
        %v2426 = vunpack.c.l.b16 %v2354
        %v2427 = vunpack.c.l.b16 %v2358
        %v2428 = vunpack.c.l.b16 %v2361
        %v2429 = vunpack.c.l.b16 %v2365
        %v2430 = vunpack.c.l.b16 %v2368
        %v2431 = vunpack.c.l.b16 %v2372
        %v2432 = vunpack.c.l.b16 %v2375
        %v2433 = vunpack.c.l.b16 %v2379
        %v2434 = vunpack.c.l.b16 %v2382
        %v2435 = vunpack.c.l.b16 %v2386
        %v2436 = vunpack.c.l.b16 %v2389
        %v2437 = vunpack.c.l.b16 %v2393
        %v2438 = vunpack.c.l.b16 %v2396
        %v2439 = vunpack.c.l.b16 %v2400
        %v2440 = vunpack.c.l.b16 %v2403
        %v2441 = vunpack.c.l.b16 %v2407
        %v2442 = vunpack.c.l.b16 %v2410
        %v2443 = vpack.c.b16 %v2412, %v2411
        %v2444 = vpack.c.b16 %v2414, %v2413
        %v2445 = vpack.c.b16 %v2416, %v2415
        %v2446 = vpack.c.b16 %v2418, %v2417
        %v2447 = vpack.c.b16 %v2420, %v2419
        %v2448 = vpack.c.b16 %v2422, %v2421
        %v2449 = vpack.c.b16 %v2424, %v2423
        %v2450 = vpack.c.b16 %v2426, %v2425
        %v2451 = vpack.c.b16 %v2428, %v2427
        %v2452 = vpack.c.b16 %v2430, %v2429
        %v2453 = vpack.c.b16 %v2432, %v2431
        %v2454 = vpack.c.b16 %v2434, %v2433
        %v2455 = vpack.c.b16 %v2436, %v2435
        %v2456 = vpack.c.b16 %v2438, %v2437
        %v2457 = vpack.c.b16 %v2440, %v2439
        %v2458 = vpack.c.b16 %v2442, %v2441
        %v2491 = vunpack.c.l.b16 %v2235
        %v2492 = vunpack.c.l.b16 %v2236
        %v2493 = vunpack.c.l.b16 %v2237
        %v2494 = vunpack.c.l.b16 %v2238
        %v2495 = vunpack.c.l.b16 %v2239
        %v2496 = vunpack.c.l.b16 %v2240
        %v2497 = vunpack.c.l.b16 %v2241
        %v2498 = vunpack.c.l.b16 %v2242
        %v2499 = vunpack.c.l.b16 %v2243
        %v2500 = vunpack.c.l.b16 %v2244
        %v2501 = vunpack.c.l.b16 %v2245
        %v2502 = vunpack.c.l.b16 %v2246
        %v2503 = vunpack.c.l.b16 %v2247
        %v2504 = vunpack.c.l.b16 %v2248
        %v2505 = vunpack.c.l.b16 %v2249
        %v2506 = vunpack.c.l.b16 %v2250
        %v2507 = vpack.c.b16 %v2492, %v2491
        %v2508 = vpack.c.b16 %v2494, %v2493
        %v2509 = vpack.c.b16 %v2496, %v2495
        %v2510 = vpack.c.b16 %v2498, %v2497
        %v2511 = vpack.c.b16 %v2500, %v2499
        %v2512 = vpack.c.b16 %v2502, %v2501
        %v2513 = vpack.c.b16 %v2504, %v2503
        %v2514 = vpack.c.b16 %v2506, %v2505
        %2523 = vmatprep.subr.bf16.mxu0 0
        %2524 = vmatpush1.bf16.msra.mxu0 %v2507
        %2525 = vmatprep.subr.bf16.mxu0 0
        %2526 = vmatpush1.bf16.msra.mxu0 %v2508
        %2527 = vmatprep.subr.bf16.mxu0 0
        %2528 = vmatpush1.bf16.msra.mxu0 %v2509
        %2529 = vmatprep.subr.bf16.mxu0 0
        %2530 = vmatpush1.bf16.msra.mxu0 %v2510
        %2531 = vmatprep.subr.bf16.mxu0 0
        %2532 = vmatpush1.bf16.msra.mxu0 %v2511
        %2533 = vmatprep.subr.bf16.mxu0 0
        %2534 = vmatpush1.bf16.msra.mxu0 %v2512
        %2535 = vmatprep.subr.bf16.mxu0 0
        %2536 = vmatpush1.bf16.msra.mxu0 %v2513
        %2537 = vmatprep.subr.bf16.mxu0 0
        %2538 = vmatpush1.bf16.msra.mxu0 %v2514
        %2539 = vmatprep.subr.bf16.mxu0 0
        %2540 = vmatpush1.bf16.msra.mxu0 0
        %2541 = vmatprep.subr.bf16.mxu0 0
        %2542 = vmatpush1.bf16.msra.mxu0 0
        %2543 = vmatprep.subr.bf16.mxu0 0
        %2544 = vmatpush1.bf16.msra.mxu0 0
        %2545 = vmatprep.subr.bf16.mxu0 0
        %2546 = vmatpush1.bf16.msra.mxu0 0
        %2547 = vmatprep.subr.bf16.mxu0 0
        %2548 = vmatpush1.bf16.msra.mxu0 0
        %2549 = vmatprep.subr.bf16.mxu0 0
        %2550 = vmatpush1.bf16.msra.mxu0 0
        %2551 = vmatprep.subr.bf16.mxu0 0
        %2552 = vmatpush1.bf16.msra.mxu0 0
        %2553 = vmatprep.subr.bf16.mxu0 0
        %2554 = vmatpush1.bf16.msra.mxu0 0
        %2555 = vmatprep.mubr.bf16.mxu0 0
        %2556 = vmatmul.mubr.bf16.gmra.mrb[0].mxu0 %v2443
        %v2557 = vpop.f32.mrb[0].mxu0
        %v2558 = vadd.f32 0.0, %v2557
        %v2559 = vpop.f32.mrb[0].mxu0
        %v2560 = vpop.f32.mrb[0].mxu0
        %v2561 = vadd.f32 0.0, %v2560
        %v2562 = vpop.f32.mrb[0].mxu0
        %2563 = vmatprep.mubr.bf16.mxu0 0
        %2564 = vmatmul.mubr.bf16.gmra.mrb[0].mxu0 %v2444
        %v2565 = vpop.f32.mrb[0].mxu0
        %v2566 = vadd.f32 0.0, %v2565
        %v2567 = vpop.f32.mrb[0].mxu0
        %v2568 = vpop.f32.mrb[0].mxu0
        %v2569 = vadd.f32 0.0, %v2568
        %v2570 = vpop.f32.mrb[0].mxu0
        %2571 = vmatprep.mubr.bf16.mxu0 0
        %2572 = vmatmul.mubr.bf16.gmra.mrb[0].mxu0 %v2445
        %v2573 = vpop.f32.mrb[0].mxu0
        %v2574 = vadd.f32 0.0, %v2573
        %v2575 = vpop.f32.mrb[0].mxu0
        %v2576 = vpop.f32.mrb[0].mxu0
        %v2577 = vadd.f32 0.0, %v2576
        %v2578 = vpop.f32.mrb[0].mxu0
        %2579 = vmatprep.mubr.bf16.mxu0 0
        %2580 = vmatmul.mubr.bf16.gmra.mrb[0].mxu0 %v2446
        %v2581 = vpop.f32.mrb[0].mxu0
        %v2582 = vadd.f32 0.0, %v2581
        %v2583 = vpop.f32.mrb[0].mxu0
        %v2584 = vpop.f32.mrb[0].mxu0
        %v2585 = vadd.f32 0.0, %v2584
        %v2586 = vpop.f32.mrb[0].mxu0
        %2587 = vmatprep.mubr.bf16.mxu0 0
        %2588 = vmatmul.mubr.bf16.gmra.mrb[0].mxu0 %v2447
        %v2589 = vpop.f32.mrb[0].mxu0
        %v2590 = vadd.f32 0.0, %v2589
        %v2591 = vpop.f32.mrb[0].mxu0
        %v2592 = vpop.f32.mrb[0].mxu0
        %v2593 = vadd.f32 0.0, %v2592
        %v2594 = vpop.f32.mrb[0].mxu0
        %2595 = vmatprep.mubr.bf16.mxu0 0
        %2596 = vmatmul.mubr.bf16.gmra.mrb[0].mxu0 %v2448
        %v2597 = vpop.f32.mrb[0].mxu0
        %v2598 = vadd.f32 0.0, %v2597
        %v2599 = vpop.f32.mrb[0].mxu0
        %v2600 = vpop.f32.mrb[0].mxu0
        %v2601 = vadd.f32 0.0, %v2600
        %v2602 = vpop.f32.mrb[0].mxu0
        %2603 = vmatprep.mubr.bf16.mxu0 0
        %2604 = vmatmul.mubr.bf16.gmra.mrb[0].mxu0 %v2449
        %v2605 = vpop.f32.mrb[0].mxu0
        %v2606 = vadd.f32 0.0, %v2605
        %v2607 = vpop.f32.mrb[0].mxu0
        %v2608 = vpop.f32.mrb[0].mxu0
        %v2609 = vadd.f32 0.0, %v2608
        %v2610 = vpop.f32.mrb[0].mxu0
        %2611 = vmatprep.mubr.bf16.mxu0 0
        %2612 = vmatmul.mubr.bf16.gmra.mrb[0].mxu0 %v2450
        %v2613 = vpop.f32.mrb[0].mxu0
        %v2614 = vadd.f32 0.0, %v2613
        %v2615 = vpop.f32.mrb[0].mxu0
        %v2616 = vpop.f32.mrb[0].mxu0
        %v2617 = vadd.f32 0.0, %v2616
        %v2618 = vpop.f32.mrb[0].mxu0
        %2619 = vmatprep.mubr.bf16.mxu0 0
        %2620 = vmatmul.mubr.bf16.gmra.mrb[0].mxu0 %v2451
        %v2621 = vpop.f32.mrb[0].mxu0
        %v2622 = vadd.f32 0.0, %v2621
        %v2623 = vpop.f32.mrb[0].mxu0
        %v2624 = vpop.f32.mrb[0].mxu0
        %v2625 = vadd.f32 0.0, %v2624
        %v2626 = vpop.f32.mrb[0].mxu0
        %2627 = vmatprep.mubr.bf16.mxu0 0
        %2628 = vmatmul.mubr.bf16.gmra.mrb[0].mxu0 %v2452
        %v2629 = vpop.f32.mrb[0].mxu0
        %v2630 = vadd.f32 0.0, %v2629
        %v2631 = vpop.f32.mrb[0].mxu0
        %v2632 = vpop.f32.mrb[0].mxu0
        %v2633 = vadd.f32 0.0, %v2632
        %v2634 = vpop.f32.mrb[0].mxu0
        %2635 = vmatprep.mubr.bf16.mxu0 0
        %2636 = vmatmul.mubr.bf16.gmra.mrb[0].mxu0 %v2453
        %v2637 = vpop.f32.mrb[0].mxu0
        %v2638 = vadd.f32 0.0, %v2637
        %v2639 = vpop.f32.mrb[0].mxu0
        %v2640 = vpop.f32.mrb[0].mxu0
        %v2641 = vadd.f32 0.0, %v2640
        %v2642 = vpop.f32.mrb[0].mxu0
        %2643 = vmatprep.mubr.bf16.mxu0 0
        %2644 = vmatmul.mubr.bf16.gmra.mrb[0].mxu0 %v2454
        %v2645 = vpop.f32.mrb[0].mxu0
        %v2646 = vadd.f32 0.0, %v2645
        %v2647 = vpop.f32.mrb[0].mxu0
        %v2648 = vpop.f32.mrb[0].mxu0
        %v2649 = vadd.f32 0.0, %v2648
        %v2650 = vpop.f32.mrb[0].mxu0
        %2651 = vmatprep.mubr.bf16.mxu0 0
        %2652 = vmatmul.mubr.bf16.gmra.mrb[0].mxu0 %v2455
        %v2653 = vpop.f32.mrb[0].mxu0
        %v2654 = vadd.f32 0.0, %v2653
        %v2655 = vpop.f32.mrb[0].mxu0
        %v2656 = vpop.f32.mrb[0].mxu0
        %v2657 = vadd.f32 0.0, %v2656
        %v2658 = vpop.f32.mrb[0].mxu0
        %2659 = vmatprep.mubr.bf16.mxu0 0
        %2660 = vmatmul.mubr.bf16.gmra.mrb[0].mxu0 %v2456
        %v2661 = vpop.f32.mrb[0].mxu0
        %v2662 = vadd.f32 0.0, %v2661
        %v2663 = vpop.f32.mrb[0].mxu0
        %v2664 = vpop.f32.mrb[0].mxu0
        %v2665 = vadd.f32 0.0, %v2664
        %v2666 = vpop.f32.mrb[0].mxu0
        %2667 = vmatprep.mubr.bf16.mxu0 0
        %2668 = vmatmul.mubr.bf16.gmra.mrb[0].mxu0 %v2457
        %v2669 = vpop.f32.mrb[0].mxu0
        %v2670 = vadd.f32 0.0, %v2669
        %v2671 = vpop.f32.mrb[0].mxu0
        %v2672 = vpop.f32.mrb[0].mxu0
        %v2673 = vadd.f32 0.0, %v2672
        %v2674 = vpop.f32.mrb[0].mxu0
        %2675 = vmatprep.mubr.bf16.mxu0 0
        %2676 = vmatmul.mubr.bf16.gmra.mrb[0].mxu0 %v2458
        %v2677 = vpop.f32.mrb[0].mxu0
        %v2678 = vadd.f32 0.0, %v2677
        %v2679 = vpop.f32.mrb[0].mxu0
        %v2680 = vpop.f32.mrb[0].mxu0
        %v2681 = vadd.f32 0.0, %v2680
        %v2682 = vpop.f32.mrb[0].mxu0
        %2683 = vdwg.mxu0
        %v2684 = vadd.f32 %v2251, %v2558
        %v2685 = vadd.f32 %v2252, %v2561
        %v2686 = vadd.f32 %v2253, %v2566
        %v2687 = vadd.f32 %v2254, %v2569
        %v2688 = vadd.f32 %v2255, %v2574
        %v2689 = vadd.f32 %v2256, %v2577
        %v2690 = vadd.f32 %v2257, %v2582
        %v2691 = vadd.f32 %v2258, %v2585
        %v2692 = vadd.f32 %v2259, %v2590
        %v2693 = vadd.f32 %v2260, %v2593
        %v2694 = vadd.f32 %v2261, %v2598
        %v2695 = vadd.f32 %v2262, %v2601
        %v2696 = vadd.f32 %v2263, %v2606
        %v2697 = vadd.f32 %v2264, %v2609
        %v2698 = vadd.f32 %v2265, %v2614
        %v2699 = vadd.f32 %v2266, %v2617
        %v2700 = vadd.f32 %v2267, %v2622
        %v2701 = vadd.f32 %v2268, %v2625
        %v2702 = vadd.f32 %v2269, %v2630
        %v2703 = vadd.f32 %v2270, %v2633
        %v2704 = vadd.f32 %v2271, %v2638
        %v2705 = vadd.f32 %v2272, %v2641
        %v2706 = vadd.f32 %v2273, %v2646
        %v2707 = vadd.f32 %v2274, %v2649
        %v2708 = vadd.f32 %v2275, %v2654
        %v2709 = vadd.f32 %v2276, %v2657
        %v2710 = vadd.f32 %v2277, %v2662
        %v2711 = vadd.f32 %v2278, %v2665
        %v2712 = vadd.f32 %v2279, %v2670
        %v2713 = vadd.f32 %v2280, %v2673
        %v2714 = vadd.f32 %v2281, %v2678
        %v2715 = vadd.f32 %v2282, %v2681
        %2716 = vst [vmem:[%s222] sm:$0xff] %v2684
        %2717 = vst [vmem:[%s222 + $0x8] sm:$0xff] %v2685
        %2718 = vst [vmem:[%s222 + $0x10] sm:$0xff] %v2686
        %2719 = vst [vmem:[%s222 + $0x18] sm:$0xff] %v2687
        %2720 = vst [vmem:[%s222 + $0x20] sm:$0xff] %v2688
        %2721 = vst [vmem:[%s222 + $0x28] sm:$0xff] %v2689
        %2722 = vst [vmem:[%s222 + $0x30] sm:$0xff] %v2690
        %2723 = vst [vmem:[%s222 + $0x38] sm:$0xff] %v2691
        %2724 = vst [vmem:[%s222 + $0x40] sm:$0xff] %v2692
        %2725 = vst [vmem:[%s222 + $0x48] sm:$0xff] %v2693
        %2726 = vst [vmem:[%s222 + $0x50] sm:$0xff] %v2694
        %2727 = vst [vmem:[%s222 + $0x58] sm:$0xff] %v2695
        %2728 = vst [vmem:[%s222 + $0x60] sm:$0xff] %v2696
        %2729 = vst [vmem:[%s222 + $0x68] sm:$0xff] %v2697
        %2730 = vst [vmem:[%s222 + $0x70] sm:$0xff] %v2698
        %2731 = vst [vmem:[%s222 + $0x78] sm:$0xff] %v2699
        %2732 = vst [vmem:[%s222 + $0x80] sm:$0xff] %v2700
        %2733 = vst [vmem:[%s222 + $0x88] sm:$0xff] %v2701
        %2734 = vst [vmem:[%s222 + $0x90] sm:$0xff] %v2702
        %2735 = vst [vmem:[%s222 + $0x98] sm:$0xff] %v2703
        %2736 = vst [vmem:[%s222 + $0xa0] sm:$0xff] %v2704
        %2737 = vst [vmem:[%s222 + $0xa8] sm:$0xff] %v2705
        %2738 = vst [vmem:[%s222 + $0xb0] sm:$0xff] %v2706
        %2739 = vst [vmem:[%s222 + $0xb8] sm:$0xff] %v2707
        %2740 = vst [vmem:[%s222 + $0xc0] sm:$0xff] %v2708
        %2741 = vst [vmem:[%s222 + $0xc8] sm:$0xff] %v2709
        %2742 = vst [vmem:[%s222 + $0xd0] sm:$0xff] %v2710
        %2743 = vst [vmem:[%s222 + $0xd8] sm:$0xff] %v2711
        %2744 = vst [vmem:[%s222 + $0xe0] sm:$0xff] %v2712
        %2745 = vst [vmem:[%s222 + $0xe8] sm:$0xff] %v2713
        %2746 = vst [vmem:[%s222 + $0xf0] sm:$0xff] %v2714
        %2747 = vst [vmem:[%s222 + $0xf8] sm:$0xff] %v2715
        %s2748 = scalar_lea.vmem %s245, 320
        %v2749 = vld [vmem:[%s2748] sm:$0xf]
        %v2750 = vld [vmem:[%s2748 + $0x4] sm:$0xf]
        %v2751 = vld [vmem:[%s2748 + $0x8] sm:$0xf]
        %v2752 = vld [vmem:[%s2748 + $0xc] sm:$0xf]
        %v2753 = vld [vmem:[%s2748 + $0x10] sm:$0xf]
        %v2754 = vld [vmem:[%s2748 + $0x14] sm:$0xf]
        %v2755 = vld [vmem:[%s2748 + $0x18] sm:$0xf]
        %v2756 = vld [vmem:[%s2748 + $0x1c] sm:$0xf]
        %v2757 = vld [vmem:[%s2748 + $0x20] sm:$0xf]
        %v2758 = vld [vmem:[%s2748 + $0x24] sm:$0xf]
        %v2759 = vld [vmem:[%s2748 + $0x28] sm:$0xf]
        %v2760 = vld [vmem:[%s2748 + $0x2c] sm:$0xf]
        %v2761 = vld [vmem:[%s2748 + $0x30] sm:$0xf]
        %v2762 = vld [vmem:[%s2748 + $0x34] sm:$0xf]
        %v2763 = vld [vmem:[%s2748 + $0x38] sm:$0xf]
        %v2764 = vld [vmem:[%s2748 + $0x3c] sm:$0xf]
        %v2765 = vld [vmem:[%s222] sm:$0xff]
        %v2766 = vld [vmem:[%s222 + $0x8] sm:$0xff]
        %v2767 = vld [vmem:[%s222 + $0x10] sm:$0xff]
        %v2768 = vld [vmem:[%s222 + $0x18] sm:$0xff]
        %v2769 = vld [vmem:[%s222 + $0x20] sm:$0xff]
        %v2770 = vld [vmem:[%s222 + $0x28] sm:$0xff]
        %v2771 = vld [vmem:[%s222 + $0x30] sm:$0xff]
        %v2772 = vld [vmem:[%s222 + $0x38] sm:$0xff]
        %v2773 = vld [vmem:[%s222 + $0x40] sm:$0xff]
        %v2774 = vld [vmem:[%s222 + $0x48] sm:$0xff]
        %v2775 = vld [vmem:[%s222 + $0x50] sm:$0xff]
        %v2776 = vld [vmem:[%s222 + $0x58] sm:$0xff]
        %v2777 = vld [vmem:[%s222 + $0x60] sm:$0xff]
        %v2778 = vld [vmem:[%s222 + $0x68] sm:$0xff]
        %v2779 = vld [vmem:[%s222 + $0x70] sm:$0xff]
        %v2780 = vld [vmem:[%s222 + $0x78] sm:$0xff]
        %v2781 = vld [vmem:[%s222 + $0x80] sm:$0xff]
        %v2782 = vld [vmem:[%s222 + $0x88] sm:$0xff]
        %v2783 = vld [vmem:[%s222 + $0x90] sm:$0xff]
        %v2784 = vld [vmem:[%s222 + $0x98] sm:$0xff]
        %v2785 = vld [vmem:[%s222 + $0xa0] sm:$0xff]
        %v2786 = vld [vmem:[%s222 + $0xa8] sm:$0xff]
        %v2787 = vld [vmem:[%s222 + $0xb0] sm:$0xff]
        %v2788 = vld [vmem:[%s222 + $0xb8] sm:$0xff]
        %v2789 = vld [vmem:[%s222 + $0xc0] sm:$0xff]
        %v2790 = vld [vmem:[%s222 + $0xc8] sm:$0xff]
        %v2791 = vld [vmem:[%s222 + $0xd0] sm:$0xff]
        %v2792 = vld [vmem:[%s222 + $0xd8] sm:$0xff]
        %v2793 = vld [vmem:[%s222 + $0xe0] sm:$0xff]
        %v2794 = vld [vmem:[%s222 + $0xe8] sm:$0xff]
        %v2795 = vld [vmem:[%s222 + $0xf0] sm:$0xff]
        %v2796 = vld [vmem:[%s222 + $0xf8] sm:$0xff]
        %v2797 = vrot.slane %v1768, 6
        %v2798 = vrot.slane %v2797, 4
        %v2799 = vrot.slane %v1769, 6
        %v2800 = vsel %vm1317, %v2798, %v2799
        %v2801 = vrot.slane %v2799, 4
        %v2802 = vrot.slane %v1770, 6
        %v2803 = vsel %vm1317, %v2801, %v2802
        %v2804 = vrot.slane %v1771, 6
        %v2805 = vrot.slane %v2804, 4
        %v2806 = vrot.slane %v1772, 6
        %v2807 = vsel %vm1317, %v2805, %v2806
        %v2808 = vrot.slane %v2806, 4
        %v2809 = vrot.slane %v1773, 6
        %v2810 = vsel %vm1317, %v2808, %v2809
        %v2811 = vrot.slane %v1774, 6
        %v2812 = vrot.slane %v2811, 4
        %v2813 = vrot.slane %v1775, 6
        %v2814 = vsel %vm1317, %v2812, %v2813
        %v2815 = vrot.slane %v2813, 4
        %v2816 = vrot.slane %v1776, 6
        %v2817 = vsel %vm1317, %v2815, %v2816
        %v2818 = vrot.slane %v1777, 6
        %v2819 = vrot.slane %v2818, 4
        %v2820 = vrot.slane %v1778, 6
        %v2821 = vsel %vm1317, %v2819, %v2820
        %v2822 = vrot.slane %v2820, 4
        %v2823 = vrot.slane %v1779, 6
        %v2824 = vsel %vm1317, %v2822, %v2823
        %v2825 = vrot.slane %v1780, 6
        %v2826 = vrot.slane %v2825, 4
        %v2827 = vrot.slane %v1781, 6
        %v2828 = vsel %vm1317, %v2826, %v2827
        %v2829 = vrot.slane %v2827, 4
        %v2830 = vrot.slane %v1782, 6
        %v2831 = vsel %vm1317, %v2829, %v2830
        %v2832 = vrot.slane %v1783, 6
        %v2833 = vrot.slane %v2832, 4
        %v2834 = vrot.slane %v1784, 6
        %v2835 = vsel %vm1317, %v2833, %v2834
        %v2836 = vrot.slane %v2834, 4
        %v2837 = vrot.slane %v1785, 6
        %v2838 = vsel %vm1317, %v2836, %v2837
        %v2839 = vrot.slane %v1786, 6
        %v2840 = vrot.slane %v2839, 4
        %v2841 = vrot.slane %v1787, 6
        %v2842 = vsel %vm1317, %v2840, %v2841
        %v2843 = vrot.slane %v2841, 4
        %v2844 = vrot.slane %v1788, 6
        %v2845 = vsel %vm1317, %v2843, %v2844
        %v2846 = vrot.slane %v1789, 6
        %v2847 = vrot.slane %v2846, 4
        %v2848 = vrot.slane %v1790, 6
        %v2849 = vsel %vm1317, %v2847, %v2848
        %v2850 = vrot.slane %v2848, 4
        %v2851 = vrot.slane %v1791, 6
        %v2852 = vsel %vm1317, %v2850, %v2851
        %v2853 = vrot.slane %v1792, 6
        %v2854 = vrot.slane %v2853, 4
        %v2855 = vrot.slane %v1793, 6
        %v2856 = vsel %vm1317, %v2854, %v2855
        %v2857 = vrot.slane %v2855, 4
        %v2858 = vrot.slane %v1794, 6
        %v2859 = vsel %vm1317, %v2857, %v2858
        %v2860 = vrot.slane %v1795, 6
        %v2861 = vrot.slane %v2860, 4
        %v2862 = vrot.slane %v1796, 6
        %v2863 = vsel %vm1317, %v2861, %v2862
        %v2864 = vrot.slane %v2862, 4
        %v2865 = vrot.slane %v1797, 6
        %v2866 = vsel %vm1317, %v2864, %v2865
        %v2867 = vrot.slane %v1798, 6
        %v2868 = vrot.slane %v2867, 4
        %v2869 = vrot.slane %v1799, 6
        %v2870 = vsel %vm1317, %v2868, %v2869
        %v2871 = vrot.slane %v2869, 4
        %v2872 = vrot.slane %v1800, 6
        %v2873 = vsel %vm1317, %v2871, %v2872
        %v2874 = vrot.slane %v1801, 6
        %v2875 = vrot.slane %v2874, 4
        %v2876 = vrot.slane %v1802, 6
        %v2877 = vsel %vm1317, %v2875, %v2876
        %v2878 = vrot.slane %v2876, 4
        %v2879 = vrot.slane %v1803, 6
        %v2880 = vsel %vm1317, %v2878, %v2879
        %v2881 = vrot.slane %v1804, 6
        %v2882 = vrot.slane %v2881, 4
        %v2883 = vrot.slane %v1805, 6
        %v2884 = vsel %vm1317, %v2882, %v2883
        %v2885 = vrot.slane %v2883, 4
        %v2886 = vrot.slane %v1806, 6
        %v2887 = vsel %vm1317, %v2885, %v2886
        %v2888 = vrot.slane %v1807, 6
        %v2889 = vrot.slane %v2888, 4
        %v2890 = vrot.slane %v1808, 6
        %v2891 = vsel %vm1317, %v2889, %v2890
        %v2892 = vrot.slane %v2890, 4
        %v2893 = vrot.slane %v1809, 6
        %v2894 = vsel %vm1317, %v2892, %v2893
        %v2895 = vrot.slane %v1810, 6
        %v2896 = vrot.slane %v2895, 4
        %v2897 = vrot.slane %v1811, 6
        %v2898 = vsel %vm1317, %v2896, %v2897
        %v2899 = vrot.slane %v2897, 4
        %v2900 = vrot.slane %v1812, 6
        %v2901 = vsel %vm1317, %v2899, %v2900
        %v2902 = vrot.slane %v1813, 6
        %v2903 = vrot.slane %v2902, 4
        %v2904 = vrot.slane %v1814, 6
        %v2905 = vsel %vm1317, %v2903, %v2904
        %v2906 = vrot.slane %v2904, 4
        %v2907 = vrot.slane %v1815, 6
        %v2908 = vsel %vm1317, %v2906, %v2907
        %v2909 = vunpack.c.l.b16 %v2800
        %v2910 = vunpack.c.l.b16 %v2803
        %v2911 = vunpack.c.l.b16 %v2807
        %v2912 = vunpack.c.l.b16 %v2810
        %v2913 = vunpack.c.l.b16 %v2814
        %v2914 = vunpack.c.l.b16 %v2817
        %v2915 = vunpack.c.l.b16 %v2821
        %v2916 = vunpack.c.l.b16 %v2824
        %v2917 = vunpack.c.l.b16 %v2828
        %v2918 = vunpack.c.l.b16 %v2831
        %v2919 = vunpack.c.l.b16 %v2835
        %v2920 = vunpack.c.l.b16 %v2838
        %v2921 = vunpack.c.l.b16 %v2842
        %v2922 = vunpack.c.l.b16 %v2845
        %v2923 = vunpack.c.l.b16 %v2849
        %v2924 = vunpack.c.l.b16 %v2852
        %v2925 = vunpack.c.l.b16 %v2856
        %v2926 = vunpack.c.l.b16 %v2859
        %v2927 = vunpack.c.l.b16 %v2863
        %v2928 = vunpack.c.l.b16 %v2866
        %v2929 = vunpack.c.l.b16 %v2870
        %v2930 = vunpack.c.l.b16 %v2873
        %v2931 = vunpack.c.l.b16 %v2877
        %v2932 = vunpack.c.l.b16 %v2880
        %v2933 = vunpack.c.l.b16 %v2884
        %v2934 = vunpack.c.l.b16 %v2887
        %v2935 = vunpack.c.l.b16 %v2891
        %v2936 = vunpack.c.l.b16 %v2894
        %v2937 = vunpack.c.l.b16 %v2898
        %v2938 = vunpack.c.l.b16 %v2901
        %v2939 = vunpack.c.l.b16 %v2905
        %v2940 = vunpack.c.l.b16 %v2908
        %v2941 = vpack.c.b16 %v2910, %v2909
        %v2942 = vpack.c.b16 %v2912, %v2911
        %v2943 = vpack.c.b16 %v2914, %v2913
        %v2944 = vpack.c.b16 %v2916, %v2915
        %v2945 = vpack.c.b16 %v2918, %v2917
        %v2946 = vpack.c.b16 %v2920, %v2919
        %v2947 = vpack.c.b16 %v2922, %v2921
        %v2948 = vpack.c.b16 %v2924, %v2923
        %v2949 = vpack.c.b16 %v2926, %v2925
        %v2950 = vpack.c.b16 %v2928, %v2927
        %v2951 = vpack.c.b16 %v2930, %v2929
        %v2952 = vpack.c.b16 %v2932, %v2931
        %v2953 = vpack.c.b16 %v2934, %v2933
        %v2954 = vpack.c.b16 %v2936, %v2935
        %v2955 = vpack.c.b16 %v2938, %v2937
        %v2956 = vpack.c.b16 %v2940, %v2939
        %v2989 = vunpack.c.l.b16 %v2749
        %v2990 = vunpack.c.l.b16 %v2750
        %v2991 = vunpack.c.l.b16 %v2751
        %v2992 = vunpack.c.l.b16 %v2752
        %v2993 = vunpack.c.l.b16 %v2753
        %v2994 = vunpack.c.l.b16 %v2754
        %v2995 = vunpack.c.l.b16 %v2755
        %v2996 = vunpack.c.l.b16 %v2756
        %v2997 = vunpack.c.l.b16 %v2757
        %v2998 = vunpack.c.l.b16 %v2758
        %v2999 = vunpack.c.l.b16 %v2759
        %v3000 = vunpack.c.l.b16 %v2760
        %v3001 = vunpack.c.l.b16 %v2761
        %v3002 = vunpack.c.l.b16 %v2762
        %v3003 = vunpack.c.l.b16 %v2763
        %v3004 = vunpack.c.l.b16 %v2764
        %v3005 = vpack.c.b16 %v2990, %v2989
        %v3006 = vpack.c.b16 %v2992, %v2991
        %v3007 = vpack.c.b16 %v2994, %v2993
        %v3008 = vpack.c.b16 %v2996, %v2995
        %v3009 = vpack.c.b16 %v2998, %v2997
        %v3010 = vpack.c.b16 %v3000, %v2999
        %v3011 = vpack.c.b16 %v3002, %v3001
        %v3012 = vpack.c.b16 %v3004, %v3003
        %3021 = vmatprep.subr.bf16.mxu0 0
        %3022 = vmatpush1.bf16.msra.mxu0 %v3005
        %3023 = vmatprep.subr.bf16.mxu0 0
        %3024 = vmatpush1.bf16.msra.mxu0 %v3006
        %3025 = vmatprep.subr.bf16.mxu0 0
        %3026 = vmatpush1.bf16.msra.mxu0 %v3007
        %3027 = vmatprep.subr.bf16.mxu0 0
        %3028 = vmatpush1.bf16.msra.mxu0 %v3008
        %3029 = vmatprep.subr.bf16.mxu0 0
        %3030 = vmatpush1.bf16.msra.mxu0 %v3009
        %3031 = vmatprep.subr.bf16.mxu0 0
        %3032 = vmatpush1.bf16.msra.mxu0 %v3010
        %3033 = vmatprep.subr.bf16.mxu0 0
        %3034 = vmatpush1.bf16.msra.mxu0 %v3011
        %3035 = vmatprep.subr.bf16.mxu0 0
        %3036 = vmatpush1.bf16.msra.mxu0 %v3012
        %3037 = vmatprep.subr.bf16.mxu0 0
        %3038 = vmatpush1.bf16.msra.mxu0 0
        %3039 = vmatprep.subr.bf16.mxu0 0
        %3040 = vmatpush1.bf16.msra.mxu0 0
        %3041 = vmatprep.subr.bf16.mxu0 0
        %3042 = vmatpush1.bf16.msra.mxu0 0
        %3043 = vmatprep.subr.bf16.mxu0 0
        %3044 = vmatpush1.bf16.msra.mxu0 0
        %3045 = vmatprep.subr.bf16.mxu0 0
        %3046 = vmatpush1.bf16.msra.mxu0 0
        %3047 = vmatprep.subr.bf16.mxu0 0
        %3048 = vmatpush1.bf16.msra.mxu0 0
        %3049 = vmatprep.subr.bf16.mxu0 0
        %3050 = vmatpush1.bf16.msra.mxu0 0
        %3051 = vmatprep.subr.bf16.mxu0 0
        %3052 = vmatpush1.bf16.msra.mxu0 0
        %3053 = vmatprep.mubr.bf16.mxu0 0
        %3054 = vmatmul.mubr.bf16.gmra.mrb[0].mxu0 %v2941
        %v3055 = vpop.f32.mrb[0].mxu0
        %v3056 = vadd.f32 0.0, %v3055
        %v3057 = vpop.f32.mrb[0].mxu0
        %v3058 = vpop.f32.mrb[0].mxu0
        %v3059 = vadd.f32 0.0, %v3058
        %v3060 = vpop.f32.mrb[0].mxu0
        %3061 = vmatprep.mubr.bf16.mxu0 0
        %3062 = vmatmul.mubr.bf16.gmra.mrb[0].mxu0 %v2942
        %v3063 = vpop.f32.mrb[0].mxu0
        %v3064 = vadd.f32 0.0, %v3063
        %v3065 = vpop.f32.mrb[0].mxu0
        %v3066 = vpop.f32.mrb[0].mxu0
        %v3067 = vadd.f32 0.0, %v3066
        %v3068 = vpop.f32.mrb[0].mxu0
        %3069 = vmatprep.mubr.bf16.mxu0 0
        %3070 = vmatmul.mubr.bf16.gmra.mrb[0].mxu0 %v2943
        %v3071 = vpop.f32.mrb[0].mxu0
        %v3072 = vadd.f32 0.0, %v3071
        %v3073 = vpop.f32.mrb[0].mxu0
        %v3074 = vpop.f32.mrb[0].mxu0
        %v3075 = vadd.f32 0.0, %v3074
        %v3076 = vpop.f32.mrb[0].mxu0
        %3077 = vmatprep.mubr.bf16.mxu0 0
        %3078 = vmatmul.mubr.bf16.gmra.mrb[0].mxu0 %v2944
        %v3079 = vpop.f32.mrb[0].mxu0
        %v3080 = vadd.f32 0.0, %v3079
        %v3081 = vpop.f32.mrb[0].mxu0
        %v3082 = vpop.f32.mrb[0].mxu0
        %v3083 = vadd.f32 0.0, %v3082
        %v3084 = vpop.f32.mrb[0].mxu0
        %3085 = vmatprep.mubr.bf16.mxu0 0
        %3086 = vmatmul.mubr.bf16.gmra.mrb[0].mxu0 %v2945
        %v3087 = vpop.f32.mrb[0].mxu0
        %v3088 = vadd.f32 0.0, %v3087
        %v3089 = vpop.f32.mrb[0].mxu0
        %v3090 = vpop.f32.mrb[0].mxu0
        %v3091 = vadd.f32 0.0, %v3090
        %v3092 = vpop.f32.mrb[0].mxu0
        %3093 = vmatprep.mubr.bf16.mxu0 0
        %3094 = vmatmul.mubr.bf16.gmra.mrb[0].mxu0 %v2946
        %v3095 = vpop.f32.mrb[0].mxu0
        %v3096 = vadd.f32 0.0, %v3095
        %v3097 = vpop.f32.mrb[0].mxu0
        %v3098 = vpop.f32.mrb[0].mxu0
        %v3099 = vadd.f32 0.0, %v3098
        %v3100 = vpop.f32.mrb[0].mxu0
        %3101 = vmatprep.mubr.bf16.mxu0 0
        %3102 = vmatmul.mubr.bf16.gmra.mrb[0].mxu0 %v2947
        %v3103 = vpop.f32.mrb[0].mxu0
        %v3104 = vadd.f32 0.0, %v3103
        %v3105 = vpop.f32.mrb[0].mxu0
        %v3106 = vpop.f32.mrb[0].mxu0
        %v3107 = vadd.f32 0.0, %v3106
        %v3108 = vpop.f32.mrb[0].mxu0
        %3109 = vmatprep.mubr.bf16.mxu0 0
        %3110 = vmatmul.mubr.bf16.gmra.mrb[0].mxu0 %v2948
        %v3111 = vpop.f32.mrb[0].mxu0
        %v3112 = vadd.f32 0.0, %v3111
        %v3113 = vpop.f32.mrb[0].mxu0
        %v3114 = vpop.f32.mrb[0].mxu0
        %v3115 = vadd.f32 0.0, %v3114
        %v3116 = vpop.f32.mrb[0].mxu0
        %3117 = vmatprep.mubr.bf16.mxu0 0
        %3118 = vmatmul.mubr.bf16.gmra.mrb[0].mxu0 %v2949
        %v3119 = vpop.f32.mrb[0].mxu0
        %v3120 = vadd.f32 0.0, %v3119
        %v3121 = vpop.f32.mrb[0].mxu0
        %v3122 = vpop.f32.mrb[0].mxu0
        %v3123 = vadd.f32 0.0, %v3122
        %v3124 = vpop.f32.mrb[0].mxu0
        %3125 = vmatprep.mubr.bf16.mxu0 0
        %3126 = vmatmul.mubr.bf16.gmra.mrb[0].mxu0 %v2950
        %v3127 = vpop.f32.mrb[0].mxu0
        %v3128 = vadd.f32 0.0, %v3127
        %v3129 = vpop.f32.mrb[0].mxu0
        %v3130 = vpop.f32.mrb[0].mxu0
        %v3131 = vadd.f32 0.0, %v3130
        %v3132 = vpop.f32.mrb[0].mxu0
        %3133 = vmatprep.mubr.bf16.mxu0 0
        %3134 = vmatmul.mubr.bf16.gmra.mrb[0].mxu0 %v2951
        %v3135 = vpop.f32.mrb[0].mxu0
        %v3136 = vadd.f32 0.0, %v3135
        %v3137 = vpop.f32.mrb[0].mxu0
        %v3138 = vpop.f32.mrb[0].mxu0
        %v3139 = vadd.f32 0.0, %v3138
        %v3140 = vpop.f32.mrb[0].mxu0
        %3141 = vmatprep.mubr.bf16.mxu0 0
        %3142 = vmatmul.mubr.bf16.gmra.mrb[0].mxu0 %v2952
        %v3143 = vpop.f32.mrb[0].mxu0
        %v3144 = vadd.f32 0.0, %v3143
        %v3145 = vpop.f32.mrb[0].mxu0
        %v3146 = vpop.f32.mrb[0].mxu0
        %v3147 = vadd.f32 0.0, %v3146
        %v3148 = vpop.f32.mrb[0].mxu0
        %3149 = vmatprep.mubr.bf16.mxu0 0
        %3150 = vmatmul.mubr.bf16.gmra.mrb[0].mxu0 %v2953
        %v3151 = vpop.f32.mrb[0].mxu0
        %v3152 = vadd.f32 0.0, %v3151
        %v3153 = vpop.f32.mrb[0].mxu0
        %v3154 = vpop.f32.mrb[0].mxu0
        %v3155 = vadd.f32 0.0, %v3154
        %v3156 = vpop.f32.mrb[0].mxu0
        %3157 = vmatprep.mubr.bf16.mxu0 0
        %3158 = vmatmul.mubr.bf16.gmra.mrb[0].mxu0 %v2954
        %v3159 = vpop.f32.mrb[0].mxu0
        %v3160 = vadd.f32 0.0, %v3159
        %v3161 = vpop.f32.mrb[0].mxu0
        %v3162 = vpop.f32.mrb[0].mxu0
        %v3163 = vadd.f32 0.0, %v3162
        %v3164 = vpop.f32.mrb[0].mxu0
        %3165 = vmatprep.mubr.bf16.mxu0 0
        %3166 = vmatmul.mubr.bf16.gmra.mrb[0].mxu0 %v2955
        %v3167 = vpop.f32.mrb[0].mxu0
        %v3168 = vadd.f32 0.0, %v3167
        %v3169 = vpop.f32.mrb[0].mxu0
        %v3170 = vpop.f32.mrb[0].mxu0
        %v3171 = vadd.f32 0.0, %v3170
        %v3172 = vpop.f32.mrb[0].mxu0
        %3173 = vmatprep.mubr.bf16.mxu0 0
        %3174 = vmatmul.mubr.bf16.gmra.mrb[0].mxu0 %v2956
        %v3175 = vpop.f32.mrb[0].mxu0
        %v3176 = vadd.f32 0.0, %v3175
        %v3177 = vpop.f32.mrb[0].mxu0
        %v3178 = vpop.f32.mrb[0].mxu0
        %v3179 = vadd.f32 0.0, %v3178
        %v3180 = vpop.f32.mrb[0].mxu0
        %3181 = vdwg.mxu0
        %v3182 = vadd.f32 %v2765, %v3056
        %v3183 = vadd.f32 %v2766, %v3059
        %v3184 = vadd.f32 %v2767, %v3064
        %v3185 = vadd.f32 %v2768, %v3067
        %v3186 = vadd.f32 %v2769, %v3072
        %v3187 = vadd.f32 %v2770, %v3075
        %v3188 = vadd.f32 %v2771, %v3080
        %v3189 = vadd.f32 %v2772, %v3083
        %v3190 = vadd.f32 %v2773, %v3088
        %v3191 = vadd.f32 %v2774, %v3091
        %v3192 = vadd.f32 %v2775, %v3096
        %v3193 = vadd.f32 %v2776, %v3099
        %v3194 = vadd.f32 %v2777, %v3104
        %v3195 = vadd.f32 %v2778, %v3107
        %v3196 = vadd.f32 %v2779, %v3112
        %v3197 = vadd.f32 %v2780, %v3115
        %v3198 = vadd.f32 %v2781, %v3120
        %v3199 = vadd.f32 %v2782, %v3123
        %v3200 = vadd.f32 %v2783, %v3128
        %v3201 = vadd.f32 %v2784, %v3131
        %v3202 = vadd.f32 %v2785, %v3136
        %v3203 = vadd.f32 %v2786, %v3139
        %v3204 = vadd.f32 %v2787, %v3144
        %v3205 = vadd.f32 %v2788, %v3147
        %v3206 = vadd.f32 %v2789, %v3152
        %v3207 = vadd.f32 %v2790, %v3155
        %v3208 = vadd.f32 %v2791, %v3160
        %v3209 = vadd.f32 %v2792, %v3163
        %v3210 = vadd.f32 %v2793, %v3168
        %v3211 = vadd.f32 %v2794, %v3171
        %v3212 = vadd.f32 %v2795, %v3176
        %v3213 = vadd.f32 %v2796, %v3179
        %3214 = vst [vmem:[%s222] sm:$0xff] %v3182
        %3215 = vst [vmem:[%s222 + $0x8] sm:$0xff] %v3183
        %3216 = vst [vmem:[%s222 + $0x10] sm:$0xff] %v3184
        %3217 = vst [vmem:[%s222 + $0x18] sm:$0xff] %v3185
        %3218 = vst [vmem:[%s222 + $0x20] sm:$0xff] %v3186
        %3219 = vst [vmem:[%s222 + $0x28] sm:$0xff] %v3187
        %3220 = vst [vmem:[%s222 + $0x30] sm:$0xff] %v3188
        %3221 = vst [vmem:[%s222 + $0x38] sm:$0xff] %v3189
        %3222 = vst [vmem:[%s222 + $0x40] sm:$0xff] %v3190
        %3223 = vst [vmem:[%s222 + $0x48] sm:$0xff] %v3191
        %3224 = vst [vmem:[%s222 + $0x50] sm:$0xff] %v3192
        %3225 = vst [vmem:[%s222 + $0x58] sm:$0xff] %v3193
        %3226 = vst [vmem:[%s222 + $0x60] sm:$0xff] %v3194
        %3227 = vst [vmem:[%s222 + $0x68] sm:$0xff] %v3195
        %3228 = vst [vmem:[%s222 + $0x70] sm:$0xff] %v3196
        %3229 = vst [vmem:[%s222 + $0x78] sm:$0xff] %v3197
        %3230 = vst [vmem:[%s222 + $0x80] sm:$0xff] %v3198
        %3231 = vst [vmem:[%s222 + $0x88] sm:$0xff] %v3199
        %3232 = vst [vmem:[%s222 + $0x90] sm:$0xff] %v3200
        %3233 = vst [vmem:[%s222 + $0x98] sm:$0xff] %v3201
        %3234 = vst [vmem:[%s222 + $0xa0] sm:$0xff] %v3202
        %3235 = vst [vmem:[%s222 + $0xa8] sm:$0xff] %v3203
        %3236 = vst [vmem:[%s222 + $0xb0] sm:$0xff] %v3204
        %3237 = vst [vmem:[%s222 + $0xb8] sm:$0xff] %v3205
        %3238 = vst [vmem:[%s222 + $0xc0] sm:$0xff] %v3206
        %3239 = vst [vmem:[%s222 + $0xc8] sm:$0xff] %v3207
        %3240 = vst [vmem:[%s222 + $0xd0] sm:$0xff] %v3208
        %3241 = vst [vmem:[%s222 + $0xd8] sm:$0xff] %v3209
        %3242 = vst [vmem:[%s222 + $0xe0] sm:$0xff] %v3210
        %3243 = vst [vmem:[%s222 + $0xe8] sm:$0xff] %v3211
        %3244 = vst [vmem:[%s222 + $0xf0] sm:$0xff] %v3212
        %3245 = vst [vmem:[%s222 + $0xf8] sm:$0xff] %v3213
        %s3246 = scalar_lea.vmem %s237, 48
        %v3247 = vld [vmem:[%s3246] sm:$0xf]
        %v3248 = vld [vmem:[%s3246 + $0x4] sm:$0xf]
        %v3249 = vld [vmem:[%s3246 + $0x8] sm:$0x3]
        %v3250 = vld [vmem:[%s3246 + $0xc] sm:$0xf]
        %v3251 = vld [vmem:[%s3246 + $0x10] sm:$0xf]
        %v3252 = vld [vmem:[%s3246 + $0x14] sm:$0x3]
        %v3253 = vld [vmem:[%s3246 + $0x18] sm:$0xf]
        %v3254 = vld [vmem:[%s3246 + $0x1c] sm:$0xf]
        %v3255 = vld [vmem:[%s3246 + $0x20] sm:$0x3]
        %v3256 = vld [vmem:[%s3246 + $0x24] sm:$0xf]
        %v3257 = vld [vmem:[%s3246 + $0x28] sm:$0xf]
        %v3258 = vld [vmem:[%s3246 + $0x2c] sm:$0x3]
        %v3259 = vld [vmem:[%s3246 + $0x30] sm:$0xf]
        %v3260 = vld [vmem:[%s3246 + $0x34] sm:$0xf]
        %v3261 = vld [vmem:[%s3246 + $0x38] sm:$0x3]
        %v3262 = vld [vmem:[%s3246 + $0x3c] sm:$0xf]
        %v3263 = vld [vmem:[%s3246 + $0x40] sm:$0xf]
        %v3264 = vld [vmem:[%s3246 + $0x44] sm:$0x3]
        %v3265 = vld [vmem:[%s3246 + $0x48] sm:$0xf]
        %v3266 = vld [vmem:[%s3246 + $0x4c] sm:$0xf]
        %v3267 = vld [vmem:[%s3246 + $0x50] sm:$0x3]
        %v3268 = vld [vmem:[%s3246 + $0x54] sm:$0xf]
        %v3269 = vld [vmem:[%s3246 + $0x58] sm:$0xf]
        %v3270 = vld [vmem:[%s3246 + $0x5c] sm:$0x3]
        %v3271 = vld [vmem:[%s3246 + $0x60] sm:$0xf]
        %v3272 = vld [vmem:[%s3246 + $0x64] sm:$0xf]
        %v3273 = vld [vmem:[%s3246 + $0x68] sm:$0x3]
        %v3274 = vld [vmem:[%s3246 + $0x6c] sm:$0xf]
        %v3275 = vld [vmem:[%s3246 + $0x70] sm:$0xf]
        %v3276 = vld [vmem:[%s3246 + $0x74] sm:$0x3]
        %v3277 = vld [vmem:[%s3246 + $0x78] sm:$0xf]
        %v3278 = vld [vmem:[%s3246 + $0x7c] sm:$0xf]
        %v3279 = vld [vmem:[%s3246 + $0x80] sm:$0x3]
        %v3280 = vld [vmem:[%s3246 + $0x84] sm:$0xf]
        %v3281 = vld [vmem:[%s3246 + $0x88] sm:$0xf]
        %v3282 = vld [vmem:[%s3246 + $0x8c] sm:$0x3]
        %v3283 = vld [vmem:[%s3246 + $0x90] sm:$0xf]
        %v3284 = vld [vmem:[%s3246 + $0x94] sm:$0xf]
        %v3285 = vld [vmem:[%s3246 + $0x98] sm:$0x3]
        %v3286 = vld [vmem:[%s3246 + $0x9c] sm:$0xf]
        %v3287 = vld [vmem:[%s3246 + $0xa0] sm:$0xf]
        %v3288 = vld [vmem:[%s3246 + $0xa4] sm:$0x3]
        %v3289 = vld [vmem:[%s3246 + $0xa8] sm:$0xf]
        %v3290 = vld [vmem:[%s3246 + $0xac] sm:$0xf]
        %v3291 = vld [vmem:[%s3246 + $0xb0] sm:$0x3]
        %v3292 = vld [vmem:[%s3246 + $0xb4] sm:$0xf]
        %v3293 = vld [vmem:[%s3246 + $0xb8] sm:$0xf]
        %v3294 = vld [vmem:[%s3246 + $0xbc] sm:$0x3]
        %s3295 = scalar_lea.vmem %s245, 384
        %v3296 = vld [vmem:[%s3295] sm:$0xf]
        %v3297 = vld [vmem:[%s3295 + $0x4] sm:$0xf]
        %v3298 = vld [vmem:[%s3295 + $0x8] sm:$0xf]
        %v3299 = vld [vmem:[%s3295 + $0xc] sm:$0xf]
        %v3300 = vld [vmem:[%s3295 + $0x10] sm:$0xf]
        %v3301 = vld [vmem:[%s3295 + $0x14] sm:$0xf]
        %v3302 = vld [vmem:[%s3295 + $0x18] sm:$0xf]
        %v3303 = vld [vmem:[%s3295 + $0x1c] sm:$0xf]
        %v3304 = vld [vmem:[%s3295 + $0x20] sm:$0xf]
        %v3305 = vld [vmem:[%s3295 + $0x24] sm:$0xf]
        %v3306 = vld [vmem:[%s3295 + $0x28] sm:$0xf]
        %v3307 = vld [vmem:[%s3295 + $0x2c] sm:$0xf]
        %v3308 = vld [vmem:[%s3295 + $0x30] sm:$0xf]
        %v3309 = vld [vmem:[%s3295 + $0x34] sm:$0xf]
        %v3310 = vld [vmem:[%s3295 + $0x38] sm:$0xf]
        %v3311 = vld [vmem:[%s3295 + $0x3c] sm:$0xf]
        %v3312 = vld [vmem:[%s222] sm:$0xff]
        %v3313 = vld [vmem:[%s222 + $0x8] sm:$0xff]
        %v3314 = vld [vmem:[%s222 + $0x10] sm:$0xff]
        %v3315 = vld [vmem:[%s222 + $0x18] sm:$0xff]
        %v3316 = vld [vmem:[%s222 + $0x20] sm:$0xff]
        %v3317 = vld [vmem:[%s222 + $0x28] sm:$0xff]
        %v3318 = vld [vmem:[%s222 + $0x30] sm:$0xff]
        %v3319 = vld [vmem:[%s222 + $0x38] sm:$0xff]
        %v3320 = vld [vmem:[%s222 + $0x40] sm:$0xff]
        %v3321 = vld [vmem:[%s222 + $0x48] sm:$0xff]
        %v3322 = vld [vmem:[%s222 + $0x50] sm:$0xff]
        %v3323 = vld [vmem:[%s222 + $0x58] sm:$0xff]
        %v3324 = vld [vmem:[%s222 + $0x60] sm:$0xff]
        %v3325 = vld [vmem:[%s222 + $0x68] sm:$0xff]
        %v3326 = vld [vmem:[%s222 + $0x70] sm:$0xff]
        %v3327 = vld [vmem:[%s222 + $0x78] sm:$0xff]
        %v3328 = vld [vmem:[%s222 + $0x80] sm:$0xff]
        %v3329 = vld [vmem:[%s222 + $0x88] sm:$0xff]
        %v3330 = vld [vmem:[%s222 + $0x90] sm:$0xff]
        %v3331 = vld [vmem:[%s222 + $0x98] sm:$0xff]
        %v3332 = vld [vmem:[%s222 + $0xa0] sm:$0xff]
        %v3333 = vld [vmem:[%s222 + $0xa8] sm:$0xff]
        %v3334 = vld [vmem:[%s222 + $0xb0] sm:$0xff]
        %v3335 = vld [vmem:[%s222 + $0xb8] sm:$0xff]
        %v3336 = vld [vmem:[%s222 + $0xc0] sm:$0xff]
        %v3337 = vld [vmem:[%s222 + $0xc8] sm:$0xff]
        %v3338 = vld [vmem:[%s222 + $0xd0] sm:$0xff]
        %v3339 = vld [vmem:[%s222 + $0xd8] sm:$0xff]
        %v3340 = vld [vmem:[%s222 + $0xe0] sm:$0xff]
        %v3341 = vld [vmem:[%s222 + $0xe8] sm:$0xff]
        %v3342 = vld [vmem:[%s222 + $0xf0] sm:$0xff]
        %v3343 = vld [vmem:[%s222 + $0xf8] sm:$0xff]
        %v3376 = vunpack.c.l.b16 %v3247
        %v3377 = vunpack.c.l.b16 %v3248
        %v3378 = vunpack.c.l.b16 %v3250
        %v3379 = vunpack.c.l.b16 %v3251
        %v3380 = vunpack.c.l.b16 %v3253
        %v3381 = vunpack.c.l.b16 %v3254
        %v3382 = vunpack.c.l.b16 %v3256
        %v3383 = vunpack.c.l.b16 %v3257
        %v3384 = vunpack.c.l.b16 %v3259
        %v3385 = vunpack.c.l.b16 %v3260
        %v3386 = vunpack.c.l.b16 %v3262
        %v3387 = vunpack.c.l.b16 %v3263
        %v3388 = vunpack.c.l.b16 %v3265
        %v3389 = vunpack.c.l.b16 %v3266
        %v3390 = vunpack.c.l.b16 %v3268
        %v3391 = vunpack.c.l.b16 %v3269
        %v3392 = vunpack.c.l.b16 %v3271
        %v3393 = vunpack.c.l.b16 %v3272
        %v3394 = vunpack.c.l.b16 %v3274
        %v3395 = vunpack.c.l.b16 %v3275
        %v3396 = vunpack.c.l.b16 %v3277
        %v3397 = vunpack.c.l.b16 %v3278
        %v3398 = vunpack.c.l.b16 %v3280
        %v3399 = vunpack.c.l.b16 %v3281
        %v3400 = vunpack.c.l.b16 %v3283
        %v3401 = vunpack.c.l.b16 %v3284
        %v3402 = vunpack.c.l.b16 %v3286
        %v3403 = vunpack.c.l.b16 %v3287
        %v3404 = vunpack.c.l.b16 %v3289
        %v3405 = vunpack.c.l.b16 %v3290
        %v3406 = vunpack.c.l.b16 %v3292
        %v3407 = vunpack.c.l.b16 %v3293
        %v3408 = vpack.c.b16 %v3377, %v3376
        %v3409 = vpack.c.b16 %v3379, %v3378
        %v3410 = vpack.c.b16 %v3381, %v3380
        %v3411 = vpack.c.b16 %v3383, %v3382
        %v3412 = vpack.c.b16 %v3385, %v3384
        %v3413 = vpack.c.b16 %v3387, %v3386
        %v3414 = vpack.c.b16 %v3389, %v3388
        %v3415 = vpack.c.b16 %v3391, %v3390
        %v3416 = vpack.c.b16 %v3393, %v3392
        %v3417 = vpack.c.b16 %v3395, %v3394
        %v3418 = vpack.c.b16 %v3397, %v3396
        %v3419 = vpack.c.b16 %v3399, %v3398
        %v3420 = vpack.c.b16 %v3401, %v3400
        %v3421 = vpack.c.b16 %v3403, %v3402
        %v3422 = vpack.c.b16 %v3405, %v3404
        %v3423 = vpack.c.b16 %v3407, %v3406
        %v3456 = vunpack.c.l.b16 %v3296
        %v3457 = vunpack.c.l.b16 %v3297
        %v3458 = vunpack.c.l.b16 %v3298
        %v3459 = vunpack.c.l.b16 %v3299
        %v3460 = vunpack.c.l.b16 %v3300
        %v3461 = vunpack.c.l.b16 %v3301
        %v3462 = vunpack.c.l.b16 %v3302
        %v3463 = vunpack.c.l.b16 %v3303
        %v3464 = vunpack.c.l.b16 %v3304
        %v3465 = vunpack.c.l.b16 %v3305
        %v3466 = vunpack.c.l.b16 %v3306
        %v3467 = vunpack.c.l.b16 %v3307
        %v3468 = vunpack.c.l.b16 %v3308
        %v3469 = vunpack.c.l.b16 %v3309
        %v3470 = vunpack.c.l.b16 %v3310
        %v3471 = vunpack.c.l.b16 %v3311
        %v3472 = vpack.c.b16 %v3457, %v3456
        %v3473 = vpack.c.b16 %v3459, %v3458
        %v3474 = vpack.c.b16 %v3461, %v3460
        %v3475 = vpack.c.b16 %v3463, %v3462
        %v3476 = vpack.c.b16 %v3465, %v3464
        %v3477 = vpack.c.b16 %v3467, %v3466
        %v3478 = vpack.c.b16 %v3469, %v3468
        %v3479 = vpack.c.b16 %v3471, %v3470
        %3488 = vmatprep.subr.bf16.mxu0 0
        %3489 = vmatpush1.bf16.msra.mxu0 %v3472
        %3490 = vmatprep.subr.bf16.mxu0 0
        %3491 = vmatpush1.bf16.msra.mxu0 %v3473
        %3492 = vmatprep.subr.bf16.mxu0 0
        %3493 = vmatpush1.bf16.msra.mxu0 %v3474
        %3494 = vmatprep.subr.bf16.mxu0 0
        %3495 = vmatpush1.bf16.msra.mxu0 %v3475
        %3496 = vmatprep.subr.bf16.mxu0 0
        %3497 = vmatpush1.bf16.msra.mxu0 %v3476
        %3498 = vmatprep.subr.bf16.mxu0 0
        %3499 = vmatpush1.bf16.msra.mxu0 %v3477
        %3500 = vmatprep.subr.bf16.mxu0 0
        %3501 = vmatpush1.bf16.msra.mxu0 %v3478
        %3502 = vmatprep.subr.bf16.mxu0 0
        %3503 = vmatpush1.bf16.msra.mxu0 %v3479
        %3504 = vmatprep.subr.bf16.mxu0 0
        %3505 = vmatpush1.bf16.msra.mxu0 0
        %3506 = vmatprep.subr.bf16.mxu0 0
        %3507 = vmatpush1.bf16.msra.mxu0 0
        %3508 = vmatprep.subr.bf16.mxu0 0
        %3509 = vmatpush1.bf16.msra.mxu0 0
        %3510 = vmatprep.subr.bf16.mxu0 0
        %3511 = vmatpush1.bf16.msra.mxu0 0
        %3512 = vmatprep.subr.bf16.mxu0 0
        %3513 = vmatpush1.bf16.msra.mxu0 0
        %3514 = vmatprep.subr.bf16.mxu0 0
        %3515 = vmatpush1.bf16.msra.mxu0 0
        %3516 = vmatprep.subr.bf16.mxu0 0
        %3517 = vmatpush1.bf16.msra.mxu0 0
        %3518 = vmatprep.subr.bf16.mxu0 0
        %3519 = vmatpush1.bf16.msra.mxu0 0
        %3520 = vmatprep.mubr.bf16.mxu0 0
        %3521 = vmatmul.mubr.bf16.gmra.mrb[0].mxu0 %v3408
        %v3522 = vpop.f32.mrb[0].mxu0
        %v3523 = vadd.f32 0.0, %v3522
        %v3524 = vpop.f32.mrb[0].mxu0
        %v3525 = vpop.f32.mrb[0].mxu0
        %v3526 = vadd.f32 0.0, %v3525
        %v3527 = vpop.f32.mrb[0].mxu0
        %3528 = vmatprep.mubr.bf16.mxu0 0
        %3529 = vmatmul.mubr.bf16.gmra.mrb[0].mxu0 %v3409
        %v3530 = vpop.f32.mrb[0].mxu0
        %v3531 = vadd.f32 0.0, %v3530
        %v3532 = vpop.f32.mrb[0].mxu0
        %v3533 = vpop.f32.mrb[0].mxu0
        %v3534 = vadd.f32 0.0, %v3533
        %v3535 = vpop.f32.mrb[0].mxu0
        %3536 = vmatprep.mubr.bf16.mxu0 0
        %3537 = vmatmul.mubr.bf16.gmra.mrb[0].mxu0 %v3410
        %v3538 = vpop.f32.mrb[0].mxu0
        %v3539 = vadd.f32 0.0, %v3538
        %v3540 = vpop.f32.mrb[0].mxu0
        %v3541 = vpop.f32.mrb[0].mxu0
        %v3542 = vadd.f32 0.0, %v3541
        %v3543 = vpop.f32.mrb[0].mxu0
        %3544 = vmatprep.mubr.bf16.mxu0 0
        %3545 = vmatmul.mubr.bf16.gmra.mrb[0].mxu0 %v3411
        %v3546 = vpop.f32.mrb[0].mxu0
        %v3547 = vadd.f32 0.0, %v3546
        %v3548 = vpop.f32.mrb[0].mxu0
        %v3549 = vpop.f32.mrb[0].mxu0
        %v3550 = vadd.f32 0.0, %v3549
        %v3551 = vpop.f32.mrb[0].mxu0
        %3552 = vmatprep.mubr.bf16.mxu0 0
        %3553 = vmatmul.mubr.bf16.gmra.mrb[0].mxu0 %v3412
        %v3554 = vpop.f32.mrb[0].mxu0
        %v3555 = vadd.f32 0.0, %v3554
        %v3556 = vpop.f32.mrb[0].mxu0
        %v3557 = vpop.f32.mrb[0].mxu0
        %v3558 = vadd.f32 0.0, %v3557
        %v3559 = vpop.f32.mrb[0].mxu0
        %3560 = vmatprep.mubr.bf16.mxu0 0
        %3561 = vmatmul.mubr.bf16.gmra.mrb[0].mxu0 %v3413
        %v3562 = vpop.f32.mrb[0].mxu0
        %v3563 = vadd.f32 0.0, %v3562
        %v3564 = vpop.f32.mrb[0].mxu0
        %v3565 = vpop.f32.mrb[0].mxu0
        %v3566 = vadd.f32 0.0, %v3565
        %v3567 = vpop.f32.mrb[0].mxu0
        %3568 = vmatprep.mubr.bf16.mxu0 0
        %3569 = vmatmul.mubr.bf16.gmra.mrb[0].mxu0 %v3414
        %v3570 = vpop.f32.mrb[0].mxu0
        %v3571 = vadd.f32 0.0, %v3570
        %v3572 = vpop.f32.mrb[0].mxu0
        %v3573 = vpop.f32.mrb[0].mxu0
        %v3574 = vadd.f32 0.0, %v3573
        %v3575 = vpop.f32.mrb[0].mxu0
        %3576 = vmatprep.mubr.bf16.mxu0 0
        %3577 = vmatmul.mubr.bf16.gmra.mrb[0].mxu0 %v3415
        %v3578 = vpop.f32.mrb[0].mxu0
        %v3579 = vadd.f32 0.0, %v3578
        %v3580 = vpop.f32.mrb[0].mxu0
        %v3581 = vpop.f32.mrb[0].mxu0
        %v3582 = vadd.f32 0.0, %v3581
        %v3583 = vpop.f32.mrb[0].mxu0
        %3584 = vmatprep.mubr.bf16.mxu0 0
        %3585 = vmatmul.mubr.bf16.gmra.mrb[0].mxu0 %v3416
        %v3586 = vpop.f32.mrb[0].mxu0
        %v3587 = vadd.f32 0.0, %v3586
        %v3588 = vpop.f32.mrb[0].mxu0
        %v3589 = vpop.f32.mrb[0].mxu0
        %v3590 = vadd.f32 0.0, %v3589
        %v3591 = vpop.f32.mrb[0].mxu0
        %3592 = vmatprep.mubr.bf16.mxu0 0
        %3593 = vmatmul.mubr.bf16.gmra.mrb[0].mxu0 %v3417
        %v3594 = vpop.f32.mrb[0].mxu0
        %v3595 = vadd.f32 0.0, %v3594
        %v3596 = vpop.f32.mrb[0].mxu0
        %v3597 = vpop.f32.mrb[0].mxu0
        %v3598 = vadd.f32 0.0, %v3597
        %v3599 = vpop.f32.mrb[0].mxu0
        %3600 = vmatprep.mubr.bf16.mxu0 0
        %3601 = vmatmul.mubr.bf16.gmra.mrb[0].mxu0 %v3418
        %v3602 = vpop.f32.mrb[0].mxu0
        %v3603 = vadd.f32 0.0, %v3602
        %v3604 = vpop.f32.mrb[0].mxu0
        %v3605 = vpop.f32.mrb[0].mxu0
        %v3606 = vadd.f32 0.0, %v3605
        %v3607 = vpop.f32.mrb[0].mxu0
        %3608 = vmatprep.mubr.bf16.mxu0 0
        %3609 = vmatmul.mubr.bf16.gmra.mrb[0].mxu0 %v3419
        %v3610 = vpop.f32.mrb[0].mxu0
        %v3611 = vadd.f32 0.0, %v3610
        %v3612 = vpop.f32.mrb[0].mxu0
        %v3613 = vpop.f32.mrb[0].mxu0
        %v3614 = vadd.f32 0.0, %v3613
        %v3615 = vpop.f32.mrb[0].mxu0
        %3616 = vmatprep.mubr.bf16.mxu0 0
        %3617 = vmatmul.mubr.bf16.gmra.mrb[0].mxu0 %v3420
        %v3618 = vpop.f32.mrb[0].mxu0
        %v3619 = vadd.f32 0.0, %v3618
        %v3620 = vpop.f32.mrb[0].mxu0
        %v3621 = vpop.f32.mrb[0].mxu0
        %v3622 = vadd.f32 0.0, %v3621
        %v3623 = vpop.f32.mrb[0].mxu0
        %3624 = vmatprep.mubr.bf16.mxu0 0
        %3625 = vmatmul.mubr.bf16.gmra.mrb[0].mxu0 %v3421
        %v3626 = vpop.f32.mrb[0].mxu0
        %v3627 = vadd.f32 0.0, %v3626
        %v3628 = vpop.f32.mrb[0].mxu0
        %v3629 = vpop.f32.mrb[0].mxu0
        %v3630 = vadd.f32 0.0, %v3629
        %v3631 = vpop.f32.mrb[0].mxu0
        %3632 = vmatprep.mubr.bf16.mxu0 0
        %3633 = vmatmul.mubr.bf16.gmra.mrb[0].mxu0 %v3422
        %v3634 = vpop.f32.mrb[0].mxu0
        %v3635 = vadd.f32 0.0, %v3634
        %v3636 = vpop.f32.mrb[0].mxu0
        %v3637 = vpop.f32.mrb[0].mxu0
        %v3638 = vadd.f32 0.0, %v3637
        %v3639 = vpop.f32.mrb[0].mxu0
        %3640 = vmatprep.mubr.bf16.mxu0 0
        %3641 = vmatmul.mubr.bf16.gmra.mrb[0].mxu0 %v3423
        %v3642 = vpop.f32.mrb[0].mxu0
        %v3643 = vadd.f32 0.0, %v3642
        %v3644 = vpop.f32.mrb[0].mxu0
        %v3645 = vpop.f32.mrb[0].mxu0
        %v3646 = vadd.f32 0.0, %v3645
        %v3647 = vpop.f32.mrb[0].mxu0
        %3648 = vdwg.mxu0
        %v3649 = vadd.f32 %v3312, %v3523
        %v3650 = vadd.f32 %v3313, %v3526
        %v3651 = vadd.f32 %v3314, %v3531
        %v3652 = vadd.f32 %v3315, %v3534
        %v3653 = vadd.f32 %v3316, %v3539
        %v3654 = vadd.f32 %v3317, %v3542
        %v3655 = vadd.f32 %v3318, %v3547
        %v3656 = vadd.f32 %v3319, %v3550
        %v3657 = vadd.f32 %v3320, %v3555
        %v3658 = vadd.f32 %v3321, %v3558
        %v3659 = vadd.f32 %v3322, %v3563
        %v3660 = vadd.f32 %v3323, %v3566
        %v3661 = vadd.f32 %v3324, %v3571
        %v3662 = vadd.f32 %v3325, %v3574
        %v3663 = vadd.f32 %v3326, %v3579
        %v3664 = vadd.f32 %v3327, %v3582
        %v3665 = vadd.f32 %v3328, %v3587
        %v3666 = vadd.f32 %v3329, %v3590
        %v3667 = vadd.f32 %v3330, %v3595
        %v3668 = vadd.f32 %v3331, %v3598
        %v3669 = vadd.f32 %v3332, %v3603
        %v3670 = vadd.f32 %v3333, %v3606
        %v3671 = vadd.f32 %v3334, %v3611
        %v3672 = vadd.f32 %v3335, %v3614
        %v3673 = vadd.f32 %v3336, %v3619
        %v3674 = vadd.f32 %v3337, %v3622
        %v3675 = vadd.f32 %v3338, %v3627
        %v3676 = vadd.f32 %v3339, %v3630
        %v3677 = vadd.f32 %v3340, %v3635
        %v3678 = vadd.f32 %v3341, %v3638
        %v3679 = vadd.f32 %v3342, %v3643
        %v3680 = vadd.f32 %v3343, %v3646
        %3681 = vst [vmem:[%s222] sm:$0xff] %v3649
        %3682 = vst [vmem:[%s222 + $0x8] sm:$0xff] %v3650
        %3683 = vst [vmem:[%s222 + $0x10] sm:$0xff] %v3651
        %3684 = vst [vmem:[%s222 + $0x18] sm:$0xff] %v3652
        %3685 = vst [vmem:[%s222 + $0x20] sm:$0xff] %v3653
        %3686 = vst [vmem:[%s222 + $0x28] sm:$0xff] %v3654
        %3687 = vst [vmem:[%s222 + $0x30] sm:$0xff] %v3655
        %3688 = vst [vmem:[%s222 + $0x38] sm:$0xff] %v3656
        %3689 = vst [vmem:[%s222 + $0x40] sm:$0xff] %v3657
        %3690 = vst [vmem:[%s222 + $0x48] sm:$0xff] %v3658
        %3691 = vst [vmem:[%s222 + $0x50] sm:$0xff] %v3659
        %3692 = vst [vmem:[%s222 + $0x58] sm:$0xff] %v3660
        %3693 = vst [vmem:[%s222 + $0x60] sm:$0xff] %v3661
        %3694 = vst [vmem:[%s222 + $0x68] sm:$0xff] %v3662
        %3695 = vst [vmem:[%s222 + $0x70] sm:$0xff] %v3663
        %3696 = vst [vmem:[%s222 + $0x78] sm:$0xff] %v3664
        %3697 = vst [vmem:[%s222 + $0x80] sm:$0xff] %v3665
        %3698 = vst [vmem:[%s222 + $0x88] sm:$0xff] %v3666
        %3699 = vst [vmem:[%s222 + $0x90] sm:$0xff] %v3667
        %3700 = vst [vmem:[%s222 + $0x98] sm:$0xff] %v3668
        %3701 = vst [vmem:[%s222 + $0xa0] sm:$0xff] %v3669
        %3702 = vst [vmem:[%s222 + $0xa8] sm:$0xff] %v3670
        %3703 = vst [vmem:[%s222 + $0xb0] sm:$0xff] %v3671
        %3704 = vst [vmem:[%s222 + $0xb8] sm:$0xff] %v3672
        %3705 = vst [vmem:[%s222 + $0xc0] sm:$0xff] %v3673
        %3706 = vst [vmem:[%s222 + $0xc8] sm:$0xff] %v3674
        %3707 = vst [vmem:[%s222 + $0xd0] sm:$0xff] %v3675
        %3708 = vst [vmem:[%s222 + $0xd8] sm:$0xff] %v3676
        %3709 = vst [vmem:[%s222 + $0xe0] sm:$0xff] %v3677
        %3710 = vst [vmem:[%s222 + $0xe8] sm:$0xff] %v3678
        %3711 = vst [vmem:[%s222 + $0xf0] sm:$0xff] %v3679
        %3712 = vst [vmem:[%s222 + $0xf8] sm:$0xff] %v3680
        %s3713 = scalar_lea.vmem %s245, 448
        %v3714 = vld [vmem:[%s3713] sm:$0xf]
        %v3715 = vld [vmem:[%s3713 + $0x4] sm:$0xf]
        %v3716 = vld [vmem:[%s3713 + $0x8] sm:$0xf]
        %v3717 = vld [vmem:[%s3713 + $0xc] sm:$0xf]
        %v3718 = vld [vmem:[%s3713 + $0x10] sm:$0xf]
        %v3719 = vld [vmem:[%s3713 + $0x14] sm:$0xf]
        %v3720 = vld [vmem:[%s3713 + $0x18] sm:$0xf]
        %v3721 = vld [vmem:[%s3713 + $0x1c] sm:$0xf]
        %v3722 = vld [vmem:[%s3713 + $0x20] sm:$0xf]
        %v3723 = vld [vmem:[%s3713 + $0x24] sm:$0xf]
        %v3724 = vld [vmem:[%s3713 + $0x28] sm:$0xf]
        %v3725 = vld [vmem:[%s3713 + $0x2c] sm:$0xf]
        %v3726 = vld [vmem:[%s3713 + $0x30] sm:$0xf]
        %v3727 = vld [vmem:[%s3713 + $0x34] sm:$0xf]
        %v3728 = vld [vmem:[%s3713 + $0x38] sm:$0xf]
        %v3729 = vld [vmem:[%s3713 + $0x3c] sm:$0xf]
        %v3730 = vld [vmem:[%s222] sm:$0xff]
        %v3731 = vld [vmem:[%s222 + $0x8] sm:$0xff]
        %v3732 = vld [vmem:[%s222 + $0x10] sm:$0xff]
        %v3733 = vld [vmem:[%s222 + $0x18] sm:$0xff]
        %v3734 = vld [vmem:[%s222 + $0x20] sm:$0xff]
        %v3735 = vld [vmem:[%s222 + $0x28] sm:$0xff]
        %v3736 = vld [vmem:[%s222 + $0x30] sm:$0xff]
        %v3737 = vld [vmem:[%s222 + $0x38] sm:$0xff]
        %v3738 = vld [vmem:[%s222 + $0x40] sm:$0xff]
        %v3739 = vld [vmem:[%s222 + $0x48] sm:$0xff]
        %v3740 = vld [vmem:[%s222 + $0x50] sm:$0xff]
        %v3741 = vld [vmem:[%s222 + $0x58] sm:$0xff]
        %v3742 = vld [vmem:[%s222 + $0x60] sm:$0xff]
        %v3743 = vld [vmem:[%s222 + $0x68] sm:$0xff]
        %v3744 = vld [vmem:[%s222 + $0x70] sm:$0xff]
        %v3745 = vld [vmem:[%s222 + $0x78] sm:$0xff]
        %v3746 = vld [vmem:[%s222 + $0x80] sm:$0xff]
        %v3747 = vld [vmem:[%s222 + $0x88] sm:$0xff]
        %v3748 = vld [vmem:[%s222 + $0x90] sm:$0xff]
        %v3749 = vld [vmem:[%s222 + $0x98] sm:$0xff]
        %v3750 = vld [vmem:[%s222 + $0xa0] sm:$0xff]
        %v3751 = vld [vmem:[%s222 + $0xa8] sm:$0xff]
        %v3752 = vld [vmem:[%s222 + $0xb0] sm:$0xff]
        %v3753 = vld [vmem:[%s222 + $0xb8] sm:$0xff]
        %v3754 = vld [vmem:[%s222 + $0xc0] sm:$0xff]
        %v3755 = vld [vmem:[%s222 + $0xc8] sm:$0xff]
        %v3756 = vld [vmem:[%s222 + $0xd0] sm:$0xff]
        %v3757 = vld [vmem:[%s222 + $0xd8] sm:$0xff]
        %v3758 = vld [vmem:[%s222 + $0xe0] sm:$0xff]
        %v3759 = vld [vmem:[%s222 + $0xe8] sm:$0xff]
        %v3760 = vld [vmem:[%s222 + $0xf0] sm:$0xff]
        %v3761 = vld [vmem:[%s222 + $0xf8] sm:$0xff]
        %v3778 = vrot.slane %v3247, 5
        %v3779 = vrot.slane %v3778, 4
        %v3780 = vrot.slane %v3248, 5
        %v3781 = vsel %vm816, %v3779, %v3780
        %v3782 = vrot.slane %v3780, 4
        %v3783 = vrot.slane %v3249, 5
        %v3784 = vsel %vm816, %v3782, %v3783
        %v3785 = vrot.slane %v3250, 5
        %v3786 = vrot.slane %v3785, 4
        %v3787 = vrot.slane %v3251, 5
        %v3788 = vsel %vm816, %v3786, %v3787
        %v3789 = vrot.slane %v3787, 4
        %v3790 = vrot.slane %v3252, 5
        %v3791 = vsel %vm816, %v3789, %v3790
        %v3792 = vrot.slane %v3253, 5
        %v3793 = vrot.slane %v3792, 4
        %v3794 = vrot.slane %v3254, 5
        %v3795 = vsel %vm816, %v3793, %v3794
        %v3796 = vrot.slane %v3794, 4
        %v3797 = vrot.slane %v3255, 5
        %v3798 = vsel %vm816, %v3796, %v3797
        %v3799 = vrot.slane %v3256, 5
        %v3800 = vrot.slane %v3799, 4
        %v3801 = vrot.slane %v3257, 5
        %v3802 = vsel %vm816, %v3800, %v3801
        %v3803 = vrot.slane %v3801, 4
        %v3804 = vrot.slane %v3258, 5
        %v3805 = vsel %vm816, %v3803, %v3804
        %v3806 = vrot.slane %v3259, 5
        %v3807 = vrot.slane %v3806, 4
        %v3808 = vrot.slane %v3260, 5
        %v3809 = vsel %vm816, %v3807, %v3808
        %v3810 = vrot.slane %v3808, 4
        %v3811 = vrot.slane %v3261, 5
        %v3812 = vsel %vm816, %v3810, %v3811
        %v3813 = vrot.slane %v3262, 5
        %v3814 = vrot.slane %v3813, 4
        %v3815 = vrot.slane %v3263, 5
        %v3816 = vsel %vm816, %v3814, %v3815
        %v3817 = vrot.slane %v3815, 4
        %v3818 = vrot.slane %v3264, 5
        %v3819 = vsel %vm816, %v3817, %v3818
        %v3820 = vrot.slane %v3265, 5
        %v3821 = vrot.slane %v3820, 4
        %v3822 = vrot.slane %v3266, 5
        %v3823 = vsel %vm816, %v3821, %v3822
        %v3824 = vrot.slane %v3822, 4
        %v3825 = vrot.slane %v3267, 5
        %v3826 = vsel %vm816, %v3824, %v3825
        %v3827 = vrot.slane %v3268, 5
        %v3828 = vrot.slane %v3827, 4
        %v3829 = vrot.slane %v3269, 5
        %v3830 = vsel %vm816, %v3828, %v3829
        %v3831 = vrot.slane %v3829, 4
        %v3832 = vrot.slane %v3270, 5
        %v3833 = vsel %vm816, %v3831, %v3832
        %v3834 = vrot.slane %v3271, 5
        %v3835 = vrot.slane %v3834, 4
        %v3836 = vrot.slane %v3272, 5
        %v3837 = vsel %vm816, %v3835, %v3836
        %v3838 = vrot.slane %v3836, 4
        %v3839 = vrot.slane %v3273, 5
        %v3840 = vsel %vm816, %v3838, %v3839
        %v3841 = vrot.slane %v3274, 5
        %v3842 = vrot.slane %v3841, 4
        %v3843 = vrot.slane %v3275, 5
        %v3844 = vsel %vm816, %v3842, %v3843
        %v3845 = vrot.slane %v3843, 4
        %v3846 = vrot.slane %v3276, 5
        %v3847 = vsel %vm816, %v3845, %v3846
        %v3848 = vrot.slane %v3277, 5
        %v3849 = vrot.slane %v3848, 4
        %v3850 = vrot.slane %v3278, 5
        %v3851 = vsel %vm816, %v3849, %v3850
        %v3852 = vrot.slane %v3850, 4
        %v3853 = vrot.slane %v3279, 5
        %v3854 = vsel %vm816, %v3852, %v3853
        %v3855 = vrot.slane %v3280, 5
        %v3856 = vrot.slane %v3855, 4
        %v3857 = vrot.slane %v3281, 5
        %v3858 = vsel %vm816, %v3856, %v3857
        %v3859 = vrot.slane %v3857, 4
        %v3860 = vrot.slane %v3282, 5
        %v3861 = vsel %vm816, %v3859, %v3860
        %v3862 = vrot.slane %v3283, 5
        %v3863 = vrot.slane %v3862, 4
        %v3864 = vrot.slane %v3284, 5
        %v3865 = vsel %vm816, %v3863, %v3864
        %v3866 = vrot.slane %v3864, 4
        %v3867 = vrot.slane %v3285, 5
        %v3868 = vsel %vm816, %v3866, %v3867
        %v3869 = vrot.slane %v3286, 5
        %v3870 = vrot.slane %v3869, 4
        %v3871 = vrot.slane %v3287, 5
        %v3872 = vsel %vm816, %v3870, %v3871
        %v3873 = vrot.slane %v3871, 4
        %v3874 = vrot.slane %v3288, 5
        %v3875 = vsel %vm816, %v3873, %v3874
        %v3876 = vrot.slane %v3289, 5
        %v3877 = vrot.slane %v3876, 4
        %v3878 = vrot.slane %v3290, 5
        %v3879 = vsel %vm816, %v3877, %v3878
        %v3880 = vrot.slane %v3878, 4
        %v3881 = vrot.slane %v3291, 5
        %v3882 = vsel %vm816, %v3880, %v3881
        %v3883 = vrot.slane %v3292, 5
        %v3884 = vrot.slane %v3883, 4
        %v3885 = vrot.slane %v3293, 5
        %v3886 = vsel %vm816, %v3884, %v3885
        %v3887 = vrot.slane %v3885, 4
        %v3888 = vrot.slane %v3294, 5
        %v3889 = vsel %vm816, %v3887, %v3888
        %v3890 = vunpack.c.l.b16 %v3781
        %v3891 = vunpack.c.l.b16 %v3784
        %v3892 = vunpack.c.l.b16 %v3788
        %v3893 = vunpack.c.l.b16 %v3791
        %v3894 = vunpack.c.l.b16 %v3795
        %v3895 = vunpack.c.l.b16 %v3798
        %v3896 = vunpack.c.l.b16 %v3802
        %v3897 = vunpack.c.l.b16 %v3805
        %v3898 = vunpack.c.l.b16 %v3809
        %v3899 = vunpack.c.l.b16 %v3812
        %v3900 = vunpack.c.l.b16 %v3816
        %v3901 = vunpack.c.l.b16 %v3819
        %v3902 = vunpack.c.l.b16 %v3823
        %v3903 = vunpack.c.l.b16 %v3826
        %v3904 = vunpack.c.l.b16 %v3830
        %v3905 = vunpack.c.l.b16 %v3833
        %v3906 = vunpack.c.l.b16 %v3837
        %v3907 = vunpack.c.l.b16 %v3840
        %v3908 = vunpack.c.l.b16 %v3844
        %v3909 = vunpack.c.l.b16 %v3847
        %v3910 = vunpack.c.l.b16 %v3851
        %v3911 = vunpack.c.l.b16 %v3854
        %v3912 = vunpack.c.l.b16 %v3858
        %v3913 = vunpack.c.l.b16 %v3861
        %v3914 = vunpack.c.l.b16 %v3865
        %v3915 = vunpack.c.l.b16 %v3868
        %v3916 = vunpack.c.l.b16 %v3872
        %v3917 = vunpack.c.l.b16 %v3875
        %v3918 = vunpack.c.l.b16 %v3879
        %v3919 = vunpack.c.l.b16 %v3882
        %v3920 = vunpack.c.l.b16 %v3886
        %v3921 = vunpack.c.l.b16 %v3889
        %v3922 = vpack.c.b16 %v3891, %v3890
        %v3923 = vpack.c.b16 %v3893, %v3892
        %v3924 = vpack.c.b16 %v3895, %v3894
        %v3925 = vpack.c.b16 %v3897, %v3896
        %v3926 = vpack.c.b16 %v3899, %v3898
        %v3927 = vpack.c.b16 %v3901, %v3900
        %v3928 = vpack.c.b16 %v3903, %v3902
        %v3929 = vpack.c.b16 %v3905, %v3904
        %v3930 = vpack.c.b16 %v3907, %v3906
        %v3931 = vpack.c.b16 %v3909, %v3908
        %v3932 = vpack.c.b16 %v3911, %v3910
        %v3933 = vpack.c.b16 %v3913, %v3912
        %v3934 = vpack.c.b16 %v3915, %v3914
        %v3935 = vpack.c.b16 %v3917, %v3916
        %v3936 = vpack.c.b16 %v3919, %v3918
        %v3937 = vpack.c.b16 %v3921, %v3920
        %v3970 = vunpack.c.l.b16 %v3714
        %v3971 = vunpack.c.l.b16 %v3715
        %v3972 = vunpack.c.l.b16 %v3716
        %v3973 = vunpack.c.l.b16 %v3717
        %v3974 = vunpack.c.l.b16 %v3718
        %v3975 = vunpack.c.l.b16 %v3719
        %v3976 = vunpack.c.l.b16 %v3720
        %v3977 = vunpack.c.l.b16 %v3721
        %v3978 = vunpack.c.l.b16 %v3722
        %v3979 = vunpack.c.l.b16 %v3723
        %v3980 = vunpack.c.l.b16 %v3724
        %v3981 = vunpack.c.l.b16 %v3725
        %v3982 = vunpack.c.l.b16 %v3726
        %v3983 = vunpack.c.l.b16 %v3727
        %v3984 = vunpack.c.l.b16 %v3728
        %v3985 = vunpack.c.l.b16 %v3729
        %v3986 = vpack.c.b16 %v3971, %v3970
        %v3987 = vpack.c.b16 %v3973, %v3972
        %v3988 = vpack.c.b16 %v3975, %v3974
        %v3989 = vpack.c.b16 %v3977, %v3976
        %v3990 = vpack.c.b16 %v3979, %v3978
        %v3991 = vpack.c.b16 %v3981, %v3980
        %v3992 = vpack.c.b16 %v3983, %v3982
        %v3993 = vpack.c.b16 %v3985, %v3984
        %4002 = vmatprep.subr.bf16.mxu0 0
        %4003 = vmatpush1.bf16.msra.mxu0 %v3986
        %4004 = vmatprep.subr.bf16.mxu0 0
        %4005 = vmatpush1.bf16.msra.mxu0 %v3987
        %4006 = vmatprep.subr.bf16.mxu0 0
        %4007 = vmatpush1.bf16.msra.mxu0 %v3988
        %4008 = vmatprep.subr.bf16.mxu0 0
        %4009 = vmatpush1.bf16.msra.mxu0 %v3989
        %4010 = vmatprep.subr.bf16.mxu0 0
        %4011 = vmatpush1.bf16.msra.mxu0 %v3990
        %4012 = vmatprep.subr.bf16.mxu0 0
        %4013 = vmatpush1.bf16.msra.mxu0 %v3991
        %4014 = vmatprep.subr.bf16.mxu0 0
        %4015 = vmatpush1.bf16.msra.mxu0 %v3992
        %4016 = vmatprep.subr.bf16.mxu0 0
        %4017 = vmatpush1.bf16.msra.mxu0 %v3993
        %4018 = vmatprep.subr.bf16.mxu0 0
        %4019 = vmatpush1.bf16.msra.mxu0 0
        %4020 = vmatprep.subr.bf16.mxu0 0
        %4021 = vmatpush1.bf16.msra.mxu0 0
        %4022 = vmatprep.subr.bf16.mxu0 0
        %4023 = vmatpush1.bf16.msra.mxu0 0
        %4024 = vmatprep.subr.bf16.mxu0 0
        %4025 = vmatpush1.bf16.msra.mxu0 0
        %4026 = vmatprep.subr.bf16.mxu0 0
        %4027 = vmatpush1.bf16.msra.mxu0 0
        %4028 = vmatprep.subr.bf16.mxu0 0
        %4029 = vmatpush1.bf16.msra.mxu0 0
        %4030 = vmatprep.subr.bf16.mxu0 0
        %4031 = vmatpush1.bf16.msra.mxu0 0
        %4032 = vmatprep.subr.bf16.mxu0 0
        %4033 = vmatpush1.bf16.msra.mxu0 0
        %4034 = vmatprep.mubr.bf16.mxu0 0
        %4035 = vmatmul.mubr.bf16.gmra.mrb[0].mxu0 %v3922
        %v4036 = vpop.f32.mrb[0].mxu0
        %v4037 = vadd.f32 0.0, %v4036
        %v4038 = vpop.f32.mrb[0].mxu0
        %v4039 = vpop.f32.mrb[0].mxu0
        %v4040 = vadd.f32 0.0, %v4039
        %v4041 = vpop.f32.mrb[0].mxu0
        %4042 = vmatprep.mubr.bf16.mxu0 0
        %4043 = vmatmul.mubr.bf16.gmra.mrb[0].mxu0 %v3923
        %v4044 = vpop.f32.mrb[0].mxu0
        %v4045 = vadd.f32 0.0, %v4044
        %v4046 = vpop.f32.mrb[0].mxu0
        %v4047 = vpop.f32.mrb[0].mxu0
        %v4048 = vadd.f32 0.0, %v4047
        %v4049 = vpop.f32.mrb[0].mxu0
        %4050 = vmatprep.mubr.bf16.mxu0 0
        %4051 = vmatmul.mubr.bf16.gmra.mrb[0].mxu0 %v3924
        %v4052 = vpop.f32.mrb[0].mxu0
        %v4053 = vadd.f32 0.0, %v4052
        %v4054 = vpop.f32.mrb[0].mxu0
        %v4055 = vpop.f32.mrb[0].mxu0
        %v4056 = vadd.f32 0.0, %v4055
        %v4057 = vpop.f32.mrb[0].mxu0
        %4058 = vmatprep.mubr.bf16.mxu0 0
        %4059 = vmatmul.mubr.bf16.gmra.mrb[0].mxu0 %v3925
        %v4060 = vpop.f32.mrb[0].mxu0
        %v4061 = vadd.f32 0.0, %v4060
        %v4062 = vpop.f32.mrb[0].mxu0
        %v4063 = vpop.f32.mrb[0].mxu0
        %v4064 = vadd.f32 0.0, %v4063
        %v4065 = vpop.f32.mrb[0].mxu0
        %4066 = vmatprep.mubr.bf16.mxu0 0
        %4067 = vmatmul.mubr.bf16.gmra.mrb[0].mxu0 %v3926
        %v4068 = vpop.f32.mrb[0].mxu0
        %v4069 = vadd.f32 0.0, %v4068
        %v4070 = vpop.f32.mrb[0].mxu0
        %v4071 = vpop.f32.mrb[0].mxu0
        %v4072 = vadd.f32 0.0, %v4071
        %v4073 = vpop.f32.mrb[0].mxu0
        %4074 = vmatprep.mubr.bf16.mxu0 0
        %4075 = vmatmul.mubr.bf16.gmra.mrb[0].mxu0 %v3927
        %v4076 = vpop.f32.mrb[0].mxu0
        %v4077 = vadd.f32 0.0, %v4076
        %v4078 = vpop.f32.mrb[0].mxu0
        %v4079 = vpop.f32.mrb[0].mxu0
        %v4080 = vadd.f32 0.0, %v4079
        %v4081 = vpop.f32.mrb[0].mxu0
        %4082 = vmatprep.mubr.bf16.mxu0 0
        %4083 = vmatmul.mubr.bf16.gmra.mrb[0].mxu0 %v3928
        %v4084 = vpop.f32.mrb[0].mxu0
        %v4085 = vadd.f32 0.0, %v4084
        %v4086 = vpop.f32.mrb[0].mxu0
        %v4087 = vpop.f32.mrb[0].mxu0
        %v4088 = vadd.f32 0.0, %v4087
        %v4089 = vpop.f32.mrb[0].mxu0
        %4090 = vmatprep.mubr.bf16.mxu0 0
        %4091 = vmatmul.mubr.bf16.gmra.mrb[0].mxu0 %v3929
        %v4092 = vpop.f32.mrb[0].mxu0
        %v4093 = vadd.f32 0.0, %v4092
        %v4094 = vpop.f32.mrb[0].mxu0
        %v4095 = vpop.f32.mrb[0].mxu0
        %v4096 = vadd.f32 0.0, %v4095
        %v4097 = vpop.f32.mrb[0].mxu0
        %4098 = vmatprep.mubr.bf16.mxu0 0
        %4099 = vmatmul.mubr.bf16.gmra.mrb[0].mxu0 %v3930
        %v4100 = vpop.f32.mrb[0].mxu0
        %v4101 = vadd.f32 0.0, %v4100
        %v4102 = vpop.f32.mrb[0].mxu0
        %v4103 = vpop.f32.mrb[0].mxu0
        %v4104 = vadd.f32 0.0, %v4103
        %v4105 = vpop.f32.mrb[0].mxu0
        %4106 = vmatprep.mubr.bf16.mxu0 0
        %4107 = vmatmul.mubr.bf16.gmra.mrb[0].mxu0 %v3931
        %v4108 = vpop.f32.mrb[0].mxu0
        %v4109 = vadd.f32 0.0, %v4108
        %v4110 = vpop.f32.mrb[0].mxu0
        %v4111 = vpop.f32.mrb[0].mxu0
        %v4112 = vadd.f32 0.0, %v4111
        %v4113 = vpop.f32.mrb[0].mxu0
        %4114 = vmatprep.mubr.bf16.mxu0 0
        %4115 = vmatmul.mubr.bf16.gmra.mrb[0].mxu0 %v3932
        %v4116 = vpop.f32.mrb[0].mxu0
        %v4117 = vadd.f32 0.0, %v4116
        %v4118 = vpop.f32.mrb[0].mxu0
        %v4119 = vpop.f32.mrb[0].mxu0
        %v4120 = vadd.f32 0.0, %v4119
        %v4121 = vpop.f32.mrb[0].mxu0
        %4122 = vmatprep.mubr.bf16.mxu0 0
        %4123 = vmatmul.mubr.bf16.gmra.mrb[0].mxu0 %v3933
        %v4124 = vpop.f32.mrb[0].mxu0
        %v4125 = vadd.f32 0.0, %v4124
        %v4126 = vpop.f32.mrb[0].mxu0
        %v4127 = vpop.f32.mrb[0].mxu0
        %v4128 = vadd.f32 0.0, %v4127
        %v4129 = vpop.f32.mrb[0].mxu0
        %4130 = vmatprep.mubr.bf16.mxu0 0
        %4131 = vmatmul.mubr.bf16.gmra.mrb[0].mxu0 %v3934
        %v4132 = vpop.f32.mrb[0].mxu0
        %v4133 = vadd.f32 0.0, %v4132
        %v4134 = vpop.f32.mrb[0].mxu0
        %v4135 = vpop.f32.mrb[0].mxu0
        %v4136 = vadd.f32 0.0, %v4135
        %v4137 = vpop.f32.mrb[0].mxu0
        %4138 = vmatprep.mubr.bf16.mxu0 0
        %4139 = vmatmul.mubr.bf16.gmra.mrb[0].mxu0 %v3935
        %v4140 = vpop.f32.mrb[0].mxu0
        %v4141 = vadd.f32 0.0, %v4140
        %v4142 = vpop.f32.mrb[0].mxu0
        %v4143 = vpop.f32.mrb[0].mxu0
        %v4144 = vadd.f32 0.0, %v4143
        %v4145 = vpop.f32.mrb[0].mxu0
        %4146 = vmatprep.mubr.bf16.mxu0 0
        %4147 = vmatmul.mubr.bf16.gmra.mrb[0].mxu0 %v3936
        %v4148 = vpop.f32.mrb[0].mxu0
        %v4149 = vadd.f32 0.0, %v4148
        %v4150 = vpop.f32.mrb[0].mxu0
        %v4151 = vpop.f32.mrb[0].mxu0
        %v4152 = vadd.f32 0.0, %v4151
        %v4153 = vpop.f32.mrb[0].mxu0
        %4154 = vmatprep.mubr.bf16.mxu0 0
        %4155 = vmatmul.mubr.bf16.gmra.mrb[0].mxu0 %v3937
        %v4156 = vpop.f32.mrb[0].mxu0
        %v4157 = vadd.f32 0.0, %v4156
        %v4158 = vpop.f32.mrb[0].mxu0
        %v4159 = vpop.f32.mrb[0].mxu0
        %v4160 = vadd.f32 0.0, %v4159
        %v4161 = vpop.f32.mrb[0].mxu0
        %4162 = vdwg.mxu0
        %v4163 = vadd.f32 %v3730, %v4037
        %v4164 = vadd.f32 %v3731, %v4040
        %v4165 = vadd.f32 %v3732, %v4045
        %v4166 = vadd.f32 %v3733, %v4048
        %v4167 = vadd.f32 %v3734, %v4053
        %v4168 = vadd.f32 %v3735, %v4056
        %v4169 = vadd.f32 %v3736, %v4061
        %v4170 = vadd.f32 %v3737, %v4064
        %v4171 = vadd.f32 %v3738, %v4069
        %v4172 = vadd.f32 %v3739, %v4072
        %v4173 = vadd.f32 %v3740, %v4077
        %v4174 = vadd.f32 %v3741, %v4080
        %v4175 = vadd.f32 %v3742, %v4085
        %v4176 = vadd.f32 %v3743, %v4088
        %v4177 = vadd.f32 %v3744, %v4093
        %v4178 = vadd.f32 %v3745, %v4096
        %v4179 = vadd.f32 %v3746, %v4101
        %v4180 = vadd.f32 %v3747, %v4104
        %v4181 = vadd.f32 %v3748, %v4109
        %v4182 = vadd.f32 %v3749, %v4112
        %v4183 = vadd.f32 %v3750, %v4117
        %v4184 = vadd.f32 %v3751, %v4120
        %v4185 = vadd.f32 %v3752, %v4125
        %v4186 = vadd.f32 %v3753, %v4128
        %v4187 = vadd.f32 %v3754, %v4133
        %v4188 = vadd.f32 %v3755, %v4136
        %v4189 = vadd.f32 %v3756, %v4141
        %v4190 = vadd.f32 %v3757, %v4144
        %v4191 = vadd.f32 %v3758, %v4149
        %v4192 = vadd.f32 %v3759, %v4152
        %v4193 = vadd.f32 %v3760, %v4157
        %v4194 = vadd.f32 %v3761, %v4160
        %4195 = vst [vmem:[%s222] sm:$0xff] %v4163
        %4196 = vst [vmem:[%s222 + $0x8] sm:$0xff] %v4164
        %4197 = vst [vmem:[%s222 + $0x10] sm:$0xff] %v4165
        %4198 = vst [vmem:[%s222 + $0x18] sm:$0xff] %v4166
        %4199 = vst [vmem:[%s222 + $0x20] sm:$0xff] %v4167
        %4200 = vst [vmem:[%s222 + $0x28] sm:$0xff] %v4168
        %4201 = vst [vmem:[%s222 + $0x30] sm:$0xff] %v4169
        %4202 = vst [vmem:[%s222 + $0x38] sm:$0xff] %v4170
        %4203 = vst [vmem:[%s222 + $0x40] sm:$0xff] %v4171
        %4204 = vst [vmem:[%s222 + $0x48] sm:$0xff] %v4172
        %4205 = vst [vmem:[%s222 + $0x50] sm:$0xff] %v4173
        %4206 = vst [vmem:[%s222 + $0x58] sm:$0xff] %v4174
        %4207 = vst [vmem:[%s222 + $0x60] sm:$0xff] %v4175
        %4208 = vst [vmem:[%s222 + $0x68] sm:$0xff] %v4176
        %4209 = vst [vmem:[%s222 + $0x70] sm:$0xff] %v4177
        %4210 = vst [vmem:[%s222 + $0x78] sm:$0xff] %v4178
        %4211 = vst [vmem:[%s222 + $0x80] sm:$0xff] %v4179
        %4212 = vst [vmem:[%s222 + $0x88] sm:$0xff] %v4180
        %4213 = vst [vmem:[%s222 + $0x90] sm:$0xff] %v4181
        %4214 = vst [vmem:[%s222 + $0x98] sm:$0xff] %v4182
        %4215 = vst [vmem:[%s222 + $0xa0] sm:$0xff] %v4183
        %4216 = vst [vmem:[%s222 + $0xa8] sm:$0xff] %v4184
        %4217 = vst [vmem:[%s222 + $0xb0] sm:$0xff] %v4185
        %4218 = vst [vmem:[%s222 + $0xb8] sm:$0xff] %v4186
        %4219 = vst [vmem:[%s222 + $0xc0] sm:$0xff] %v4187
        %4220 = vst [vmem:[%s222 + $0xc8] sm:$0xff] %v4188
        %4221 = vst [vmem:[%s222 + $0xd0] sm:$0xff] %v4189
        %4222 = vst [vmem:[%s222 + $0xd8] sm:$0xff] %v4190
        %4223 = vst [vmem:[%s222 + $0xe0] sm:$0xff] %v4191
        %4224 = vst [vmem:[%s222 + $0xe8] sm:$0xff] %v4192
        %4225 = vst [vmem:[%s222 + $0xf0] sm:$0xff] %v4193
        %4226 = vst [vmem:[%s222 + $0xf8] sm:$0xff] %v4194
        %s4227 = scalar_lea.vmem %s245, 512
        %v4228 = vld [vmem:[%s4227] sm:$0xf]
        %v4229 = vld [vmem:[%s4227 + $0x4] sm:$0xf]
        %v4230 = vld [vmem:[%s4227 + $0x8] sm:$0xf]
        %v4231 = vld [vmem:[%s4227 + $0xc] sm:$0xf]
        %v4232 = vld [vmem:[%s4227 + $0x10] sm:$0xf]
        %v4233 = vld [vmem:[%s4227 + $0x14] sm:$0xf]
        %v4234 = vld [vmem:[%s4227 + $0x18] sm:$0xf]
        %v4235 = vld [vmem:[%s4227 + $0x1c] sm:$0xf]
        %v4236 = vld [vmem:[%s4227 + $0x20] sm:$0xf]
        %v4237 = vld [vmem:[%s4227 + $0x24] sm:$0xf]
        %v4238 = vld [vmem:[%s4227 + $0x28] sm:$0xf]
        %v4239 = vld [vmem:[%s4227 + $0x2c] sm:$0xf]
        %v4240 = vld [vmem:[%s4227 + $0x30] sm:$0xf]
        %v4241 = vld [vmem:[%s4227 + $0x34] sm:$0xf]
        %v4242 = vld [vmem:[%s4227 + $0x38] sm:$0xf]
        %v4243 = vld [vmem:[%s4227 + $0x3c] sm:$0xf]
        %v4244 = vld [vmem:[%s222] sm:$0xff]
        %v4245 = vld [vmem:[%s222 + $0x8] sm:$0xff]
        %v4246 = vld [vmem:[%s222 + $0x10] sm:$0xff]
        %v4247 = vld [vmem:[%s222 + $0x18] sm:$0xff]
        %v4248 = vld [vmem:[%s222 + $0x20] sm:$0xff]
        %v4249 = vld [vmem:[%s222 + $0x28] sm:$0xff]
        %v4250 = vld [vmem:[%s222 + $0x30] sm:$0xff]
        %v4251 = vld [vmem:[%s222 + $0x38] sm:$0xff]
        %v4252 = vld [vmem:[%s222 + $0x40] sm:$0xff]
        %v4253 = vld [vmem:[%s222 + $0x48] sm:$0xff]
        %v4254 = vld [vmem:[%s222 + $0x50] sm:$0xff]
        %v4255 = vld [vmem:[%s222 + $0x58] sm:$0xff]
        %v4256 = vld [vmem:[%s222 + $0x60] sm:$0xff]
        %v4257 = vld [vmem:[%s222 + $0x68] sm:$0xff]
        %v4258 = vld [vmem:[%s222 + $0x70] sm:$0xff]
        %v4259 = vld [vmem:[%s222 + $0x78] sm:$0xff]
        %v4260 = vld [vmem:[%s222 + $0x80] sm:$0xff]
        %v4261 = vld [vmem:[%s222 + $0x88] sm:$0xff]
        %v4262 = vld [vmem:[%s222 + $0x90] sm:$0xff]
        %v4263 = vld [vmem:[%s222 + $0x98] sm:$0xff]
        %v4264 = vld [vmem:[%s222 + $0xa0] sm:$0xff]
        %v4265 = vld [vmem:[%s222 + $0xa8] sm:$0xff]
        %v4266 = vld [vmem:[%s222 + $0xb0] sm:$0xff]
        %v4267 = vld [vmem:[%s222 + $0xb8] sm:$0xff]
        %v4268 = vld [vmem:[%s222 + $0xc0] sm:$0xff]
        %v4269 = vld [vmem:[%s222 + $0xc8] sm:$0xff]
        %v4270 = vld [vmem:[%s222 + $0xd0] sm:$0xff]
        %v4271 = vld [vmem:[%s222 + $0xd8] sm:$0xff]
        %v4272 = vld [vmem:[%s222 + $0xe0] sm:$0xff]
        %v4273 = vld [vmem:[%s222 + $0xe8] sm:$0xff]
        %v4274 = vld [vmem:[%s222 + $0xf0] sm:$0xff]
        %v4275 = vld [vmem:[%s222 + $0xf8] sm:$0xff]
        %v4276 = vrot.slane %v3247, 6
        %v4277 = vrot.slane %v4276, 4
        %v4278 = vrot.slane %v3248, 6
        %v4279 = vsel %vm1317, %v4277, %v4278
        %v4280 = vrot.slane %v4278, 4
        %v4281 = vrot.slane %v3249, 6
        %v4282 = vsel %vm1317, %v4280, %v4281
        %v4283 = vrot.slane %v3250, 6
        %v4284 = vrot.slane %v4283, 4
        %v4285 = vrot.slane %v3251, 6
        %v4286 = vsel %vm1317, %v4284, %v4285
        %v4287 = vrot.slane %v4285, 4
        %v4288 = vrot.slane %v3252, 6
        %v4289 = vsel %vm1317, %v4287, %v4288
        %v4290 = vrot.slane %v3253, 6
        %v4291 = vrot.slane %v4290, 4
        %v4292 = vrot.slane %v3254, 6
        %v4293 = vsel %vm1317, %v4291, %v4292
        %v4294 = vrot.slane %v4292, 4
        %v4295 = vrot.slane %v3255, 6
        %v4296 = vsel %vm1317, %v4294, %v4295
        %v4297 = vrot.slane %v3256, 6
        %v4298 = vrot.slane %v4297, 4
        %v4299 = vrot.slane %v3257, 6
        %v4300 = vsel %vm1317, %v4298, %v4299
        %v4301 = vrot.slane %v4299, 4
        %v4302 = vrot.slane %v3258, 6
        %v4303 = vsel %vm1317, %v4301, %v4302
        %v4304 = vrot.slane %v3259, 6
        %v4305 = vrot.slane %v4304, 4
        %v4306 = vrot.slane %v3260, 6
        %v4307 = vsel %vm1317, %v4305, %v4306
        %v4308 = vrot.slane %v4306, 4
        %v4309 = vrot.slane %v3261, 6
        %v4310 = vsel %vm1317, %v4308, %v4309
        %v4311 = vrot.slane %v3262, 6
        %v4312 = vrot.slane %v4311, 4
        %v4313 = vrot.slane %v3263, 6
        %v4314 = vsel %vm1317, %v4312, %v4313
        %v4315 = vrot.slane %v4313, 4
        %v4316 = vrot.slane %v3264, 6
        %v4317 = vsel %vm1317, %v4315, %v4316
        %v4318 = vrot.slane %v3265, 6
        %v4319 = vrot.slane %v4318, 4
        %v4320 = vrot.slane %v3266, 6
        %v4321 = vsel %vm1317, %v4319, %v4320
        %v4322 = vrot.slane %v4320, 4
        %v4323 = vrot.slane %v3267, 6
        %v4324 = vsel %vm1317, %v4322, %v4323
        %v4325 = vrot.slane %v3268, 6
        %v4326 = vrot.slane %v4325, 4
        %v4327 = vrot.slane %v3269, 6
        %v4328 = vsel %vm1317, %v4326, %v4327
        %v4329 = vrot.slane %v4327, 4
        %v4330 = vrot.slane %v3270, 6
        %v4331 = vsel %vm1317, %v4329, %v4330
        %v4332 = vrot.slane %v3271, 6
        %v4333 = vrot.slane %v4332, 4
        %v4334 = vrot.slane %v3272, 6
        %v4335 = vsel %vm1317, %v4333, %v4334
        %v4336 = vrot.slane %v4334, 4
        %v4337 = vrot.slane %v3273, 6
        %v4338 = vsel %vm1317, %v4336, %v4337
        %v4339 = vrot.slane %v3274, 6
        %v4340 = vrot.slane %v4339, 4
        %v4341 = vrot.slane %v3275, 6
        %v4342 = vsel %vm1317, %v4340, %v4341
        %v4343 = vrot.slane %v4341, 4
        %v4344 = vrot.slane %v3276, 6
        %v4345 = vsel %vm1317, %v4343, %v4344
        %v4346 = vrot.slane %v3277, 6
        %v4347 = vrot.slane %v4346, 4
        %v4348 = vrot.slane %v3278, 6
        %v4349 = vsel %vm1317, %v4347, %v4348
        %v4350 = vrot.slane %v4348, 4
        %v4351 = vrot.slane %v3279, 6
        %v4352 = vsel %vm1317, %v4350, %v4351
        %v4353 = vrot.slane %v3280, 6
        %v4354 = vrot.slane %v4353, 4
        %v4355 = vrot.slane %v3281, 6
        %v4356 = vsel %vm1317, %v4354, %v4355
        %v4357 = vrot.slane %v4355, 4
        %v4358 = vrot.slane %v3282, 6
        %v4359 = vsel %vm1317, %v4357, %v4358
        %v4360 = vrot.slane %v3283, 6
        %v4361 = vrot.slane %v4360, 4
        %v4362 = vrot.slane %v3284, 6
        %v4363 = vsel %vm1317, %v4361, %v4362
        %v4364 = vrot.slane %v4362, 4
        %v4365 = vrot.slane %v3285, 6
        %v4366 = vsel %vm1317, %v4364, %v4365
        %v4367 = vrot.slane %v3286, 6
        %v4368 = vrot.slane %v4367, 4
        %v4369 = vrot.slane %v3287, 6
        %v4370 = vsel %vm1317, %v4368, %v4369
        %v4371 = vrot.slane %v4369, 4
        %v4372 = vrot.slane %v3288, 6
        %v4373 = vsel %vm1317, %v4371, %v4372
        %v4374 = vrot.slane %v3289, 6
        %v4375 = vrot.slane %v4374, 4
        %v4376 = vrot.slane %v3290, 6
        %v4377 = vsel %vm1317, %v4375, %v4376
        %v4378 = vrot.slane %v4376, 4
        %v4379 = vrot.slane %v3291, 6
        %v4380 = vsel %vm1317, %v4378, %v4379
        %v4381 = vrot.slane %v3292, 6
        %v4382 = vrot.slane %v4381, 4
        %v4383 = vrot.slane %v3293, 6
        %v4384 = vsel %vm1317, %v4382, %v4383
        %v4385 = vrot.slane %v4383, 4
        %v4386 = vrot.slane %v3294, 6
        %v4387 = vsel %vm1317, %v4385, %v4386
        %v4388 = vunpack.c.l.b16 %v4279
        %v4389 = vunpack.c.l.b16 %v4282
        %v4390 = vunpack.c.l.b16 %v4286
        %v4391 = vunpack.c.l.b16 %v4289
        %v4392 = vunpack.c.l.b16 %v4293
        %v4393 = vunpack.c.l.b16 %v4296
        %v4394 = vunpack.c.l.b16 %v4300
        %v4395 = vunpack.c.l.b16 %v4303
        %v4396 = vunpack.c.l.b16 %v4307
        %v4397 = vunpack.c.l.b16 %v4310
        %v4398 = vunpack.c.l.b16 %v4314
        %v4399 = vunpack.c.l.b16 %v4317
        %v4400 = vunpack.c.l.b16 %v4321
        %v4401 = vunpack.c.l.b16 %v4324
        %v4402 = vunpack.c.l.b16 %v4328
        %v4403 = vunpack.c.l.b16 %v4331
        %v4404 = vunpack.c.l.b16 %v4335
        %v4405 = vunpack.c.l.b16 %v4338
        %v4406 = vunpack.c.l.b16 %v4342
        %v4407 = vunpack.c.l.b16 %v4345
        %v4408 = vunpack.c.l.b16 %v4349
        %v4409 = vunpack.c.l.b16 %v4352
        %v4410 = vunpack.c.l.b16 %v4356
        %v4411 = vunpack.c.l.b16 %v4359
        %v4412 = vunpack.c.l.b16 %v4363
        %v4413 = vunpack.c.l.b16 %v4366
        %v4414 = vunpack.c.l.b16 %v4370
        %v4415 = vunpack.c.l.b16 %v4373
        %v4416 = vunpack.c.l.b16 %v4377
        %v4417 = vunpack.c.l.b16 %v4380
        %v4418 = vunpack.c.l.b16 %v4384
        %v4419 = vunpack.c.l.b16 %v4387
        %v4420 = vpack.c.b16 %v4389, %v4388
        %v4421 = vpack.c.b16 %v4391, %v4390
        %v4422 = vpack.c.b16 %v4393, %v4392
        %v4423 = vpack.c.b16 %v4395, %v4394
        %v4424 = vpack.c.b16 %v4397, %v4396
        %v4425 = vpack.c.b16 %v4399, %v4398
        %v4426 = vpack.c.b16 %v4401, %v4400
        %v4427 = vpack.c.b16 %v4403, %v4402
        %v4428 = vpack.c.b16 %v4405, %v4404
        %v4429 = vpack.c.b16 %v4407, %v4406
        %v4430 = vpack.c.b16 %v4409, %v4408
        %v4431 = vpack.c.b16 %v4411, %v4410
        %v4432 = vpack.c.b16 %v4413, %v4412
        %v4433 = vpack.c.b16 %v4415, %v4414
        %v4434 = vpack.c.b16 %v4417, %v4416
        %v4435 = vpack.c.b16 %v4419, %v4418
        %v4468 = vunpack.c.l.b16 %v4228
        %v4469 = vunpack.c.l.b16 %v4229
        %v4470 = vunpack.c.l.b16 %v4230
        %v4471 = vunpack.c.l.b16 %v4231
        %v4472 = vunpack.c.l.b16 %v4232
        %v4473 = vunpack.c.l.b16 %v4233
        %v4474 = vunpack.c.l.b16 %v4234
        %v4475 = vunpack.c.l.b16 %v4235
        %v4476 = vunpack.c.l.b16 %v4236
        %v4477 = vunpack.c.l.b16 %v4237
        %v4478 = vunpack.c.l.b16 %v4238
        %v4479 = vunpack.c.l.b16 %v4239
        %v4480 = vunpack.c.l.b16 %v4240
        %v4481 = vunpack.c.l.b16 %v4241
        %v4482 = vunpack.c.l.b16 %v4242
        %v4483 = vunpack.c.l.b16 %v4243
        %v4484 = vpack.c.b16 %v4469, %v4468
        %v4485 = vpack.c.b16 %v4471, %v4470
        %v4486 = vpack.c.b16 %v4473, %v4472
        %v4487 = vpack.c.b16 %v4475, %v4474
        %v4488 = vpack.c.b16 %v4477, %v4476
        %v4489 = vpack.c.b16 %v4479, %v4478
        %v4490 = vpack.c.b16 %v4481, %v4480
        %v4491 = vpack.c.b16 %v4483, %v4482
        %4500 = vmatprep.subr.bf16.mxu0 0
        %4501 = vmatpush1.bf16.msra.mxu0 %v4484
        %4502 = vmatprep.subr.bf16.mxu0 0
        %4503 = vmatpush1.bf16.msra.mxu0 %v4485
        %4504 = vmatprep.subr.bf16.mxu0 0
        %4505 = vmatpush1.bf16.msra.mxu0 %v4486
        %4506 = vmatprep.subr.bf16.mxu0 0
        %4507 = vmatpush1.bf16.msra.mxu0 %v4487
        %4508 = vmatprep.subr.bf16.mxu0 0
        %4509 = vmatpush1.bf16.msra.mxu0 %v4488
        %4510 = vmatprep.subr.bf16.mxu0 0
        %4511 = vmatpush1.bf16.msra.mxu0 %v4489
        %4512 = vmatprep.subr.bf16.mxu0 0
        %4513 = vmatpush1.bf16.msra.mxu0 %v4490
        %4514 = vmatprep.subr.bf16.mxu0 0
        %4515 = vmatpush1.bf16.msra.mxu0 %v4491
        %4516 = vmatprep.subr.bf16.mxu0 0
        %4517 = vmatpush1.bf16.msra.mxu0 0
        %4518 = vmatprep.subr.bf16.mxu0 0
        %4519 = vmatpush1.bf16.msra.mxu0 0
        %4520 = vmatprep.subr.bf16.mxu0 0
        %4521 = vmatpush1.bf16.msra.mxu0 0
        %4522 = vmatprep.subr.bf16.mxu0 0
        %4523 = vmatpush1.bf16.msra.mxu0 0
        %4524 = vmatprep.subr.bf16.mxu0 0
        %4525 = vmatpush1.bf16.msra.mxu0 0
        %4526 = vmatprep.subr.bf16.mxu0 0
        %4527 = vmatpush1.bf16.msra.mxu0 0
        %4528 = vmatprep.subr.bf16.mxu0 0
        %4529 = vmatpush1.bf16.msra.mxu0 0
        %4530 = vmatprep.subr.bf16.mxu0 0
        %4531 = vmatpush1.bf16.msra.mxu0 0
        %4532 = vmatprep.mubr.bf16.mxu0 0
        %4533 = vmatmul.mubr.bf16.gmra.mrb[0].mxu0 %v4420
        %v4534 = vpop.f32.mrb[0].mxu0
        %v4535 = vadd.f32 0.0, %v4534
        %v4536 = vpop.f32.mrb[0].mxu0
        %v4537 = vpop.f32.mrb[0].mxu0
        %v4538 = vadd.f32 0.0, %v4537
        %v4539 = vpop.f32.mrb[0].mxu0
        %4540 = vmatprep.mubr.bf16.mxu0 0
        %4541 = vmatmul.mubr.bf16.gmra.mrb[0].mxu0 %v4421
        %v4542 = vpop.f32.mrb[0].mxu0
        %v4543 = vadd.f32 0.0, %v4542
        %v4544 = vpop.f32.mrb[0].mxu0
        %v4545 = vpop.f32.mrb[0].mxu0
        %v4546 = vadd.f32 0.0, %v4545
        %v4547 = vpop.f32.mrb[0].mxu0
        %4548 = vmatprep.mubr.bf16.mxu0 0
        %4549 = vmatmul.mubr.bf16.gmra.mrb[0].mxu0 %v4422
        %v4550 = vpop.f32.mrb[0].mxu0
        %v4551 = vadd.f32 0.0, %v4550
        %v4552 = vpop.f32.mrb[0].mxu0
        %v4553 = vpop.f32.mrb[0].mxu0
        %v4554 = vadd.f32 0.0, %v4553
        %v4555 = vpop.f32.mrb[0].mxu0
        %4556 = vmatprep.mubr.bf16.mxu0 0
        %4557 = vmatmul.mubr.bf16.gmra.mrb[0].mxu0 %v4423
        %v4558 = vpop.f32.mrb[0].mxu0
        %v4559 = vadd.f32 0.0, %v4558
        %v4560 = vpop.f32.mrb[0].mxu0
        %v4561 = vpop.f32.mrb[0].mxu0
        %v4562 = vadd.f32 0.0, %v4561
        %v4563 = vpop.f32.mrb[0].mxu0
        %4564 = vmatprep.mubr.bf16.mxu0 0
        %4565 = vmatmul.mubr.bf16.gmra.mrb[0].mxu0 %v4424
        %v4566 = vpop.f32.mrb[0].mxu0
        %v4567 = vadd.f32 0.0, %v4566
        %v4568 = vpop.f32.mrb[0].mxu0
        %v4569 = vpop.f32.mrb[0].mxu0
        %v4570 = vadd.f32 0.0, %v4569
        %v4571 = vpop.f32.mrb[0].mxu0
        %4572 = vmatprep.mubr.bf16.mxu0 0
        %4573 = vmatmul.mubr.bf16.gmra.mrb[0].mxu0 %v4425
        %v4574 = vpop.f32.mrb[0].mxu0
        %v4575 = vadd.f32 0.0, %v4574
        %v4576 = vpop.f32.mrb[0].mxu0
        %v4577 = vpop.f32.mrb[0].mxu0
        %v4578 = vadd.f32 0.0, %v4577
        %v4579 = vpop.f32.mrb[0].mxu0
        %4580 = vmatprep.mubr.bf16.mxu0 0
        %4581 = vmatmul.mubr.bf16.gmra.mrb[0].mxu0 %v4426
        %v4582 = vpop.f32.mrb[0].mxu0
        %v4583 = vadd.f32 0.0, %v4582
        %v4584 = vpop.f32.mrb[0].mxu0
        %v4585 = vpop.f32.mrb[0].mxu0
        %v4586 = vadd.f32 0.0, %v4585
        %v4587 = vpop.f32.mrb[0].mxu0
        %4588 = vmatprep.mubr.bf16.mxu0 0
        %4589 = vmatmul.mubr.bf16.gmra.mrb[0].mxu0 %v4427
        %v4590 = vpop.f32.mrb[0].mxu0
        %v4591 = vadd.f32 0.0, %v4590
        %v4592 = vpop.f32.mrb[0].mxu0
        %v4593 = vpop.f32.mrb[0].mxu0
        %v4594 = vadd.f32 0.0, %v4593
        %v4595 = vpop.f32.mrb[0].mxu0
        %4596 = vmatprep.mubr.bf16.mxu0 0
        %4597 = vmatmul.mubr.bf16.gmra.mrb[0].mxu0 %v4428
        %v4598 = vpop.f32.mrb[0].mxu0
        %v4599 = vadd.f32 0.0, %v4598
        %v4600 = vpop.f32.mrb[0].mxu0
        %v4601 = vpop.f32.mrb[0].mxu0
        %v4602 = vadd.f32 0.0, %v4601
        %v4603 = vpop.f32.mrb[0].mxu0
        %4604 = vmatprep.mubr.bf16.mxu0 0
        %4605 = vmatmul.mubr.bf16.gmra.mrb[0].mxu0 %v4429
        %v4606 = vpop.f32.mrb[0].mxu0
        %v4607 = vadd.f32 0.0, %v4606
        %v4608 = vpop.f32.mrb[0].mxu0
        %v4609 = vpop.f32.mrb[0].mxu0
        %v4610 = vadd.f32 0.0, %v4609
        %v4611 = vpop.f32.mrb[0].mxu0
        %4612 = vmatprep.mubr.bf16.mxu0 0
        %4613 = vmatmul.mubr.bf16.gmra.mrb[0].mxu0 %v4430
        %v4614 = vpop.f32.mrb[0].mxu0
        %v4615 = vadd.f32 0.0, %v4614
        %v4616 = vpop.f32.mrb[0].mxu0
        %v4617 = vpop.f32.mrb[0].mxu0
        %v4618 = vadd.f32 0.0, %v4617
        %v4619 = vpop.f32.mrb[0].mxu0
        %4620 = vmatprep.mubr.bf16.mxu0 0
        %4621 = vmatmul.mubr.bf16.gmra.mrb[0].mxu0 %v4431
        %v4622 = vpop.f32.mrb[0].mxu0
        %v4623 = vadd.f32 0.0, %v4622
        %v4624 = vpop.f32.mrb[0].mxu0
        %v4625 = vpop.f32.mrb[0].mxu0
        %v4626 = vadd.f32 0.0, %v4625
        %v4627 = vpop.f32.mrb[0].mxu0
        %4628 = vmatprep.mubr.bf16.mxu0 0
        %4629 = vmatmul.mubr.bf16.gmra.mrb[0].mxu0 %v4432
        %v4630 = vpop.f32.mrb[0].mxu0
        %v4631 = vadd.f32 0.0, %v4630
        %v4632 = vpop.f32.mrb[0].mxu0
        %v4633 = vpop.f32.mrb[0].mxu0
        %v4634 = vadd.f32 0.0, %v4633
        %v4635 = vpop.f32.mrb[0].mxu0
        %4636 = vmatprep.mubr.bf16.mxu0 0
        %4637 = vmatmul.mubr.bf16.gmra.mrb[0].mxu0 %v4433
        %v4638 = vpop.f32.mrb[0].mxu0
        %v4639 = vadd.f32 0.0, %v4638
        %v4640 = vpop.f32.mrb[0].mxu0
        %v4641 = vpop.f32.mrb[0].mxu0
        %v4642 = vadd.f32 0.0, %v4641
        %v4643 = vpop.f32.mrb[0].mxu0
        %4644 = vmatprep.mubr.bf16.mxu0 0
        %4645 = vmatmul.mubr.bf16.gmra.mrb[0].mxu0 %v4434
        %v4646 = vpop.f32.mrb[0].mxu0
        %v4647 = vadd.f32 0.0, %v4646
        %v4648 = vpop.f32.mrb[0].mxu0
        %v4649 = vpop.f32.mrb[0].mxu0
        %v4650 = vadd.f32 0.0, %v4649
        %v4651 = vpop.f32.mrb[0].mxu0
        %4652 = vmatprep.mubr.bf16.mxu0 0
        %4653 = vmatmul.mubr.bf16.gmra.mrb[0].mxu0 %v4435
        %v4654 = vpop.f32.mrb[0].mxu0
        %v4655 = vadd.f32 0.0, %v4654
        %v4656 = vpop.f32.mrb[0].mxu0
        %v4657 = vpop.f32.mrb[0].mxu0
        %v4658 = vadd.f32 0.0, %v4657
        %v4659 = vpop.f32.mrb[0].mxu0
        %4660 = vdwg.mxu0
        %v4661 = vadd.f32 %v4244, %v4535
        %v4662 = vadd.f32 %v4245, %v4538
        %v4663 = vadd.f32 %v4246, %v4543
        %v4664 = vadd.f32 %v4247, %v4546
        %v4665 = vadd.f32 %v4248, %v4551
        %v4666 = vadd.f32 %v4249, %v4554
        %v4667 = vadd.f32 %v4250, %v4559
        %v4668 = vadd.f32 %v4251, %v4562
        %v4669 = vadd.f32 %v4252, %v4567
        %v4670 = vadd.f32 %v4253, %v4570
        %v4671 = vadd.f32 %v4254, %v4575
        %v4672 = vadd.f32 %v4255, %v4578
        %v4673 = vadd.f32 %v4256, %v4583
        %v4674 = vadd.f32 %v4257, %v4586
        %v4675 = vadd.f32 %v4258, %v4591
        %v4676 = vadd.f32 %v4259, %v4594
        %v4677 = vadd.f32 %v4260, %v4599
        %v4678 = vadd.f32 %v4261, %v4602
        %v4679 = vadd.f32 %v4262, %v4607
        %v4680 = vadd.f32 %v4263, %v4610
        %v4681 = vadd.f32 %v4264, %v4615
        %v4682 = vadd.f32 %v4265, %v4618
        %v4683 = vadd.f32 %v4266, %v4623
        %v4684 = vadd.f32 %v4267, %v4626
        %v4685 = vadd.f32 %v4268, %v4631
        %v4686 = vadd.f32 %v4269, %v4634
        %v4687 = vadd.f32 %v4270, %v4639
        %v4688 = vadd.f32 %v4271, %v4642
        %v4689 = vadd.f32 %v4272, %v4647
        %v4690 = vadd.f32 %v4273, %v4650
        %v4691 = vadd.f32 %v4274, %v4655
        %v4692 = vadd.f32 %v4275, %v4658
        %4693 = vst [vmem:[%s222] sm:$0xff] %v4661
        %4694 = vst [vmem:[%s222 + $0x8] sm:$0xff] %v4662
        %4695 = vst [vmem:[%s222 + $0x10] sm:$0xff] %v4663
        %4696 = vst [vmem:[%s222 + $0x18] sm:$0xff] %v4664
        %4697 = vst [vmem:[%s222 + $0x20] sm:$0xff] %v4665
        %4698 = vst [vmem:[%s222 + $0x28] sm:$0xff] %v4666
        %4699 = vst [vmem:[%s222 + $0x30] sm:$0xff] %v4667
        %4700 = vst [vmem:[%s222 + $0x38] sm:$0xff] %v4668
        %4701 = vst [vmem:[%s222 + $0x40] sm:$0xff] %v4669
        %4702 = vst [vmem:[%s222 + $0x48] sm:$0xff] %v4670
        %4703 = vst [vmem:[%s222 + $0x50] sm:$0xff] %v4671
        %4704 = vst [vmem:[%s222 + $0x58] sm:$0xff] %v4672
        %4705 = vst [vmem:[%s222 + $0x60] sm:$0xff] %v4673
        %4706 = vst [vmem:[%s222 + $0x68] sm:$0xff] %v4674
        %4707 = vst [vmem:[%s222 + $0x70] sm:$0xff] %v4675
        %4708 = vst [vmem:[%s222 + $0x78] sm:$0xff] %v4676
        %4709 = vst [vmem:[%s222 + $0x80] sm:$0xff] %v4677
        %4710 = vst [vmem:[%s222 + $0x88] sm:$0xff] %v4678
        %4711 = vst [vmem:[%s222 + $0x90] sm:$0xff] %v4679
        %4712 = vst [vmem:[%s222 + $0x98] sm:$0xff] %v4680
        %4713 = vst [vmem:[%s222 + $0xa0] sm:$0xff] %v4681
        %4714 = vst [vmem:[%s222 + $0xa8] sm:$0xff] %v4682
        %4715 = vst [vmem:[%s222 + $0xb0] sm:$0xff] %v4683
        %4716 = vst [vmem:[%s222 + $0xb8] sm:$0xff] %v4684
        %4717 = vst [vmem:[%s222 + $0xc0] sm:$0xff] %v4685
        %4718 = vst [vmem:[%s222 + $0xc8] sm:$0xff] %v4686
        %4719 = vst [vmem:[%s222 + $0xd0] sm:$0xff] %v4687
        %4720 = vst [vmem:[%s222 + $0xd8] sm:$0xff] %v4688
        %4721 = vst [vmem:[%s222 + $0xe0] sm:$0xff] %v4689
        %4722 = vst [vmem:[%s222 + $0xe8] sm:$0xff] %v4690
        %4723 = vst [vmem:[%s222 + $0xf0] sm:$0xff] %v4691
        %4724 = vst [vmem:[%s222 + $0xf8] sm:$0xff] %v4692
        // Predicated region
        $region33: #{tpu_custom_call.1} parent=27 // pred_check
          %p4725 = pneg %p248
        $region34: #{tpu_custom_call.1} parent=27 // pred_check_branch
          %4727 = sbr.rel (%p4725) target = $region36
        $region35: #{tpu_custom_call.1} parent=27 // pred_region
          %v4728 = vld [vmem:[%s222] sm:$0xff]
          %v4729 = vld [vmem:[%s222 + $0x8] sm:$0xff]
          %v4730 = vld [vmem:[%s222 + $0x10] sm:$0xff]
          %v4731 = vld [vmem:[%s222 + $0x18] sm:$0xff]
          %v4732 = vld [vmem:[%s222 + $0x20] sm:$0xff]
          %v4733 = vld [vmem:[%s222 + $0x28] sm:$0xff]
          %v4734 = vld [vmem:[%s222 + $0x30] sm:$0xff]
          %v4735 = vld [vmem:[%s222 + $0x38] sm:$0xff]
          %v4736 = vld [vmem:[%s222 + $0x40] sm:$0xff]
          %v4737 = vld [vmem:[%s222 + $0x48] sm:$0xff]
          %v4738 = vld [vmem:[%s222 + $0x50] sm:$0xff]
          %v4739 = vld [vmem:[%s222 + $0x58] sm:$0xff]
          %v4740 = vld [vmem:[%s222 + $0x60] sm:$0xff]
          %v4741 = vld [vmem:[%s222 + $0x68] sm:$0xff]
          %v4742 = vld [vmem:[%s222 + $0x70] sm:$0xff]
          %v4743 = vld [vmem:[%s222 + $0x78] sm:$0xff]
          %v4744 = vld [vmem:[%s222 + $0x80] sm:$0xff]
          %v4745 = vld [vmem:[%s222 + $0x88] sm:$0xff]
          %v4746 = vld [vmem:[%s222 + $0x90] sm:$0xff]
          %v4747 = vld [vmem:[%s222 + $0x98] sm:$0xff]
          %v4748 = vld [vmem:[%s222 + $0xa0] sm:$0xff]
          %v4749 = vld [vmem:[%s222 + $0xa8] sm:$0xff]
          %v4750 = vld [vmem:[%s222 + $0xb0] sm:$0xff]
          %v4751 = vld [vmem:[%s222 + $0xb8] sm:$0xff]
          %v4752 = vld [vmem:[%s222 + $0xc0] sm:$0xff]
          %v4753 = vld [vmem:[%s222 + $0xc8] sm:$0xff]
          %v4754 = vld [vmem:[%s222 + $0xd0] sm:$0xff]
          %v4755 = vld [vmem:[%s222 + $0xd8] sm:$0xff]
          %v4756 = vld [vmem:[%s222 + $0xe0] sm:$0xff]
          %v4757 = vld [vmem:[%s222 + $0xe8] sm:$0xff]
          %v4758 = vld [vmem:[%s222 + $0xf0] sm:$0xff]
          %v4759 = vld [vmem:[%s222 + $0xf8] sm:$0xff]
          %v4760 = vadd.f32 %v4728, %v4729
          %v4761 = vadd.f32 %v4760, %v4730
          %v4762 = vadd.f32 %v4761, %v4731
          %v4763 = vadd.f32 %v4762, %v4732
          %v4764 = vadd.f32 %v4763, %v4733
          %v4765 = vadd.f32 %v4764, %v4734
          %v4766 = vadd.f32 %v4765, %v4735
          %v4767 = vadd.f32 %v4766, %v4736
          %v4768 = vadd.f32 %v4767, %v4737
          %v4769 = vadd.f32 %v4768, %v4738
          %v4770 = vadd.f32 %v4769, %v4739
          %v4771 = vadd.f32 %v4770, %v4740
          %v4772 = vadd.f32 %v4771, %v4741
          %v4773 = vadd.f32 %v4772, %v4742
          %v4774 = vadd.f32 %v4773, %v4743
          %v4775 = vadd.f32 %v4774, %v4744
          %v4776 = vadd.f32 %v4775, %v4745
          %v4777 = vadd.f32 %v4776, %v4746
          %v4778 = vadd.f32 %v4777, %v4747
          %v4779 = vadd.f32 %v4778, %v4748
          %v4780 = vadd.f32 %v4779, %v4749
          %v4781 = vadd.f32 %v4780, %v4750
          %v4782 = vadd.f32 %v4781, %v4751
          %v4783 = vadd.f32 %v4782, %v4752
          %v4784 = vadd.f32 %v4783, %v4753
          %v4785 = vadd.f32 %v4784, %v4754
          %v4786 = vadd.f32 %v4785, %v4755
          %v4787 = vadd.f32 %v4786, %v4756
          %v4788 = vadd.f32 %v4787, %v4757
          %v4789 = vadd.f32 %v4788, %v4758
          %v4790 = vadd.f32 %v4789, %v4759
          %v4791 = vrot.slane %v4790, 4
          %v4792 = vadd.f32 %v4790, %v4791
          %v4793 = vrot.slane %v4792, 2
          %v4794 = vadd.f32 %v4792, %v4793
          %v4795 = vrot.slane %v4794, 1
          %v4796 = vadd.f32 %v4794, %v4795
          %v4797 = vmul.f32 %v4728, %v4728
          %v4798 = vmul.f32 %v4729, %v4729
          %v4799 = vmul.f32 %v4730, %v4730
          %v4800 = vmul.f32 %v4731, %v4731
          %v4801 = vmul.f32 %v4732, %v4732
          %v4802 = vmul.f32 %v4733, %v4733
          %v4803 = vmul.f32 %v4734, %v4734
          %v4804 = vmul.f32 %v4735, %v4735
          %v4805 = vmul.f32 %v4736, %v4736
          %v4806 = vmul.f32 %v4737, %v4737
          %v4807 = vmul.f32 %v4738, %v4738
          %v4808 = vmul.f32 %v4739, %v4739
          %v4809 = vmul.f32 %v4740, %v4740
          %v4810 = vmul.f32 %v4741, %v4741
          %v4811 = vmul.f32 %v4742, %v4742
          %v4812 = vmul.f32 %v4743, %v4743
          %v4813 = vmul.f32 %v4744, %v4744
          %v4814 = vmul.f32 %v4745, %v4745
          %v4815 = vmul.f32 %v4746, %v4746
          %v4816 = vmul.f32 %v4747, %v4747
          %v4817 = vmul.f32 %v4748, %v4748
          %v4818 = vmul.f32 %v4749, %v4749
          %v4819 = vmul.f32 %v4750, %v4750
          %v4820 = vmul.f32 %v4751, %v4751
          %v4821 = vmul.f32 %v4752, %v4752
          %v4822 = vmul.f32 %v4753, %v4753
          %v4823 = vmul.f32 %v4754, %v4754
          %v4824 = vmul.f32 %v4755, %v4755
          %v4825 = vmul.f32 %v4756, %v4756
          %v4826 = vmul.f32 %v4757, %v4757
          %v4827 = vmul.f32 %v4758, %v4758
          %v4828 = vmul.f32 %v4759, %v4759
          %v4829 = vadd.f32 %v4797, %v4798
          %v4830 = vadd.f32 %v4829, %v4799
          %v4831 = vadd.f32 %v4830, %v4800
          %v4832 = vadd.f32 %v4831, %v4801
          %v4833 = vadd.f32 %v4832, %v4802
          %v4834 = vadd.f32 %v4833, %v4803
          %v4835 = vadd.f32 %v4834, %v4804
          %v4836 = vadd.f32 %v4835, %v4805
          %v4837 = vadd.f32 %v4836, %v4806
          %v4838 = vadd.f32 %v4837, %v4807
          %v4839 = vadd.f32 %v4838, %v4808
          %v4840 = vadd.f32 %v4839, %v4809
          %v4841 = vadd.f32 %v4840, %v4810
          %v4842 = vadd.f32 %v4841, %v4811
          %v4843 = vadd.f32 %v4842, %v4812
          %v4844 = vadd.f32 %v4843, %v4813
          %v4845 = vadd.f32 %v4844, %v4814
          %v4846 = vadd.f32 %v4845, %v4815
          %v4847 = vadd.f32 %v4846, %v4816
          %v4848 = vadd.f32 %v4847, %v4817
          %v4849 = vadd.f32 %v4848, %v4818
          %v4850 = vadd.f32 %v4849, %v4819
          %v4851 = vadd.f32 %v4850, %v4820
          %v4852 = vadd.f32 %v4851, %v4821
          %v4853 = vadd.f32 %v4852, %v4822
          %v4854 = vadd.f32 %v4853, %v4823
          %v4855 = vadd.f32 %v4854, %v4824
          %v4856 = vadd.f32 %v4855, %v4825
          %v4857 = vadd.f32 %v4856, %v4826
          %v4858 = vadd.f32 %v4857, %v4827
          %v4859 = vadd.f32 %v4858, %v4828
          %v4860 = vrot.slane %v4859, 4
          %v4861 = vadd.f32 %v4859, %v4860
          %v4862 = vrot.slane %v4861, 2
          %v4863 = vadd.f32 %v4861, %v4862
          %v4864 = vrot.slane %v4863, 1
          %v4865 = vadd.f32 %v4863, %v4864
          %vm4866 = vcmask 1040384
          %v4867 = vsel %vm4866, %v4796, %v4865
          %vm4868 = vcmask 1041408
          %v4869 = vsel %vm4868, %v4867, 0.0
          %4870 = vst [vmem:[%s229] sm:$0xff] %v4869
        $region36: #{tpu_custom_call.1} parent=27 // pred_fallthru
          _
        %s4871 = sand.u32 %s106, 1
        %s4872 = scalar_lea.sflag [#allocation3], %s4871
        %s4873 = sand.u32 %s106, 1
        %s4874 = smul.addr %s4873, 256
        %s4875 = scalar_lea.vmem [#allocation2], %s4874
        %s4876 = sand.u32 %s134, 1
        %s4877 = scalar_lea.sflag [#allocation5], %s4876
        %s4878 = sand.u32 %s134, 1
        %s4879 = smul.addr %s4878, 8
        %s4880 = scalar_lea.vmem [#allocation4], %s4879
        // Predicated region
        $region37: #{tpu_custom_call.1} parent=27 // pred_check
          %p4881 = pneg %p116
        $region38: #{tpu_custom_call.1} parent=27 // pred_check_branch
          %4883 = sbr.rel (%p4881) target = $region40
        $region39: #{tpu_custom_call.1} parent=27 // pred_region
          %s4885 = ssub.s32 4096, 4096
          %4886 = vsyncadd %s4872, %s4885
          %s4887 = smul.addr %s26, 32
          %s4888 = sadd.s32 %s27, %s4887
          %s4889 = smul.addr %s4888, 128
          %s4890 = scalar_lea.hbm %s2, %s4889
          %s4891 = sshll.u32 %s4875, 4
          %s4892 = int_to_ptr.vmem [resolvable:$true] %s4891
          %4897 = dma.vmem_to_hbm [thread:$0]  %s4892, 4096, %s4890, %s4872, 128, 128, 8
        $region40: #{tpu_custom_call.1} parent=27 // pred_fallthru
          _
        // Predicated region
        $region41: #{tpu_custom_call.1} parent=27 // pred_check
          %p4898 = pneg %p144
        $region42: #{tpu_custom_call.1} parent=27 // pred_check_branch
          %4900 = sbr.rel (%p4898) target = $region44
        $region43: #{tpu_custom_call.1} parent=27 // pred_region
          %s4902 = ssub.s32 128, 128
          %4903 = vsyncadd %s4877, %s4902
          %s4904 = sadd.s32 %s27, %s26
          %s4905 = smul.addr %s4904, 128
          %s4906 = scalar_lea.hbm %s3, %s4905
          %s4908 = sshll.u32 %s4880, 4
          %s4909 = int_to_ptr.vmem [resolvable:$true] %s4908
          %4911 = dma.vmem_to_hbm [thread:$0]  %s4909, 128, %s4906, %s4877
        $region44: #{tpu_custom_call.1} parent=27 // pred_fallthru
          _
      $region28: #{tpu_custom_call.1} parent=5 // pred_fallthru
        _
      %p4912 = scmp.le.s32.totalorder 2, %s16
      // Predicated region
      $region45: #{tpu_custom_call.1} parent=5 // pred_check
        %p4913 = pneg %p4912
      $region46: #{tpu_custom_call.1} parent=5 // pred_check_branch
        %4915 = sbr.rel (%p4913) target = $region48
      $region47: #{tpu_custom_call.1} parent=5 // pred_region
        %s4916 = ssub.s32 %s16, 2
        // Predicated region
        $region49: #{tpu_custom_call.1} parent=47 // pred_check
          %p4917 = pneg %p122
        $region50: #{tpu_custom_call.1} parent=47 // pred_check_branch
          %4919 = sbr.rel (%p4917) target = $region52
        $region51: #{tpu_custom_call.1} parent=47 // pred_region
          %s4920 = sand.u32 %s107, 1
          %s4921 = scalar_lea.sflag [#allocation3], %s4920
          %s4922 = sand.u32 %s107, 1
          %s4923 = smul.addr %s4922, 256
          %s4924 = scalar_lea.vmem [#allocation2], %s4923
          %4925 = dma.done %s4921, 4096
        $region52: #{tpu_custom_call.1} parent=47 // pred_fallthru
          _
        // Predicated region
        $region53: #{tpu_custom_call.1} parent=47 // pred_check
          %p4926 = pneg %p150
        $region54: #{tpu_custom_call.1} parent=47 // pred_check_branch
          %4928 = sbr.rel (%p4926) target = $region56
        $region55: #{tpu_custom_call.1} parent=47 // pred_region
          %s4929 = sand.u32 %s135, 1
          %s4930 = scalar_lea.sflag [#allocation5], %s4929
          %s4931 = sand.u32 %s135, 1
          %s4932 = smul.addr %s4931, 8
          %s4933 = scalar_lea.vmem [#allocation4], %s4932
          %4934 = dma.done %s4930, 128
        $region56: #{tpu_custom_call.1} parent=47 // pred_fallthru
          _
      $region48: #{tpu_custom_call.1} parent=5 // pred_fallthru
        _
    $region6: #{tpu_custom_call.1} parent=1 // loop_footer
      %s20 = sadd.s32 1, %s16
    $region7: #{tpu_custom_call.1} parent=1 // loop_footer_branch
      %15 = sbr.rel target = $region3
    $region8: #{tpu_custom_call.1} parent=1 // loop_exit
      _
    %4935 = vsyncpa [#allocation3], 1
    %s4936 = scalar_lea.sflag [#allocation3], 1
    %4937 = vsyncpa %s4936, 1
    %4938 = vsyncpa [#allocation5], 1
    %s4939 = scalar_lea.sflag [#allocation5], 1
    %4940 = vsyncpa %s4939, 1

</llo_original>
